<compile_context>
chip_gen: v7x
topology: tpu7x:2x2x1
jax: 0.10.0
libtpu: 0.0.40
codegen_flags: <defaults>
</compile_context>

<pallas_src>
import math
import functools

import jax
import jax.numpy as jnp
import numpy as np
from jax import lax
from jax.experimental import pallas as pl
from jax.experimental.pallas import tpu as pltpu

PAD = 0  # onmt.constants.PAD


def _layer_norm(x, gamma, beta, eps=1e-5):
    mu = jnp.mean(x, axis=-1, keepdims=True)
    var = jnp.mean((x - mu) ** 2, axis=-1, keepdims=True)
    return (x - mu) * lax.rsqrt(var + eps) * gamma + beta


def encoder_kernel(emb_ref, bias_ref, pe_ref, te_ref,
                   wqkv_ref, wo_ref,
                   ln_attn_ref, ln_ffn_ref,
                   w1_ref, b1_ref, w2_ref, b2_ref,
                   ln_out_ref,
                   out_ref,
                   *, n_layers, n_heads, f_chunk, kv_chunk):
    S, D = emb_ref.shape[1], emb_ref.shape[2]
    H = n_heads
    Dh = D // H
    F = w1_ref.shape[1]
    n_f = F // f_chunk
    n_kv = S // kv_chunk
    bf16 = jnp.bfloat16

    # emb * sqrt(d_model) fused here (time == 'positional_encoding').
    x0 = emb_ref[0].astype(jnp.float32) * math.sqrt(D)           # (S, D) f32

    # Hoisted once per batch element (outside the shared-layer loop).
    pe = pe_ref[...]                                             # (S, D) f32
    bias = bias_ref[...].astype(jnp.float32)                     # (1, 1, S) key-pad bias
    g_attn, b_attn = ln_attn_ref[0, :], ln_attn_ref[1, :]
    g_ffn, b_ffn = ln_ffn_ref[0, :], ln_ffn_ref[1, :]
    b2 = b2_ref[0, :]

    def layer_step(t, x):
        # coordinate (positional) + time-step encoding, added every layer.
        x = x + pe + te_ref[t]                                   # te_ref[t]: (1, D)

        # ---- multi-head self-attention (pre-LN, residual) ----
        y = _layer_norm(x, g_attn, b_attn).astype(bf16)          # (S, D)
        # Single full-width QKV matmul (attention scale folded into the Q
        # columns of wqkv host-side).
        qkv = jnp.dot(y, wqkv_ref[...],
                      preferred_element_type=jnp.float32)        # (S, 3D) f32
        # Head-major views via static lane slices + leading-axis stack.
        qh = jnp.stack([qkv[:, h * Dh:(h + 1) * Dh]
                        for h in range(H)], axis=0).astype(bf16)             # (H, S, Dh)
        kh = jnp.stack([qkv[:, D + h * Dh:D + (h + 1) * Dh]
                        for h in range(H)], axis=0).astype(bf16)             # (H, S, Dh)
        vh = jnp.stack([qkv[:, 2 * D + h * Dh:2 * D + (h + 1) * Dh]
                        for h in range(H)], axis=0).astype(bf16)             # (H, S, Dh)

        # Key-blocked online softmax: live score tile is (H, S, kv_chunk).
        # (Static unroll: n_kv <= S/512 is small; all slice offsets stay static.)
        m_i = jnp.full((H, S, 1), -1e30, jnp.float32)
        l_i = jnp.zeros((H, S, 1), jnp.float32)
        acc = jnp.zeros((H, S, Dh), jnp.float32)
        for j in range(n_kv):
            lo = j * kv_chunk
            k_t = kh[:, lo:lo + kv_chunk, :]                     # (H, KT, Dh)
            v_t = vh[:, lo:lo + kv_chunk, :]
            b_t = bias[:, :, lo:lo + kv_chunk]                   # (1, 1, KT)
            s = jnp.einsum('hqd,hkd->hqk', qh, k_t,
                           preferred_element_type=jnp.float32) + b_t
            m_new = jnp.maximum(m_i, jnp.max(s, axis=-1, keepdims=True))
            alpha = jnp.exp(m_i - m_new)
            p = jnp.exp(s - m_new)
            l_i = alpha * l_i + jnp.sum(p, axis=-1, keepdims=True)
            acc = alpha * acc + jnp.einsum('hqk,hkd->hqd', p.astype(bf16), v_t,
                                           preferred_element_type=jnp.float32)
            m_i = m_new
        o = acc * pl.reciprocal(l_i, approx=True)                # (H, S, Dh) f32
        # Merge heads along lanes -> single full-K output projection.
        o = jnp.concatenate([o[h] for h in range(H)], axis=-1).astype(bf16)  # (S, D)
        x = x + jnp.dot(o, wo_ref[...], preferred_element_type=jnp.float32)

        # ---- position-wise feed-forward (pre-LN, residual), F-chunked ----
        yf = _layer_norm(x, g_ffn, b_ffn).astype(bf16)
        ff = jnp.zeros((S, D), jnp.float32)
        # TODO(synk): for very large F (n_f >> 8), switch to lax.fori_loop with
        # pl.ds/pl.multiple_of slices; kept static here so all weight slices are
        # static (no dynamic lane-offset ref loads) and n_f stays small.
        for c in range(n_f):
            lo = c * f_chunk
            hid = jnp.dot(yf, w1_ref[:, lo:lo + f_chunk],
                          preferred_element_type=jnp.float32) + b1_ref[0, lo:lo + f_chunk]
            hid = jnp.maximum(hid, 0.0).astype(bf16)
            ff = ff + jnp.dot(hid, w2_ref[lo:lo + f_chunk, :],
                              preferred_element_type=jnp.float32)
        # ONMT FeedForward skips PAD positions; FFN is position-wise so non-pad
        # positions are identical.
        return x + ff + b2

    x = lax.fori_loop(0, n_layers, layer_step, x0)
    out_ref[0] = _layer_norm(x, ln_out_ref[0, :], ln_out_ref[1, :]).astype(out_ref.dtype)


def sinusoidal_encoding(positions, d_model):
    """Standard 'Attention is all you need' sinusoidal encoding."""
    positions = np.asarray(positions, dtype=np.float64)[:, None]     # (P, 1)
    div = np.exp(np.arange(0, d_model, 2, dtype=np.float64)
                 * -(math.log(10000.0) / d_model))                   # (D/2,)
    enc = np.zeros((positions.shape[0], d_model), dtype=np.float32)
    enc[:, 0::2] = np.sin(positions * div)
    enc[:, 1::2] = np.cos(positions * div)
    return jnp.asarray(enc)


def _vmem_limit_bytes():
    cap = 128 * 1024 * 1024
    try:
        cap = int(pltpu.get_tpu_info().vmem_capacity_bytes)
    except Exception:
        pass
    # ~7/8 of physical VMEM: ~112 MiB on v5e/v6e (128 MiB), ~56 MiB on v7x (64 MiB).
    return int(min((cap * 7) // 8, 112 * 1024 * 1024))


def universal_transformer_encoder(tokens, params, *, n_layers, n_heads):
    """tokens: (B, S) int32.  Returns (context (B,S,D) f32, mask_src (B,1,S) bool)."""
    B, S = tokens.shape
    D = params["word_lut"].shape[1]
    F = params["w1"].shape[1]
    H = n_heads
    Dh = D // H
    bf16 = jnp.bfloat16

    # ------- glue (embedding gather, masks, encodings) in plain JAX -------
    # TODO(synk): scalar-prefetch token ids and DMA-gather word_lut rows inside
    # the kernel to save the (B,S,D) HBM round trip entirely.
    emb = jnp.take(params["word_lut"], tokens, axis=0).astype(bf16)   # (B, S, D) bf16 boundary
    mask_src = (tokens == PAD)[:, None, :]                            # (B, 1, S) bool
    mask_bias = mask_src.astype(jnp.float32) * -1e9                   # additive key-pad bias

    pe = sinusoidal_encoding(np.arange(S), D)                         # (S, D)
    te = sinusoidal_encoding(np.arange(n_layers), D)[:, None, :]      # (L, 1, D)

    # Fused QKV weight (attention scale folded into the Q columns); bf16 weights
    # (half DMA/VMEM, 2x MXU rate on v6e/v7x) with f32 accumulation in-kernel.
    scale = 1.0 / math.sqrt(Dh)
    wqkv = jnp.concatenate([params["wq"] * scale, params["wk"], params["wv"]],
                           axis=1).astype(bf16)                       # (D, 3D)
    wo = params["wo"].astype(bf16)                                    # (D, D)
    w1 = params["w1"].astype(bf16)
    w2 = params["w2"].astype(bf16)

    # Key tile for the online softmax and FFN inner-dim chunk.
    kv_chunk = S if S <= 512 else (512 if S % 512 == 0 else S)
    f_chunk = 1024 if F % 1024 == 0 else F

    kernel = functools.partial(encoder_kernel, n_layers=n_layers, n_heads=n_heads,
                               f_chunk=f_chunk, kv_chunk=kv_chunk)

    operands = (emb, mask_bias, pe, te, wqkv, wo,
                params["ln_attn"], params["ln_ffn"],
                w1, params["b1"], w2, params["b2"], params["ln_out"])

    # Advisory cost estimate for XLA scheduling around the custom call.
    flops = 2 * B * n_layers * (S * D * 3 * D          # fused QKV
                                + 2 * H * S * S * Dh   # scores + PV
                                + S * D * D            # output proj
                                + 2 * S * D * F)       # FFN
    transcendentals = B * n_layers * (H * S * S + 4 * S)
    bytes_accessed = sum(int(np.prod(a.shape)) * a.dtype.itemsize for a in operands) \
        + B * S * D * 4
    cost = pl.CostEstimate(flops=int(flops), transcendentals=int(transcendentals),
                           bytes_accessed=int(bytes_accessed))

    def build_call(single_buffer_weights):
        if single_buffer_weights:
            # Grid-invariant operands: single-buffer (they never change across
            # the (B,) grid, so the second pipeline buffer is pure VMEM waste).
            def const_spec(shape):
                return pl.BlockSpec(shape, lambda b: (0,) * len(shape),
                                    pipeline_mode=pl.Buffered(1))
        else:
            def const_spec(shape):
                return pl.BlockSpec(shape, lambda b: (0,) * len(shape))

        return pl.pallas_call(
            kernel,
            out_shape=jax.ShapeDtypeStruct((B, S, D), jnp.float32),
            grid_spec=pltpu.PrefetchScalarGridSpec(
                num_scalar_prefetch=0,
                grid=(B,),
                in_specs=[
                    pl.BlockSpec((1, S, D), lambda b: (b, 0, 0)),   # emb (bf16)
                    pl.BlockSpec((1, 1, S), lambda b: (b, 0, 0)),   # key-pad bias
                    const_spec((S, D)),                             # pe
                    const_spec((n_layers, 1, D)),                   # te
                    const_spec((D, 3 * D)),                         # wqkv (bf16)
                    const_spec((D, D)),                             # wo (bf16)
                    const_spec((2, D)), const_spec((2, D)),         # ln_attn, ln_ffn
                    const_spec((D, F)), const_spec((1, F)),         # w1 (bf16), b1
                    const_spec((F, D)), const_spec((1, D)),         # w2 (bf16), b2
                    const_spec((2, D)),                             # ln_out
                ],
                out_specs=pl.BlockSpec((1, S, D), lambda b: (b, 0, 0)),
            ),
            # "parallel" batch axis -> megacore on v7x (keep B even there).
            compiler_params=pltpu.CompilerParams(
                dimension_semantics=("parallel",),
                vmem_limit_bytes=_vmem_limit_bytes()),
            cost_estimate=cost,
        )

    try:
        context = build_call(True)(*operands)
    except Exception:
        # TODO(synk): this JAX/Mosaic build rejects pipeline_mode=pl.Buffered(1)
        # on top-level BlockSpecs; fall back to default double-buffering.
        context = build_call(False)(*operands)

    return context, mask_src


def init_params(key, vocab, d_model, inner):
    ks = jax.random.split(key, 8)
    def w(k, shape, scale=0.02):
        return (jax.random.normal(k, shape, dtype=jnp.float32) * scale)
    word_lut = w(ks[0], (vocab, d_model), 1.0)
    word_lut = word_lut.at[PAD].set(0.0)                      # padding_idx=PAD
    ln = jnp.stack([jnp.ones((d_model,), jnp.float32),
                    jnp.zeros((d_model,), jnp.float32)])      # (gamma, beta)
    return {
        "word_lut": word_lut,
        "wq": w(ks[1], (d_model, d_model)),
        "wk": w(ks[2], (d_model, d_model)),
        "wv": w(ks[3], (d_model, d_model)),
        "wo": w(ks[4], (d_model, d_model)),
        "ln_attn": ln,
        "ln_ffn": ln,
        "ln_out": ln,
        "w1": w(ks[5], (d_model, inner)),
        "b1": jnp.zeros((1, inner), jnp.float32),
        "w2": w(ks[6], (inner, d_model)),
        "b2": jnp.zeros((1, d_model), jnp.float32),
    }


if __name__ == "__main__":
    B, S = 2, 8
    D_MODEL, N_HEADS, INNER, LAYERS = 32, 4, 64, 3
    VOCAB = 20

    key = jax.random.PRNGKey(0)
    kp, kt = jax.random.split(key)
    params = init_params(kp, VOCAB, D_MODEL, INNER)

    tokens = jax.random.randint(kt, (B, S), 1, VOCAB, dtype=jnp.int32)
    tokens = tokens.at[1, -3:].set(PAD)                       # some padding in batch 1

    context, mask_src = universal_transformer_encoder(
        tokens, params, n_layers=LAYERS, n_heads=N_HEADS)
    context = jax.block_until_ready(context)
    mask_src = jax.block_until_ready(mask_src)

    assert context.shape == (B, S, D_MODEL) and mask_src.shape == (B, 1, S)
    assert bool(jnp.all(jnp.isfinite(context)))
    print("KERNEL_OK")
</pallas_src>

<mosaic_0001>
module attributes {stable_mosaic.version = 11 : i64} {
  func.func @encoder_kernel(%arg0: i32, %arg1: memref<1x8x32xbf16, #tpu.memory_space<vmem>>, %arg2: memref<1x1x8xf32, #tpu.memory_space<vmem>>, %arg3: memref<8x32xf32, #tpu.memory_space<vmem>>, %arg4: memref<3x1x32xf32, #tpu.memory_space<vmem>>, %arg5: memref<32x96xbf16, #tpu.memory_space<vmem>>, %arg6: memref<32x32xbf16, #tpu.memory_space<vmem>>, %arg7: memref<2x32xf32, #tpu.memory_space<vmem>>, %arg8: memref<2x32xf32, #tpu.memory_space<vmem>>, %arg9: memref<32x64xbf16, #tpu.memory_space<vmem>>, %arg10: memref<1x64xf32, #tpu.memory_space<vmem>>, %arg11: memref<64x32xbf16, #tpu.memory_space<vmem>>, %arg12: memref<1x32xf32, #tpu.memory_space<vmem>>, %arg13: memref<2x32xf32, #tpu.memory_space<vmem>>, %arg14: memref<1x8x32xf32, #tpu.memory_space<vmem>>) attributes {dimension_semantics = [#tpu.dimension_semantics<parallel>], iteration_bounds = array<i64: 2>, scalar_prefetch = 0 : i64, scratch_operands = 0 : i64, tpu.core_type = #tpu.core_type<tc>, window_params = [{transform_indices = @transform_0, window_bounds = array<i64: 1, 8, 32>}, {transform_indices = @transform_1, window_bounds = array<i64: 1, 1, 8>}, {pipeline_mode = #tpu.pipeline_mode<synchronous>, transform_indices = @transform_2, window_bounds = array<i64: 8, 32>}, {pipeline_mode = #tpu.pipeline_mode<synchronous>, transform_indices = @transform_3, window_bounds = array<i64: 3, 1, 32>}, {pipeline_mode = #tpu.pipeline_mode<synchronous>, transform_indices = @transform_4, window_bounds = array<i64: 32, 96>}, {pipeline_mode = #tpu.pipeline_mode<synchronous>, transform_indices = @transform_5, window_bounds = array<i64: 32, 32>}, {pipeline_mode = #tpu.pipeline_mode<synchronous>, transform_indices = @transform_6, window_bounds = array<i64: 2, 32>}, {pipeline_mode = #tpu.pipeline_mode<synchronous>, transform_indices = @transform_7, window_bounds = array<i64: 2, 32>}, {pipeline_mode = #tpu.pipeline_mode<synchronous>, transform_indices = @transform_8, window_bounds = array<i64: 32, 64>}, {pipeline_mode = #tpu.pipeline_mode<synchronous>, transform_indices = @transform_9, window_bounds = array<i64: 1, 64>}, {pipeline_mode = #tpu.pipeline_mode<synchronous>, transform_indices = @transform_10, window_bounds = array<i64: 64, 32>}, {pipeline_mode = #tpu.pipeline_mode<synchronous>, transform_indices = @transform_11, window_bounds = array<i64: 1, 32>}, {pipeline_mode = #tpu.pipeline_mode<synchronous>, transform_indices = @transform_12, window_bounds = array<i64: 2, 32>}, {transform_indices = @transform_13, window_bounds = array<i64: 1, 8, 32>}]} {
    %c0 = arith.constant 0 : index
    %c0_0 = arith.constant 0 : index
    %c0_1 = arith.constant 0 : index
    %0 = vector.load %arg1[%c0, %c0_0, %c0_1] : memref<1x8x32xbf16, #tpu.memory_space<vmem>>, vector<1x8x32xbf16>
    %1 = vector.shape_cast %0 : vector<1x8x32xbf16> to vector<8x32xbf16>
    %2 = arith.extf %1 : vector<8x32xbf16> to vector<8x32xf32>
    %cst = arith.constant 5.65685415 : f32
    %3 = vector.broadcast %cst : f32 to vector<8x32xf32>
    %4 = arith.mulf %2, %3 : vector<8x32xf32>
    %c0_2 = arith.constant 0 : index
    %c0_3 = arith.constant 0 : index
    %5 = vector.load %arg3[%c0_2, %c0_3] : memref<8x32xf32, #tpu.memory_space<vmem>>, vector<8x32xf32>
    %c0_4 = arith.constant 0 : index
    %c0_5 = arith.constant 0 : index
    %c0_6 = arith.constant 0 : index
    %6 = vector.load %arg2[%c0_4, %c0_5, %c0_6] : memref<1x1x8xf32, #tpu.memory_space<vmem>>, vector<1x1x8xf32>
    %c0_7 = arith.constant 0 : index
    %c0_8 = arith.constant 0 : index
    %7 = vector.load %arg7[%c0_7, %c0_8] : memref<2x32xf32, #tpu.memory_space<vmem>>, vector<1x32xf32>
    %8 = vector.shape_cast %7 : vector<1x32xf32> to vector<32xf32>
    %c1 = arith.constant 1 : index
    %c0_9 = arith.constant 0 : index
    %9 = vector.load %arg7[%c1, %c0_9] : memref<2x32xf32, #tpu.memory_space<vmem>>, vector<1x32xf32>
    %10 = vector.shape_cast %9 : vector<1x32xf32> to vector<32xf32>
    %c0_10 = arith.constant 0 : index
    %c0_11 = arith.constant 0 : index
    %11 = vector.load %arg8[%c0_10, %c0_11] : memref<2x32xf32, #tpu.memory_space<vmem>>, vector<1x32xf32>
    %12 = vector.shape_cast %11 : vector<1x32xf32> to vector<32xf32>
    %c1_12 = arith.constant 1 : index
    %c0_13 = arith.constant 0 : index
    %13 = vector.load %arg8[%c1_12, %c0_13] : memref<2x32xf32, #tpu.memory_space<vmem>>, vector<1x32xf32>
    %14 = vector.shape_cast %13 : vector<1x32xf32> to vector<32xf32>
    %c0_14 = arith.constant 0 : index
    %c0_15 = arith.constant 0 : index
    %15 = vector.load %arg12[%c0_14, %c0_15] : memref<1x32xf32, #tpu.memory_space<vmem>>, vector<1x32xf32>
    %16 = vector.shape_cast %15 : vector<1x32xf32> to vector<32xf32>
    %c0_i32 = arith.constant 0 : i32
    %c3_i32 = arith.constant 3 : i32
    %17 = arith.addi %c0_i32, %c3_i32 : i32
    %c1_i32 = arith.constant 1 : i32
    %18 = scf.for %arg15 = %c0_i32 to %17 step %c1_i32 iter_args(%arg16 = %4) -> (vector<8x32xf32>)  : i32 {
      %50 = arith.addf %arg16, %5 : vector<8x32xf32>
      %51 = arith.index_cast %arg15 : i32 to index
      %c0_29 = arith.constant 0 : index
      %c0_30 = arith.constant 0 : index
      %52 = vector.load %arg4[%51, %c0_29, %c0_30] : memref<3x1x32xf32, #tpu.memory_space<vmem>>, vector<1x1x32xf32>
      %53 = vector.shape_cast %52 : vector<1x1x32xf32> to vector<1x32xf32>
      %54 = vector.broadcast %53 : vector<1x32xf32> to vector<8x32xf32>
      %55 = arith.addf %50, %54 : vector<8x32xf32>
      %cst_31 = arith.constant dense<0.000000e+00> : vector<8xf32>
      %56 = vector.multi_reduction <add>, %55, %cst_31 [1] : vector<8x32xf32> to vector<8xf32>
      %57 = vector.shape_cast %56 : vector<8xf32> to vector<8x1xf32>
      %cst_32 = arith.constant 3.200000e+01 : f32
      %58 = vector.broadcast %cst_32 : f32 to vector<8x1xf32>
      %59 = arith.divf %57, %58 : vector<8x1xf32>
      %60 = vector.broadcast %59 : vector<8x1xf32> to vector<8x32xf32>
      %61 = arith.subf %55, %60 : vector<8x32xf32>
      %62 = arith.mulf %61, %61 : vector<8x32xf32>
      %cst_33 = arith.constant dense<0.000000e+00> : vector<8xf32>
      %63 = vector.multi_reduction <add>, %62, %cst_33 [1] : vector<8x32xf32> to vector<8xf32>
      %64 = vector.shape_cast %63 : vector<8xf32> to vector<8x1xf32>
      %cst_34 = arith.constant 3.200000e+01 : f32
      %65 = vector.broadcast %cst_34 : f32 to vector<8x1xf32>
      %66 = arith.divf %64, %65 : vector<8x1xf32>
      %67 = vector.broadcast %59 : vector<8x1xf32> to vector<8x32xf32>
      %68 = arith.subf %55, %67 : vector<8x32xf32>
      %cst_35 = arith.constant 9.99999974E-6 : f32
      %69 = vector.broadcast %cst_35 : f32 to vector<8x1xf32>
      %70 = arith.addf %66, %69 : vector<8x1xf32>
      %71 = math.rsqrt %70 : vector<8x1xf32>
      %72 = vector.broadcast %71 : vector<8x1xf32> to vector<8x32xf32>
      %73 = arith.mulf %68, %72 : vector<8x32xf32>
      %74 = vector.shape_cast %8 : vector<32xf32> to vector<1x32xf32>
      %75 = vector.broadcast %74 : vector<1x32xf32> to vector<8x32xf32>
      %76 = arith.mulf %73, %75 : vector<8x32xf32>
      %77 = vector.shape_cast %10 : vector<32xf32> to vector<1x32xf32>
      %78 = vector.broadcast %77 : vector<1x32xf32> to vector<8x32xf32>
      %79 = arith.addf %76, %78 : vector<8x32xf32>
      %80 = arith.truncf %79 : vector<8x32xf32> to vector<8x32xbf16>
      %c0_36 = arith.constant 0 : index
      %c0_37 = arith.constant 0 : index
      %81 = vector.load %arg5[%c0_36, %c0_37] : memref<32x96xbf16, #tpu.memory_space<vmem>>, vector<32x96xbf16>
      %cst_38 = arith.constant dense<0.000000e+00> : vector<8x96xf32>
      %82 = tpu.matmul %80, %81, %cst_38 {dimension_numbers = #tpu.dot_dimension_numbers<[1], [0], [0], [1], [0, 0, 1, 1], [], []>} : vector<8x32xbf16>, vector<32x96xbf16>, vector<8x96xf32> -> vector<8x96xf32>
      %83 = vector.extract_strided_slice %82 {offsets = [0, 0], sizes = [8, 8], strides = [1, 1]} : vector<8x96xf32> to vector<8x8xf32>
      %84 = vector.extract_strided_slice %82 {offsets = [0, 8], sizes = [8, 8], strides = [1, 1]} : vector<8x96xf32> to vector<8x8xf32>
      %85 = vector.extract_strided_slice %82 {offsets = [0, 16], sizes = [8, 8], strides = [1, 1]} : vector<8x96xf32> to vector<8x8xf32>
      %86 = vector.extract_strided_slice %82 {offsets = [0, 24], sizes = [8, 8], strides = [1, 1]} : vector<8x96xf32> to vector<8x8xf32>
      %87 = vector.shape_cast %83 : vector<8x8xf32> to vector<1x8x8xf32>
      %88 = vector.shape_cast %84 : vector<8x8xf32> to vector<1x8x8xf32>
      %89 = vector.shape_cast %85 : vector<8x8xf32> to vector<1x8x8xf32>
      %90 = vector.shape_cast %86 : vector<8x8xf32> to vector<1x8x8xf32>
      %91 = tpu.concatenate %87, %88, %89, %90 in 0 : vector<1x8x8xf32>, vector<1x8x8xf32>, vector<1x8x8xf32>, vector<1x8x8xf32> -> vector<4x8x8xf32>
      %92 = arith.truncf %91 : vector<4x8x8xf32> to vector<4x8x8xbf16>
      %93 = vector.extract_strided_slice %82 {offsets = [0, 32], sizes = [8, 8], strides = [1, 1]} : vector<8x96xf32> to vector<8x8xf32>
      %94 = vector.extract_strided_slice %82 {offsets = [0, 40], sizes = [8, 8], strides = [1, 1]} : vector<8x96xf32> to vector<8x8xf32>
      %95 = vector.extract_strided_slice %82 {offsets = [0, 48], sizes = [8, 8], strides = [1, 1]} : vector<8x96xf32> to vector<8x8xf32>
      %96 = vector.extract_strided_slice %82 {offsets = [0, 56], sizes = [8, 8], strides = [1, 1]} : vector<8x96xf32> to vector<8x8xf32>
      %97 = vector.shape_cast %93 : vector<8x8xf32> to vector<1x8x8xf32>
      %98 = vector.shape_cast %94 : vector<8x8xf32> to vector<1x8x8xf32>
      %99 = vector.shape_cast %95 : vector<8x8xf32> to vector<1x8x8xf32>
      %100 = vector.shape_cast %96 : vector<8x8xf32> to vector<1x8x8xf32>
      %101 = tpu.concatenate %97, %98, %99, %100 in 0 : vector<1x8x8xf32>, vector<1x8x8xf32>, vector<1x8x8xf32>, vector<1x8x8xf32> -> vector<4x8x8xf32>
      %102 = arith.truncf %101 : vector<4x8x8xf32> to vector<4x8x8xbf16>
      %103 = vector.extract_strided_slice %82 {offsets = [0, 64], sizes = [8, 8], strides = [1, 1]} : vector<8x96xf32> to vector<8x8xf32>
      %104 = vector.extract_strided_slice %82 {offsets = [0, 72], sizes = [8, 8], strides = [1, 1]} : vector<8x96xf32> to vector<8x8xf32>
      %105 = vector.extract_strided_slice %82 {offsets = [0, 80], sizes = [8, 8], strides = [1, 1]} : vector<8x96xf32> to vector<8x8xf32>
      %106 = vector.extract_strided_slice %82 {offsets = [0, 88], sizes = [8, 8], strides = [1, 1]} : vector<8x96xf32> to vector<8x8xf32>
      %107 = vector.shape_cast %103 : vector<8x8xf32> to vector<1x8x8xf32>
      %108 = vector.shape_cast %104 : vector<8x8xf32> to vector<1x8x8xf32>
      %109 = vector.shape_cast %105 : vector<8x8xf32> to vector<1x8x8xf32>
      %110 = vector.shape_cast %106 : vector<8x8xf32> to vector<1x8x8xf32>
      %111 = tpu.concatenate %107, %108, %109, %110 in 0 : vector<1x8x8xf32>, vector<1x8x8xf32>, vector<1x8x8xf32>, vector<1x8x8xf32> -> vector<4x8x8xf32>
      %112 = arith.truncf %111 : vector<4x8x8xf32> to vector<4x8x8xbf16>
      %cst_39 = arith.constant -1.000000e+30 : f32
      %113 = vector.broadcast %cst_39 : f32 to vector<4x8x1xf32>
      %cst_40 = arith.constant 0.000000e+00 : f32
      %114 = vector.broadcast %cst_40 : f32 to vector<4x8x1xf32>
      %cst_41 = arith.constant 0.000000e+00 : f32
      %115 = vector.broadcast %cst_41 : f32 to vector<4x8x8xf32>
      "tpu.trace_start"() <{level = 10 : i32, message = "hqd,hkd->hqk"}> : () -> ()
      %cst_42 = arith.constant dense<0.000000e+00> : vector<4x8x8xf32>
      %116 = tpu.matmul %92, %102, %cst_42 {dimension_numbers = #tpu.dot_dimension_numbers<[2], [2], [1], [1], [0, 0, 0, 1, 1, 1], [0], [0]>} : vector<4x8x8xbf16>, vector<4x8x8xbf16>, vector<4x8x8xf32> -> vector<4x8x8xf32>
      "tpu.trace_stop"() : () -> ()
      %117 = vector.broadcast %6 : vector<1x1x8xf32> to vector<4x8x8xf32>
      %118 = arith.addf %116, %117 : vector<4x8x8xf32>
      %cst_43 = arith.constant dense<0xFF800000> : vector<4x8xf32>
      %119 = vector.multi_reduction <maximumf>, %118, %cst_43 [2] : vector<4x8x8xf32> to vector<4x8xf32>
      %120 = vector.shape_cast %119 : vector<4x8xf32> to vector<4x8x1xf32>
      %121 = arith.maximumf %113, %120 : vector<4x8x1xf32>
      %122 = arith.subf %113, %121 : vector<4x8x1xf32>
      %123 = math.exp %122 : vector<4x8x1xf32>
      %124 = vector.broadcast %121 : vector<4x8x1xf32> to vector<4x8x8xf32>
      %125 = arith.subf %118, %124 : vector<4x8x8xf32>
      %126 = math.exp %125 : vector<4x8x8xf32>
      %127 = arith.mulf %123, %114 : vector<4x8x1xf32>
      %cst_44 = arith.constant dense<0.000000e+00> : vector<4x8xf32>
      %128 = vector.multi_reduction <add>, %126, %cst_44 [2] : vector<4x8x8xf32> to vector<4x8xf32>
      %129 = vector.shape_cast %128 : vector<4x8xf32> to vector<4x8x1xf32>
      %130 = arith.addf %127, %129 : vector<4x8x1xf32>
      %131 = vector.broadcast %123 : vector<4x8x1xf32> to vector<4x8x8xf32>
      %132 = arith.mulf %131, %115 : vector<4x8x8xf32>
      %133 = arith.truncf %126 : vector<4x8x8xf32> to vector<4x8x8xbf16>
      "tpu.trace_start"() <{level = 10 : i32, message = "hqk,hkd->hqd"}> : () -> ()
      %cst_45 = arith.constant dense<0.000000e+00> : vector<4x8x8xf32>
      %134 = tpu.matmul %133, %112, %cst_45 {dimension_numbers = #tpu.dot_dimension_numbers<[2], [1], [1], [2], [0, 0, 0, 1, 1, 2], [0], [0]>} : vector<4x8x8xbf16>, vector<4x8x8xbf16>, vector<4x8x8xf32> -> vector<4x8x8xf32>
      "tpu.trace_stop"() : () -> ()
      %135 = arith.addf %132, %134 : vector<4x8x8xf32>
      %136 = tpu.reciprocal %130 {approx = true} : vector<4x8x1xf32> -> vector<4x8x1xf32>
      %137 = vector.broadcast %136 : vector<4x8x1xf32> to vector<4x8x8xf32>
      %138 = arith.mulf %135, %137 : vector<4x8x8xf32>
      %139 = vector.extract_strided_slice %138 {offsets = [0, 0, 0], sizes = [1, 8, 8], strides = [1, 1, 1]} : vector<4x8x8xf32> to vector<1x8x8xf32>
      %140 = vector.shape_cast %139 : vector<1x8x8xf32> to vector<8x8xf32>
      %141 = vector.extract_strided_slice %138 {offsets = [1, 0, 0], sizes = [1, 8, 8], strides = [1, 1, 1]} : vector<4x8x8xf32> to vector<1x8x8xf32>
      %142 = vector.shape_cast %141 : vector<1x8x8xf32> to vector<8x8xf32>
      %143 = vector.extract_strided_slice %138 {offsets = [2, 0, 0], sizes = [1, 8, 8], strides = [1, 1, 1]} : vector<4x8x8xf32> to vector<1x8x8xf32>
      %144 = vector.shape_cast %143 : vector<1x8x8xf32> to vector<8x8xf32>
      %145 = vector.extract_strided_slice %138 {offsets = [3, 0, 0], sizes = [1, 8, 8], strides = [1, 1, 1]} : vector<4x8x8xf32> to vector<1x8x8xf32>
      %146 = vector.shape_cast %145 : vector<1x8x8xf32> to vector<8x8xf32>
      %147 = tpu.concatenate %140, %142, %144, %146 in 1 : vector<8x8xf32>, vector<8x8xf32>, vector<8x8xf32>, vector<8x8xf32> -> vector<8x32xf32>
      %148 = arith.truncf %147 : vector<8x32xf32> to vector<8x32xbf16>
      %c0_46 = arith.constant 0 : index
      %c0_47 = arith.constant 0 : index
      %149 = vector.load %arg6[%c0_46, %c0_47] : memref<32x32xbf16, #tpu.memory_space<vmem>>, vector<32x32xbf16>
      %cst_48 = arith.constant dense<0.000000e+00> : vector<8x32xf32>
      %150 = tpu.matmul %148, %149, %cst_48 {dimension_numbers = #tpu.dot_dimension_numbers<[1], [0], [0], [1], [0, 0, 1, 1], [], []>} : vector<8x32xbf16>, vector<32x32xbf16>, vector<8x32xf32> -> vector<8x32xf32>
      %151 = arith.addf %55, %150 : vector<8x32xf32>
      %cst_49 = arith.constant dense<0.000000e+00> : vector<8xf32>
      %152 = vector.multi_reduction <add>, %151, %cst_49 [1] : vector<8x32xf32> to vector<8xf32>
      %153 = vector.shape_cast %152 : vector<8xf32> to vector<8x1xf32>
      %cst_50 = arith.constant 3.200000e+01 : f32
      %154 = vector.broadcast %cst_50 : f32 to vector<8x1xf32>
      %155 = arith.divf %153, %154 : vector<8x1xf32>
      %156 = vector.broadcast %155 : vector<8x1xf32> to vector<8x32xf32>
      %157 = arith.subf %151, %156 : vector<8x32xf32>
      %158 = arith.mulf %157, %157 : vector<8x32xf32>
      %cst_51 = arith.constant dense<0.000000e+00> : vector<8xf32>
      %159 = vector.multi_reduction <add>, %158, %cst_51 [1] : vector<8x32xf32> to vector<8xf32>
      %160 = vector.shape_cast %159 : vector<8xf32> to vector<8x1xf32>
      %cst_52 = arith.constant 3.200000e+01 : f32
      %161 = vector.broadcast %cst_52 : f32 to vector<8x1xf32>
      %162 = arith.divf %160, %161 : vector<8x1xf32>
      %163 = vector.broadcast %155 : vector<8x1xf32> to vector<8x32xf32>
      %164 = arith.subf %151, %163 : vector<8x32xf32>
      %cst_53 = arith.constant 9.99999974E-6 : f32
      %165 = vector.broadcast %cst_53 : f32 to vector<8x1xf32>
      %166 = arith.addf %162, %165 : vector<8x1xf32>
      %167 = math.rsqrt %166 : vector<8x1xf32>
      %168 = vector.broadcast %167 : vector<8x1xf32> to vector<8x32xf32>
      %169 = arith.mulf %164, %168 : vector<8x32xf32>
      %170 = vector.shape_cast %12 : vector<32xf32> to vector<1x32xf32>
      %171 = vector.broadcast %170 : vector<1x32xf32> to vector<8x32xf32>
      %172 = arith.mulf %169, %171 : vector<8x32xf32>
      %173 = vector.shape_cast %14 : vector<32xf32> to vector<1x32xf32>
      %174 = vector.broadcast %173 : vector<1x32xf32> to vector<8x32xf32>
      %175 = arith.addf %172, %174 : vector<8x32xf32>
      %176 = arith.truncf %175 : vector<8x32xf32> to vector<8x32xbf16>
      %cst_54 = arith.constant 0.000000e+00 : f32
      %177 = vector.broadcast %cst_54 : f32 to vector<8x32xf32>
      %c0_55 = arith.constant 0 : index
      %c0_56 = arith.constant 0 : index
      %178 = vector.load %arg9[%c0_55, %c0_56] : memref<32x64xbf16, #tpu.memory_space<vmem>>, vector<32x64xbf16>
      %cst_57 = arith.constant dense<0.000000e+00> : vector<8x64xf32>
      %179 = tpu.matmul %176, %178, %cst_57 {dimension_numbers = #tpu.dot_dimension_numbers<[1], [0], [0], [1], [0, 0, 1, 1], [], []>} : vector<8x32xbf16>, vector<32x64xbf16>, vector<8x64xf32> -> vector<8x64xf32>
      %c0_58 = arith.constant 0 : index
      %c0_59 = arith.constant 0 : index
      %180 = vector.load %arg10[%c0_58, %c0_59] : memref<1x64xf32, #tpu.memory_space<vmem>>, vector<1x64xf32>
      %181 = vector.shape_cast %180 : vector<1x64xf32> to vector<64xf32>
      %182 = vector.shape_cast %181 : vector<64xf32> to vector<1x64xf32>
      %183 = vector.broadcast %182 : vector<1x64xf32> to vector<8x64xf32>
      %184 = arith.addf %179, %183 : vector<8x64xf32>
      %cst_60 = arith.constant 0.000000e+00 : f32
      %185 = vector.broadcast %cst_60 : f32 to vector<8x64xf32>
      %186 = arith.maximumf %184, %185 : vector<8x64xf32>
      %187 = arith.truncf %186 : vector<8x64xf32> to vector<8x64xbf16>
      %c0_61 = arith.constant 0 : index
      %c0_62 = arith.constant 0 : index
      %188 = vector.load %arg11[%c0_61, %c0_62] : memref<64x32xbf16, #tpu.memory_space<vmem>>, vector<64x32xbf16>
      %cst_63 = arith.constant dense<0.000000e+00> : vector<8x32xf32>
      %189 = tpu.matmul %187, %188, %cst_63 {dimension_numbers = #tpu.dot_dimension_numbers<[1], [0], [0], [1], [0, 0, 1, 1], [], []>} : vector<8x64xbf16>, vector<64x32xbf16>, vector<8x32xf32> -> vector<8x32xf32>
      %190 = arith.addf %177, %189 : vector<8x32xf32>
      %191 = arith.addf %151, %190 : vector<8x32xf32>
      %192 = vector.shape_cast %16 : vector<32xf32> to vector<1x32xf32>
      %193 = vector.broadcast %192 : vector<1x32xf32> to vector<8x32xf32>
      %194 = arith.addf %191, %193 : vector<8x32xf32>
      scf.yield %194 : vector<8x32xf32>
    }
    %c3_i32_16 = arith.constant 3 : i32
    %c0_17 = arith.constant 0 : index
    %c0_18 = arith.constant 0 : index
    %19 = vector.load %arg13[%c0_17, %c0_18] : memref<2x32xf32, #tpu.memory_space<vmem>>, vector<1x32xf32>
    %20 = vector.shape_cast %19 : vector<1x32xf32> to vector<32xf32>
    %c1_19 = arith.constant 1 : index
    %c0_20 = arith.constant 0 : index
    %21 = vector.load %arg13[%c1_19, %c0_20] : memref<2x32xf32, #tpu.memory_space<vmem>>, vector<1x32xf32>
    %22 = vector.shape_cast %21 : vector<1x32xf32> to vector<32xf32>
    %cst_21 = arith.constant dense<0.000000e+00> : vector<8xf32>
    %23 = vector.multi_reduction <add>, %18, %cst_21 [1] : vector<8x32xf32> to vector<8xf32>
    %24 = vector.shape_cast %23 : vector<8xf32> to vector<8x1xf32>
    %cst_22 = arith.constant 3.200000e+01 : f32
    %25 = vector.broadcast %cst_22 : f32 to vector<8x1xf32>
    %26 = arith.divf %24, %25 : vector<8x1xf32>
    %27 = vector.broadcast %26 : vector<8x1xf32> to vector<8x32xf32>
    %28 = arith.subf %18, %27 : vector<8x32xf32>
    %29 = arith.mulf %28, %28 : vector<8x32xf32>
    %cst_23 = arith.constant dense<0.000000e+00> : vector<8xf32>
    %30 = vector.multi_reduction <add>, %29, %cst_23 [1] : vector<8x32xf32> to vector<8xf32>
    %31 = vector.shape_cast %30 : vector<8xf32> to vector<8x1xf32>
    %cst_24 = arith.constant 3.200000e+01 : f32
    %32 = vector.broadcast %cst_24 : f32 to vector<8x1xf32>
    %33 = arith.divf %31, %32 : vector<8x1xf32>
    %34 = vector.broadcast %26 : vector<8x1xf32> to vector<8x32xf32>
    %35 = arith.subf %18, %34 : vector<8x32xf32>
    %cst_25 = arith.constant 9.99999974E-6 : f32
    %36 = vector.broadcast %cst_25 : f32 to vector<8x1xf32>
    %37 = arith.addf %33, %36 : vector<8x1xf32>
    %38 = math.rsqrt %37 : vector<8x1xf32>
    %39 = vector.broadcast %38 : vector<8x1xf32> to vector<8x32xf32>
    %40 = arith.mulf %35, %39 : vector<8x32xf32>
    %41 = vector.shape_cast %20 : vector<32xf32> to vector<1x32xf32>
    %42 = vector.broadcast %41 : vector<1x32xf32> to vector<8x32xf32>
    %43 = arith.mulf %40, %42 : vector<8x32xf32>
    %44 = vector.shape_cast %22 : vector<32xf32> to vector<1x32xf32>
    %45 = vector.broadcast %44 : vector<1x32xf32> to vector<8x32xf32>
    %46 = arith.addf %43, %45 : vector<8x32xf32>
    %c0_26 = arith.constant 0 : index
    %c0_27 = arith.constant 0 : index
    %c0_28 = arith.constant 0 : index
    %47 = vector.load %arg14[%c0_26, %c0_27, %c0_28] : memref<1x8x32xf32, #tpu.memory_space<vmem>>, vector<1x8x32xf32>
    %48 = vector.shape_cast %47 : vector<1x8x32xf32> to vector<8x32xf32>
    %49 = vector.shape_cast %46 : vector<8x32xf32> to vector<1x8x32xf32>
    tpu.vector_store %arg14[%c0_26, %c0_27, %c0_28], %49 {strides = array<i32>} : memref<1x8x32xf32, #tpu.memory_space<vmem>>, vector<1x8x32xf32>,
    return
  }
  func.func @transform_0(%arg0: i32) -> (i32, i32, i32) {
    %c0_i32 = arith.constant 0 : i32
    %c0_i32_0 = arith.constant 0 : i32
    %c0_i32_1 = arith.constant 0 : i32
    return %arg0, %c0_i32, %c0_i32_0 : i32, i32, i32
  }
  func.func @transform_1(%arg0: i32) -> (i32, i32, i32) {
    %c0_i32 = arith.constant 0 : i32
    %c0_i32_0 = arith.constant 0 : i32
    %c0_i32_1 = arith.constant 0 : i32
    return %arg0, %c0_i32, %c0_i32_0 : i32, i32, i32
  }
  func.func @transform_2(%arg0: i32) -> (i32, i32) {
    %c0_i32 = arith.constant 0 : i32
    %c0_i32_0 = arith.constant 0 : i32
    %c0_i32_1 = arith.constant 0 : i32
    return %c0_i32, %c0_i32_0 : i32, i32
  }
  func.func @transform_3(%arg0: i32) -> (i32, i32, i32) {
    %c0_i32 = arith.constant 0 : i32
    %c0_i32_0 = arith.constant 0 : i32
    %c0_i32_1 = arith.constant 0 : i32
    %c0_i32_2 = arith.constant 0 : i32
    return %c0_i32, %c0_i32_0, %c0_i32_1 : i32, i32, i32
  }
  func.func @transform_4(%arg0: i32) -> (i32, i32) {
    %c0_i32 = arith.constant 0 : i32
    %c0_i32_0 = arith.constant 0 : i32
    %c0_i32_1 = arith.constant 0 : i32
    return %c0_i32, %c0_i32_0 : i32, i32
  }
  func.func @transform_5(%arg0: i32) -> (i32, i32) {
    %c0_i32 = arith.constant 0 : i32
    %c0_i32_0 = arith.constant 0 : i32
    %c0_i32_1 = arith.constant 0 : i32
    return %c0_i32, %c0_i32_0 : i32, i32
  }
  func.func @transform_6(%arg0: i32) -> (i32, i32) {
    %c0_i32 = arith.constant 0 : i32
    %c0_i32_0 = arith.constant 0 : i32
    %c0_i32_1 = arith.constant 0 : i32
    return %c0_i32, %c0_i32_0 : i32, i32
  }
  func.func @transform_7(%arg0: i32) -> (i32, i32) {
    %c0_i32 = arith.constant 0 : i32
    %c0_i32_0 = arith.constant 0 : i32
    %c0_i32_1 = arith.constant 0 : i32
    return %c0_i32, %c0_i32_0 : i32, i32
  }
  func.func @transform_8(%arg0: i32) -> (i32, i32) {
    %c0_i32 = arith.constant 0 : i32
    %c0_i32_0 = arith.constant 0 : i32
    %c0_i32_1 = arith.constant 0 : i32
    return %c0_i32, %c0_i32_0 : i32, i32
  }
  func.func @transform_9(%arg0: i32) -> (i32, i32) {
    %c0_i32 = arith.constant 0 : i32
    %c0_i32_0 = arith.constant 0 : i32
    %c0_i32_1 = arith.constant 0 : i32
    return %c0_i32, %c0_i32_0 : i32, i32
  }
  func.func @transform_10(%arg0: i32) -> (i32, i32) {
    %c0_i32 = arith.constant 0 : i32
    %c0_i32_0 = arith.constant 0 : i32
    %c0_i32_1 = arith.constant 0 : i32
    return %c0_i32, %c0_i32_0 : i32, i32
  }
  func.func @transform_11(%arg0: i32) -> (i32, i32) {
    %c0_i32 = arith.constant 0 : i32
    %c0_i32_0 = arith.constant 0 : i32
    %c0_i32_1 = arith.constant 0 : i32
    return %c0_i32, %c0_i32_0 : i32, i32
  }
  func.func @transform_12(%arg0: i32) -> (i32, i32) {
    %c0_i32 = arith.constant 0 : i32
    %c0_i32_0 = arith.constant 0 : i32
    %c0_i32_1 = arith.constant 0 : i32
    return %c0_i32, %c0_i32_0 : i32, i32
  }
  func.func @transform_13(%arg0: i32) -> (i32, i32, i32) {
    %c0_i32 = arith.constant 0 : i32
    %c0_i32_0 = arith.constant 0 : i32
    %c0_i32_1 = arith.constant 0 : i32
    return %arg0, %c0_i32, %c0_i32_0 : i32, i32, i32
  }
}

module attributes {stable_mosaic.version = 11 : i64} {
  func.func @encoder_kernel(%arg0: i32, %arg1: memref<1x8x32xbf16, #tpu.memory_space<vmem>>, %arg2: memref<1x1x8xf32, #tpu.memory_space<vmem>>, %arg3: memref<8x32xf32, #tpu.memory_space<vmem>>, %arg4: memref<3x1x32xf32, #tpu.memory_space<vmem>>, %arg5: memref<32x96xbf16, #tpu.memory_space<vmem>>, %arg6: memref<32x32xbf16, #tpu.memory_space<vmem>>, %arg7: memref<2x32xf32, #tpu.memory_space<vmem>>, %arg8: memref<2x32xf32, #tpu.memory_space<vmem>>, %arg9: memref<32x64xbf16, #tpu.memory_space<vmem>>, %arg10: memref<1x64xf32, #tpu.memory_space<vmem>>, %arg11: memref<64x32xbf16, #tpu.memory_space<vmem>>, %arg12: memref<1x32xf32, #tpu.memory_space<vmem>>, %arg13: memref<2x32xf32, #tpu.memory_space<vmem>>, %arg14: memref<1x8x32xf32, #tpu.memory_space<vmem>>) attributes {dimension_semantics = [#tpu.dimension_semantics<parallel>], iteration_bounds = array<i64: 2>, scalar_prefetch = 0 : i64, scratch_operands = 0 : i64, tpu.core_type = #tpu.core_type<tc>, window_params = [{transform_indices = @transform_0, window_bounds = array<i64: 1, 8, 32>}, {transform_indices = @transform_1, window_bounds = array<i64: 1, 1, 8>}, {pipeline_mode = #tpu.pipeline_mode<synchronous>, transform_indices = @transform_2, window_bounds = array<i64: 8, 32>}, {pipeline_mode = #tpu.pipeline_mode<synchronous>, transform_indices = @transform_3, window_bounds = array<i64: 3, 1, 32>}, {pipeline_mode = #tpu.pipeline_mode<synchronous>, transform_indices = @transform_4, window_bounds = array<i64: 32, 96>}, {pipeline_mode = #tpu.pipeline_mode<synchronous>, transform_indices = @transform_5, window_bounds = array<i64: 32, 32>}, {pipeline_mode = #tpu.pipeline_mode<synchronous>, transform_indices = @transform_6, window_bounds = array<i64: 2, 32>}, {pipeline_mode = #tpu.pipeline_mode<synchronous>, transform_indices = @transform_7, window_bounds = array<i64: 2, 32>}, {pipeline_mode = #tpu.pipeline_mode<synchronous>, transform_indices = @transform_8, window_bounds = array<i64: 32, 64>}, {pipeline_mode = #tpu.pipeline_mode<synchronous>, transform_indices = @transform_9, window_bounds = array<i64: 1, 64>}, {pipeline_mode = #tpu.pipeline_mode<synchronous>, transform_indices = @transform_10, window_bounds = array<i64: 64, 32>}, {pipeline_mode = #tpu.pipeline_mode<synchronous>, transform_indices = @transform_11, window_bounds = array<i64: 1, 32>}, {pipeline_mode = #tpu.pipeline_mode<synchronous>, transform_indices = @transform_12, window_bounds = array<i64: 2, 32>}, {transform_indices = @transform_13, window_bounds = array<i64: 1, 8, 32>}]} {
    %c0 = arith.constant 0 : index
    %c0_0 = arith.constant 0 : index
    %c0_1 = arith.constant 0 : index
    %0 = vector.load %arg1[%c0, %c0_0, %c0_1] : memref<1x8x32xbf16, #tpu.memory_space<vmem>>, vector<1x8x32xbf16>
    %1 = vector.shape_cast %0 : vector<1x8x32xbf16> to vector<8x32xbf16>
    %2 = arith.extf %1 : vector<8x32xbf16> to vector<8x32xf32>
    %cst = arith.constant 5.65685415 : f32
    %3 = vector.broadcast %cst : f32 to vector<8x32xf32>
    %4 = arith.mulf %2, %3 : vector<8x32xf32>
    %c0_2 = arith.constant 0 : index
    %c0_3 = arith.constant 0 : index
    %5 = vector.load %arg3[%c0_2, %c0_3] : memref<8x32xf32, #tpu.memory_space<vmem>>, vector<8x32xf32>
    %c0_4 = arith.constant 0 : index
    %c0_5 = arith.constant 0 : index
    %c0_6 = arith.constant 0 : index
    %6 = vector.load %arg2[%c0_4, %c0_5, %c0_6] : memref<1x1x8xf32, #tpu.memory_space<vmem>>, vector<1x1x8xf32>
    %c0_7 = arith.constant 0 : index
    %c0_8 = arith.constant 0 : index
    %7 = vector.load %arg7[%c0_7, %c0_8] : memref<2x32xf32, #tpu.memory_space<vmem>>, vector<1x32xf32>
    %8 = vector.shape_cast %7 : vector<1x32xf32> to vector<32xf32>
    %c1 = arith.constant 1 : index
    %c0_9 = arith.constant 0 : index
    %9 = vector.load %arg7[%c1, %c0_9] : memref<2x32xf32, #tpu.memory_space<vmem>>, vector<1x32xf32>
    %10 = vector.shape_cast %9 : vector<1x32xf32> to vector<32xf32>
    %c0_10 = arith.constant 0 : index
    %c0_11 = arith.constant 0 : index
    %11 = vector.load %arg8[%c0_10, %c0_11] : memref<2x32xf32, #tpu.memory_space<vmem>>, vector<1x32xf32>
    %12 = vector.shape_cast %11 : vector<1x32xf32> to vector<32xf32>
    %c1_12 = arith.constant 1 : index
    %c0_13 = arith.constant 0 : index
    %13 = vector.load %arg8[%c1_12, %c0_13] : memref<2x32xf32, #tpu.memory_space<vmem>>, vector<1x32xf32>
    %14 = vector.shape_cast %13 : vector<1x32xf32> to vector<32xf32>
    %c0_14 = arith.constant 0 : index
    %c0_15 = arith.constant 0 : index
    %15 = vector.load %arg12[%c0_14, %c0_15] : memref<1x32xf32, #tpu.memory_space<vmem>>, vector<1x32xf32>
    %16 = vector.shape_cast %15 : vector<1x32xf32> to vector<32xf32>
    %c0_i32 = arith.constant 0 : i32
    %c3_i32 = arith.constant 3 : i32
    %17 = arith.addi %c0_i32, %c3_i32 : i32
    %c1_i32 = arith.constant 1 : i32
    %18 = scf.for %arg15 = %c0_i32 to %17 step %c1_i32 iter_args(%arg16 = %4) -> (vector<8x32xf32>)  : i32 {
      %50 = arith.addf %arg16, %5 : vector<8x32xf32>
      %51 = arith.index_cast %arg15 : i32 to index
      %c0_29 = arith.constant 0 : index
      %c0_30 = arith.constant 0 : index
      %52 = vector.load %arg4[%51, %c0_29, %c0_30] : memref<3x1x32xf32, #tpu.memory_space<vmem>>, vector<1x1x32xf32>
      %53 = vector.shape_cast %52 : vector<1x1x32xf32> to vector<1x32xf32>
      %54 = vector.broadcast %53 : vector<1x32xf32> to vector<8x32xf32>
      %55 = arith.addf %50, %54 : vector<8x32xf32>
      %cst_31 = arith.constant dense<0.000000e+00> : vector<8xf32>
      %56 = vector.multi_reduction <add>, %55, %cst_31 [1] : vector<8x32xf32> to vector<8xf32>
      %57 = vector.shape_cast %56 : vector<8xf32> to vector<8x1xf32>
      %cst_32 = arith.constant 3.200000e+01 : f32
      %58 = vector.broadcast %cst_32 : f32 to vector<8x1xf32>
      %59 = arith.divf %57, %58 : vector<8x1xf32>
      %60 = vector.broadcast %59 : vector<8x1xf32> to vector<8x32xf32>
      %61 = arith.subf %55, %60 : vector<8x32xf32>
      %62 = arith.mulf %61, %61 : vector<8x32xf32>
      %cst_33 = arith.constant dense<0.000000e+00> : vector<8xf32>
      %63 = vector.multi_reduction <add>, %62, %cst_33 [1] : vector<8x32xf32> to vector<8xf32>
      %64 = vector.shape_cast %63 : vector<8xf32> to vector<8x1xf32>
      %cst_34 = arith.constant 3.200000e+01 : f32
      %65 = vector.broadcast %cst_34 : f32 to vector<8x1xf32>
      %66 = arith.divf %64, %65 : vector<8x1xf32>
      %67 = vector.broadcast %59 : vector<8x1xf32> to vector<8x32xf32>
      %68 = arith.subf %55, %67 : vector<8x32xf32>
      %cst_35 = arith.constant 9.99999974E-6 : f32
      %69 = vector.broadcast %cst_35 : f32 to vector<8x1xf32>
      %70 = arith.addf %66, %69 : vector<8x1xf32>
      %71 = math.rsqrt %70 : vector<8x1xf32>
      %72 = vector.broadcast %71 : vector<8x1xf32> to vector<8x32xf32>
      %73 = arith.mulf %68, %72 : vector<8x32xf32>
      %74 = vector.shape_cast %8 : vector<32xf32> to vector<1x32xf32>
      %75 = vector.broadcast %74 : vector<1x32xf32> to vector<8x32xf32>
      %76 = arith.mulf %73, %75 : vector<8x32xf32>
      %77 = vector.shape_cast %10 : vector<32xf32> to vector<1x32xf32>
      %78 = vector.broadcast %77 : vector<1x32xf32> to vector<8x32xf32>
      %79 = arith.addf %76, %78 : vector<8x32xf32>
      %80 = arith.truncf %79 : vector<8x32xf32> to vector<8x32xbf16>
      %c0_36 = arith.constant 0 : index
      %c0_37 = arith.constant 0 : index
      %81 = vector.load %arg5[%c0_36, %c0_37] : memref<32x96xbf16, #tpu.memory_space<vmem>>, vector<32x96xbf16>
      %cst_38 = arith.constant dense<0.000000e+00> : vector<8x96xf32>
      %82 = tpu.matmul %80, %81, %cst_38 {dimension_numbers = #tpu.dot_dimension_numbers<[1], [0], [0], [1], [0, 0, 1, 1], [], []>} : vector<8x32xbf16>, vector<32x96xbf16>, vector<8x96xf32> -> vector<8x96xf32>
      %83 = vector.extract_strided_slice %82 {offsets = [0, 0], sizes = [8, 8], strides = [1, 1]} : vector<8x96xf32> to vector<8x8xf32>
      %84 = vector.extract_strided_slice %82 {offsets = [0, 8], sizes = [8, 8], strides = [1, 1]} : vector<8x96xf32> to vector<8x8xf32>
      %85 = vector.extract_strided_slice %82 {offsets = [0, 16], sizes = [8, 8], strides = [1, 1]} : vector<8x96xf32> to vector<8x8xf32>
      %86 = vector.extract_strided_slice %82 {offsets = [0, 24], sizes = [8, 8], strides = [1, 1]} : vector<8x96xf32> to vector<8x8xf32>
      %87 = vector.shape_cast %83 : vector<8x8xf32> to vector<1x8x8xf32>
      %88 = vector.shape_cast %84 : vector<8x8xf32> to vector<1x8x8xf32>
      %89 = vector.shape_cast %85 : vector<8x8xf32> to vector<1x8x8xf32>
      %90 = vector.shape_cast %86 : vector<8x8xf32> to vector<1x8x8xf32>
      %91 = tpu.concatenate %87, %88, %89, %90 in 0 : vector<1x8x8xf32>, vector<1x8x8xf32>, vector<1x8x8xf32>, vector<1x8x8xf32> -> vector<4x8x8xf32>
      %92 = arith.truncf %91 : vector<4x8x8xf32> to vector<4x8x8xbf16>
      %93 = vector.extract_strided_slice %82 {offsets = [0, 32], sizes = [8, 8], strides = [1, 1]} : vector<8x96xf32> to vector<8x8xf32>
      %94 = vector.extract_strided_slice %82 {offsets = [0, 40], sizes = [8, 8], strides = [1, 1]} : vector<8x96xf32> to vector<8x8xf32>
      %95 = vector.extract_strided_slice %82 {offsets = [0, 48], sizes = [8, 8], strides = [1, 1]} : vector<8x96xf32> to vector<8x8xf32>
      %96 = vector.extract_strided_slice %82 {offsets = [0, 56], sizes = [8, 8], strides = [1, 1]} : vector<8x96xf32> to vector<8x8xf32>
      %97 = vector.shape_cast %93 : vector<8x8xf32> to vector<1x8x8xf32>
      %98 = vector.shape_cast %94 : vector<8x8xf32> to vector<1x8x8xf32>
      %99 = vector.shape_cast %95 : vector<8x8xf32> to vector<1x8x8xf32>
      %100 = vector.shape_cast %96 : vector<8x8xf32> to vector<1x8x8xf32>
      %101 = tpu.concatenate %97, %98, %99, %100 in 0 : vector<1x8x8xf32>, vector<1x8x8xf32>, vector<1x8x8xf32>, vector<1x8x8xf32> -> vector<4x8x8xf32>
      %102 = arith.truncf %101 : vector<4x8x8xf32> to vector<4x8x8xbf16>
      %103 = vector.extract_strided_slice %82 {offsets = [0, 64], sizes = [8, 8], strides = [1, 1]} : vector<8x96xf32> to vector<8x8xf32>
      %104 = vector.extract_strided_slice %82 {offsets = [0, 72], sizes = [8, 8], strides = [1, 1]} : vector<8x96xf32> to vector<8x8xf32>
      %105 = vector.extract_strided_slice %82 {offsets = [0, 80], sizes = [8, 8], strides = [1, 1]} : vector<8x96xf32> to vector<8x8xf32>
      %106 = vector.extract_strided_slice %82 {offsets = [0, 88], sizes = [8, 8], strides = [1, 1]} : vector<8x96xf32> to vector<8x8xf32>
      %107 = vector.shape_cast %103 : vector<8x8xf32> to vector<1x8x8xf32>
      %108 = vector.shape_cast %104 : vector<8x8xf32> to vector<1x8x8xf32>
      %109 = vector.shape_cast %105 : vector<8x8xf32> to vector<1x8x8xf32>
      %110 = vector.shape_cast %106 : vector<8x8xf32> to vector<1x8x8xf32>
      %111 = tpu.concatenate %107, %108, %109, %110 in 0 : vector<1x8x8xf32>, vector<1x8x8xf32>, vector<1x8x8xf32>, vector<1x8x8xf32> -> vector<4x8x8xf32>
      %112 = arith.truncf %111 : vector<4x8x8xf32> to vector<4x8x8xbf16>
      %cst_39 = arith.constant -1.000000e+30 : f32
      %113 = vector.broadcast %cst_39 : f32 to vector<4x8x1xf32>
      %cst_40 = arith.constant 0.000000e+00 : f32
      %114 = vector.broadcast %cst_40 : f32 to vector<4x8x1xf32>
      %cst_41 = arith.constant 0.000000e+00 : f32
      %115 = vector.broadcast %cst_41 : f32 to vector<4x8x8xf32>
      "tpu.trace_start"() <{level = 10 : i32, message = "hqd,hkd->hqk"}> : () -> ()
      %cst_42 = arith.constant dense<0.000000e+00> : vector<4x8x8xf32>
      %116 = tpu.matmul %92, %102, %cst_42 {dimension_numbers = #tpu.dot_dimension_numbers<[2], [2], [1], [1], [0, 0, 0, 1, 1, 1], [0], [0]>} : vector<4x8x8xbf16>, vector<4x8x8xbf16>, vector<4x8x8xf32> -> vector<4x8x8xf32>
      "tpu.trace_stop"() : () -> ()
      %117 = vector.broadcast %6 : vector<1x1x8xf32> to vector<4x8x8xf32>
      %118 = arith.addf %116, %117 : vector<4x8x8xf32>
      %cst_43 = arith.constant dense<0xFF800000> : vector<4x8xf32>
      %119 = vector.multi_reduction <maximumf>, %118, %cst_43 [2] : vector<4x8x8xf32> to vector<4x8xf32>
      %120 = vector.shape_cast %119 : vector<4x8xf32> to vector<4x8x1xf32>
      %121 = arith.maximumf %113, %120 : vector<4x8x1xf32>
      %122 = arith.subf %113, %121 : vector<4x8x1xf32>
      %123 = math.exp %122 : vector<4x8x1xf32>
      %124 = vector.broadcast %121 : vector<4x8x1xf32> to vector<4x8x8xf32>
      %125 = arith.subf %118, %124 : vector<4x8x8xf32>
      %126 = math.exp %125 : vector<4x8x8xf32>
      %127 = arith.mulf %123, %114 : vector<4x8x1xf32>
      %cst_44 = arith.constant dense<0.000000e+00> : vector<4x8xf32>
      %128 = vector.multi_reduction <add>, %126, %cst_44 [2] : vector<4x8x8xf32> to vector<4x8xf32>
      %129 = vector.shape_cast %128 : vector<4x8xf32> to vector<4x8x1xf32>
      %130 = arith.addf %127, %129 : vector<4x8x1xf32>
      %131 = vector.broadcast %123 : vector<4x8x1xf32> to vector<4x8x8xf32>
      %132 = arith.mulf %131, %115 : vector<4x8x8xf32>
      %133 = arith.truncf %126 : vector<4x8x8xf32> to vector<4x8x8xbf16>
      "tpu.trace_start"() <{level = 10 : i32, message = "hqk,hkd->hqd"}> : () -> ()
      %cst_45 = arith.constant dense<0.000000e+00> : vector<4x8x8xf32>
      %134 = tpu.matmul %133, %112, %cst_45 {dimension_numbers = #tpu.dot_dimension_numbers<[2], [1], [1], [2], [0, 0, 0, 1, 1, 2], [0], [0]>} : vector<4x8x8xbf16>, vector<4x8x8xbf16>, vector<4x8x8xf32> -> vector<4x8x8xf32>
      "tpu.trace_stop"() : () -> ()
      %135 = arith.addf %132, %134 : vector<4x8x8xf32>
      %136 = tpu.reciprocal %130 {approx = true} : vector<4x8x1xf32> -> vector<4x8x1xf32>
      %137 = vector.broadcast %136 : vector<4x8x1xf32> to vector<4x8x8xf32>
      %138 = arith.mulf %135, %137 : vector<4x8x8xf32>
      %139 = vector.extract_strided_slice %138 {offsets = [0, 0, 0], sizes = [1, 8, 8], strides = [1, 1, 1]} : vector<4x8x8xf32> to vector<1x8x8xf32>
      %140 = vector.shape_cast %139 : vector<1x8x8xf32> to vector<8x8xf32>
      %141 = vector.extract_strided_slice %138 {offsets = [1, 0, 0], sizes = [1, 8, 8], strides = [1, 1, 1]} : vector<4x8x8xf32> to vector<1x8x8xf32>
      %142 = vector.shape_cast %141 : vector<1x8x8xf32> to vector<8x8xf32>
      %143 = vector.extract_strided_slice %138 {offsets = [2, 0, 0], sizes = [1, 8, 8], strides = [1, 1, 1]} : vector<4x8x8xf32> to vector<1x8x8xf32>
      %144 = vector.shape_cast %143 : vector<1x8x8xf32> to vector<8x8xf32>
      %145 = vector.extract_strided_slice %138 {offsets = [3, 0, 0], sizes = [1, 8, 8], strides = [1, 1, 1]} : vector<4x8x8xf32> to vector<1x8x8xf32>
      %146 = vector.shape_cast %145 : vector<1x8x8xf32> to vector<8x8xf32>
      %147 = tpu.concatenate %140, %142, %144, %146 in 1 : vector<8x8xf32>, vector<8x8xf32>, vector<8x8xf32>, vector<8x8xf32> -> vector<8x32xf32>
      %148 = arith.truncf %147 : vector<8x32xf32> to vector<8x32xbf16>
      %c0_46 = arith.constant 0 : index
      %c0_47 = arith.constant 0 : index
      %149 = vector.load %arg6[%c0_46, %c0_47] : memref<32x32xbf16, #tpu.memory_space<vmem>>, vector<32x32xbf16>
      %cst_48 = arith.constant dense<0.000000e+00> : vector<8x32xf32>
      %150 = tpu.matmul %148, %149, %cst_48 {dimension_numbers = #tpu.dot_dimension_numbers<[1], [0], [0], [1], [0, 0, 1, 1], [], []>} : vector<8x32xbf16>, vector<32x32xbf16>, vector<8x32xf32> -> vector<8x32xf32>
      %151 = arith.addf %55, %150 : vector<8x32xf32>
      %cst_49 = arith.constant dense<0.000000e+00> : vector<8xf32>
      %152 = vector.multi_reduction <add>, %151, %cst_49 [1] : vector<8x32xf32> to vector<8xf32>
      %153 = vector.shape_cast %152 : vector<8xf32> to vector<8x1xf32>
      %cst_50 = arith.constant 3.200000e+01 : f32
      %154 = vector.broadcast %cst_50 : f32 to vector<8x1xf32>
      %155 = arith.divf %153, %154 : vector<8x1xf32>
      %156 = vector.broadcast %155 : vector<8x1xf32> to vector<8x32xf32>
      %157 = arith.subf %151, %156 : vector<8x32xf32>
      %158 = arith.mulf %157, %157 : vector<8x32xf32>
      %cst_51 = arith.constant dense<0.000000e+00> : vector<8xf32>
      %159 = vector.multi_reduction <add>, %158, %cst_51 [1] : vector<8x32xf32> to vector<8xf32>
      %160 = vector.shape_cast %159 : vector<8xf32> to vector<8x1xf32>
      %cst_52 = arith.constant 3.200000e+01 : f32
      %161 = vector.broadcast %cst_52 : f32 to vector<8x1xf32>
      %162 = arith.divf %160, %161 : vector<8x1xf32>
      %163 = vector.broadcast %155 : vector<8x1xf32> to vector<8x32xf32>
      %164 = arith.subf %151, %163 : vector<8x32xf32>
      %cst_53 = arith.constant 9.99999974E-6 : f32
      %165 = vector.broadcast %cst_53 : f32 to vector<8x1xf32>
      %166 = arith.addf %162, %165 : vector<8x1xf32>
      %167 = math.rsqrt %166 : vector<8x1xf32>
      %168 = vector.broadcast %167 : vector<8x1xf32> to vector<8x32xf32>
      %169 = arith.mulf %164, %168 : vector<8x32xf32>
      %170 = vector.shape_cast %12 : vector<32xf32> to vector<1x32xf32>
      %171 = vector.broadcast %170 : vector<1x32xf32> to vector<8x32xf32>
      %172 = arith.mulf %169, %171 : vector<8x32xf32>
      %173 = vector.shape_cast %14 : vector<32xf32> to vector<1x32xf32>
      %174 = vector.broadcast %173 : vector<1x32xf32> to vector<8x32xf32>
      %175 = arith.addf %172, %174 : vector<8x32xf32>
      %176 = arith.truncf %175 : vector<8x32xf32> to vector<8x32xbf16>
      %cst_54 = arith.constant 0.000000e+00 : f32
      %177 = vector.broadcast %cst_54 : f32 to vector<8x32xf32>
      %c0_55 = arith.constant 0 : index
      %c0_56 = arith.constant 0 : index
      %178 = vector.load %arg9[%c0_55, %c0_56] : memref<32x64xbf16, #tpu.memory_space<vmem>>, vector<32x64xbf16>
      %cst_57 = arith.constant dense<0.000000e+00> : vector<8x64xf32>
      %179 = tpu.matmul %176, %178, %cst_57 {dimension_numbers = #tpu.dot_dimension_numbers<[1], [0], [0], [1], [0, 0, 1, 1], [], []>} : vector<8x32xbf16>, vector<32x64xbf16>, vector<8x64xf32> -> vector<8x64xf32>
      %c0_58 = arith.constant 0 : index
      %c0_59 = arith.constant 0 : index
      %180 = vector.load %arg10[%c0_58, %c0_59] : memref<1x64xf32, #tpu.memory_space<vmem>>, vector<1x64xf32>
      %181 = vector.shape_cast %180 : vector<1x64xf32> to vector<64xf32>
      %182 = vector.shape_cast %181 : vector<64xf32> to vector<1x64xf32>
      %183 = vector.broadcast %182 : vector<1x64xf32> to vector<8x64xf32>
      %184 = arith.addf %179, %183 : vector<8x64xf32>
      %cst_60 = arith.constant 0.000000e+00 : f32
      %185 = vector.broadcast %cst_60 : f32 to vector<8x64xf32>
      %186 = arith.maximumf %184, %185 : vector<8x64xf32>
      %187 = arith.truncf %186 : vector<8x64xf32> to vector<8x64xbf16>
      %c0_61 = arith.constant 0 : index
      %c0_62 = arith.constant 0 : index
      %188 = vector.load %arg11[%c0_61, %c0_62] : memref<64x32xbf16, #tpu.memory_space<vmem>>, vector<64x32xbf16>
      %cst_63 = arith.constant dense<0.000000e+00> : vector<8x32xf32>
      %189 = tpu.matmul %187, %188, %cst_63 {dimension_numbers = #tpu.dot_dimension_numbers<[1], [0], [0], [1], [0, 0, 1, 1], [], []>} : vector<8x64xbf16>, vector<64x32xbf16>, vector<8x32xf32> -> vector<8x32xf32>
      %190 = arith.addf %177, %189 : vector<8x32xf32>
      %191 = arith.addf %151, %190 : vector<8x32xf32>
      %192 = vector.shape_cast %16 : vector<32xf32> to vector<1x32xf32>
      %193 = vector.broadcast %192 : vector<1x32xf32> to vector<8x32xf32>
      %194 = arith.addf %191, %193 : vector<8x32xf32>
      scf.yield %194 : vector<8x32xf32>
    }
    %c3_i32_16 = arith.constant 3 : i32
    %c0_17 = arith.constant 0 : index
    %c0_18 = arith.constant 0 : index
    %19 = vector.load %arg13[%c0_17, %c0_18] : memref<2x32xf32, #tpu.memory_space<vmem>>, vector<1x32xf32>
    %20 = vector.shape_cast %19 : vector<1x32xf32> to vector<32xf32>
    %c1_19 = arith.constant 1 : index
    %c0_20 = arith.constant 0 : index
    %21 = vector.load %arg13[%c1_19, %c0_20] : memref<2x32xf32, #tpu.memory_space<vmem>>, vector<1x32xf32>
    %22 = vector.shape_cast %21 : vector<1x32xf32> to vector<32xf32>
    %cst_21 = arith.constant dense<0.000000e+00> : vector<8xf32>
    %23 = vector.multi_reduction <add>, %18, %cst_21 [1] : vector<8x32xf32> to vector<8xf32>
    %24 = vector.shape_cast %23 : vector<8xf32> to vector<8x1xf32>
    %cst_22 = arith.constant 3.200000e+01 : f32
    %25 = vector.broadcast %cst_22 : f32 to vector<8x1xf32>
    %26 = arith.divf %24, %25 : vector<8x1xf32>
    %27 = vector.broadcast %26 : vector<8x1xf32> to vector<8x32xf32>
    %28 = arith.subf %18, %27 : vector<8x32xf32>
    %29 = arith.mulf %28, %28 : vector<8x32xf32>
    %cst_23 = arith.constant dense<0.000000e+00> : vector<8xf32>
    %30 = vector.multi_reduction <add>, %29, %cst_23 [1] : vector<8x32xf32> to vector<8xf32>
    %31 = vector.shape_cast %30 : vector<8xf32> to vector<8x1xf32>
    %cst_24 = arith.constant 3.200000e+01 : f32
    %32 = vector.broadcast %cst_24 : f32 to vector<8x1xf32>
    %33 = arith.divf %31, %32 : vector<8x1xf32>
    %34 = vector.broadcast %26 : vector<8x1xf32> to vector<8x32xf32>
    %35 = arith.subf %18, %34 : vector<8x32xf32>
    %cst_25 = arith.constant 9.99999974E-6 : f32
    %36 = vector.broadcast %cst_25 : f32 to vector<8x1xf32>
    %37 = arith.addf %33, %36 : vector<8x1xf32>
    %38 = math.rsqrt %37 : vector<8x1xf32>
    %39 = vector.broadcast %38 : vector<8x1xf32> to vector<8x32xf32>
    %40 = arith.mulf %35, %39 : vector<8x32xf32>
    %41 = vector.shape_cast %20 : vector<32xf32> to vector<1x32xf32>
    %42 = vector.broadcast %41 : vector<1x32xf32> to vector<8x32xf32>
    %43 = arith.mulf %40, %42 : vector<8x32xf32>
    %44 = vector.shape_cast %22 : vector<32xf32> to vector<1x32xf32>
    %45 = vector.broadcast %44 : vector<1x32xf32> to vector<8x32xf32>
    %46 = arith.addf %43, %45 : vector<8x32xf32>
    %c0_26 = arith.constant 0 : index
    %c0_27 = arith.constant 0 : index
    %c0_28 = arith.constant 0 : index
    %47 = vector.load %arg14[%c0_26, %c0_27, %c0_28] : memref<1x8x32xf32, #tpu.memory_space<vmem>>, vector<1x8x32xf32>
    %48 = vector.shape_cast %47 : vector<1x8x32xf32> to vector<8x32xf32>
    %49 = vector.shape_cast %46 : vector<8x32xf32> to vector<1x8x32xf32>
    tpu.vector_store %arg14[%c0_26, %c0_27, %c0_28], %49 {strides = array<i32>} : memref<1x8x32xf32, #tpu.memory_space<vmem>>, vector<1x8x32xf32>,
    return
  }
  func.func @transform_0(%arg0: i32) -> (i32, i32, i32) {
    %c0_i32 = arith.constant 0 : i32
    %c0_i32_0 = arith.constant 0 : i32
    %c0_i32_1 = arith.constant 0 : i32
    return %arg0, %c0_i32, %c0_i32_0 : i32, i32, i32
  }
  func.func @transform_1(%arg0: i32) -> (i32, i32, i32) {
    %c0_i32 = arith.constant 0 : i32
    %c0_i32_0 = arith.constant 0 : i32
    %c0_i32_1 = arith.constant 0 : i32
    return %arg0, %c0_i32, %c0_i32_0 : i32, i32, i32
  }
  func.func @transform_2(%arg0: i32) -> (i32, i32) {
    %c0_i32 = arith.constant 0 : i32
    %c0_i32_0 = arith.constant 0 : i32
    %c0_i32_1 = arith.constant 0 : i32
    return %c0_i32, %c0_i32_0 : i32, i32
  }
  func.func @transform_3(%arg0: i32) -> (i32, i32, i32) {
    %c0_i32 = arith.constant 0 : i32
    %c0_i32_0 = arith.constant 0 : i32
    %c0_i32_1 = arith.constant 0 : i32
    %c0_i32_2 = arith.constant 0 : i32
    return %c0_i32, %c0_i32_0, %c0_i32_1 : i32, i32, i32
  }
  func.func @transform_4(%arg0: i32) -> (i32, i32) {
    %c0_i32 = arith.constant 0 : i32
    %c0_i32_0 = arith.constant 0 : i32
    %c0_i32_1 = arith.constant 0 : i32
    return %c0_i32, %c0_i32_0 : i32, i32
  }
  func.func @transform_5(%arg0: i32) -> (i32, i32) {
    %c0_i32 = arith.constant 0 : i32
    %c0_i32_0 = arith.constant 0 : i32
    %c0_i32_1 = arith.constant 0 : i32
    return %c0_i32, %c0_i32_0 : i32, i32
  }
  func.func @transform_6(%arg0: i32) -> (i32, i32) {
    %c0_i32 = arith.constant 0 : i32
    %c0_i32_0 = arith.constant 0 : i32
    %c0_i32_1 = arith.constant 0 : i32
    return %c0_i32, %c0_i32_0 : i32, i32
  }
  func.func @transform_7(%arg0: i32) -> (i32, i32) {
    %c0_i32 = arith.constant 0 : i32
    %c0_i32_0 = arith.constant 0 : i32
    %c0_i32_1 = arith.constant 0 : i32
    return %c0_i32, %c0_i32_0 : i32, i32
  }
  func.func @transform_8(%arg0: i32) -> (i32, i32) {
    %c0_i32 = arith.constant 0 : i32
    %c0_i32_0 = arith.constant 0 : i32
    %c0_i32_1 = arith.constant 0 : i32
    return %c0_i32, %c0_i32_0 : i32, i32
  }
  func.func @transform_9(%arg0: i32) -> (i32, i32) {
    %c0_i32 = arith.constant 0 : i32
    %c0_i32_0 = arith.constant 0 : i32
    %c0_i32_1 = arith.constant 0 : i32
    return %c0_i32, %c0_i32_0 : i32, i32
  }
  func.func @transform_10(%arg0: i32) -> (i32, i32) {
    %c0_i32 = arith.constant 0 : i32
    %c0_i32_0 = arith.constant 0 : i32
    %c0_i32_1 = arith.constant 0 : i32
    return %c0_i32, %c0_i32_0 : i32, i32
  }
  func.func @transform_11(%arg0: i32) -> (i32, i32) {
    %c0_i32 = arith.constant 0 : i32
    %c0_i32_0 = arith.constant 0 : i32
    %c0_i32_1 = arith.constant 0 : i32
    return %c0_i32, %c0_i32_0 : i32, i32
  }
  func.func @transform_12(%arg0: i32) -> (i32, i32) {
    %c0_i32 = arith.constant 0 : i32
    %c0_i32_0 = arith.constant 0 : i32
    %c0_i32_1 = arith.constant 0 : i32
    return %c0_i32, %c0_i32_0 : i32, i32
  }
  func.func @transform_13(%arg0: i32) -> (i32, i32, i32) {
    %c0_i32 = arith.constant 0 : i32
    %c0_i32_0 = arith.constant 0 : i32
    %c0_i32_1 = arith.constant 0 : i32
    return %arg0, %c0_i32, %c0_i32_0 : i32, i32, i32
  }
}

</mosaic_0001>

<llo_original>
// kernel: tpu_custom_call.1
$region0: #{tpu_custom_call.1}
  #allocation0 [shape = 'u32[]', space=smem, size = 0x4, offset = 0x4, fixed_abs, tag = 'smem constant byte address 0x4 - core index']
  #allocation1 [shape = 'u32[144,128]{1,0:T(1,128)}', space=vmem, size = 0x12000, scoped, tag = 'internal scratch']
  %s0 = inlined_call_operand.hbm [shape: bf16[2,8,32], index: 0, kind: input, shape index: {}]
  %s1 = inlined_call_operand.hbm [shape: f32[2,1,8], index: 1, kind: input, shape index: {}]
  %s2 = inlined_call_operand.hbm [shape: f32[8,32], index: 2, kind: input, shape index: {}]
  %s3 = inlined_call_operand.hbm [shape: f32[3,1,32], index: 3, kind: input, shape index: {}]
  %s4 = inlined_call_operand.hbm [shape: bf16[32,96], index: 4, kind: input, shape index: {}]
  %s5 = inlined_call_operand.hbm [shape: bf16[32,32], index: 5, kind: input, shape index: {}]
  %s6 = inlined_call_operand.hbm [shape: f32[2,32], index: 6, kind: input, shape index: {}]
  %s7 = inlined_call_operand.hbm [shape: f32[2,32], index: 7, kind: input, shape index: {}]
  %s8 = inlined_call_operand.hbm [shape: bf16[32,64], index: 8, kind: input, shape index: {}]
  %s9 = inlined_call_operand.hbm [shape: f32[1,64], index: 9, kind: input, shape index: {}]
  %s10 = inlined_call_operand.hbm [shape: bf16[64,32], index: 10, kind: input, shape index: {}]
  %s11 = inlined_call_operand.hbm [shape: f32[1,32], index: 11, kind: input, shape index: {}]
  %s12 = inlined_call_operand.hbm [shape: f32[2,32], index: 12, kind: input, shape index: {}]
  %s13 = inlined_call_operand.hbm [shape: f32[2,8,32], index: 13, kind: output, shape index: {}]
  %s14 = sld [smem:[#allocation0]]
  $region144: #{tpu_custom_call.1} parent=0
    _
  %s16 = ssub.s32 1, %s14
  %s17 = scalar_select 0, %s16, %s14
  $region1: #{tpu_custom_call.1} parent=0
    #allocation2 [shape = 'u8[4096]{0}', space=vmem, size = 0x1000, scoped, tag = 'input window, operand 0']
    #allocation3 [shape = 's32[2]{0}', space=sflag, size = 0x8, scoped, tag = 'scoped memory for tpu_custom_call.1']
    #allocation4 [shape = 's32[2]{0}', space=sflag, size = 0x8, scoped, tag = 'scoped memory for tpu_custom_call.1']
    #allocation5 [shape = 'u8[1024]{0}', space=vmem, size = 0x400, scoped, tag = 'input window, operand 1']
    #allocation6 [shape = 's32[2]{0}', space=sflag, size = 0x8, scoped, tag = 'scoped memory for tpu_custom_call.1']
    #allocation7 [shape = 'u8[4096]{0}', space=vmem, size = 0x1000, scoped, tag = 'input window, operand 2, single buffered']
    #allocation8 [shape = 'u8[1536]{0}', space=vmem, size = 0x800, scoped, tag = 'input window, operand 3, single buffered']
    #allocation9 [shape = 's32[1]{0}', space=sflag, size = 0x4, scoped, tag = 'scoped memory for tpu_custom_call.1']
    #allocation10 [shape = 'u8[8192]{0}', space=vmem, size = 0x2000, scoped, tag = 'input window, operand 4, single buffered']
    #allocation11 [shape = 'u8[8192]{0}', space=vmem, size = 0x2000, scoped, tag = 'input window, operand 5, single buffered']
    #allocation12 [shape = 's32[1]{0}', space=sflag, size = 0x4, scoped, tag = 'scoped memory for tpu_custom_call.1']
    #allocation13 [shape = 'u8[1024]{0}', space=vmem, size = 0x400, scoped, tag = 'input window, operand 6, single buffered']
    #allocation14 [shape = 'u8[1024]{0}', space=vmem, size = 0x400, scoped, tag = 'input window, operand 7, single buffered']
    #allocation15 [shape = 's32[1]{0}', space=sflag, size = 0x4, scoped, tag = 'scoped memory for tpu_custom_call.1']
    #allocation16 [shape = 'u8[8192]{0}', space=vmem, size = 0x2000, scoped, tag = 'input window, operand 8, single buffered']
    #allocation17 [shape = 'u8[512]{0}', space=vmem, size = 0x400, scoped, tag = 'input window, operand 9, single buffered']
    #allocation18 [shape = 's32[1]{0}', space=sflag, size = 0x4, scoped, tag = 'scoped memory for tpu_custom_call.1']
    #allocation19 [shape = 'u8[16384]{0}', space=vmem, size = 0x4000, scoped, tag = 'input window, operand 10, single buffered']
    #allocation20 [shape = 'u8[512]{0}', space=vmem, size = 0x400, scoped, tag = 'input window, operand 11, single buffered']
    #allocation21 [shape = 's32[1]{0}', space=sflag, size = 0x4, scoped, tag = 'scoped memory for tpu_custom_call.1']
    #allocation22 [shape = 'u8[1024]{0}', space=vmem, size = 0x400, scoped, tag = 'input window, operand 12, single buffered']
    #allocation23 [shape = 'u8[8192]{0}', space=vmem, size = 0x2000, scoped, tag = 'output window, operand 0']
    %18 = vsyncpa [#allocation3], 0
    %s19 = scalar_lea.sflag [#allocation3], 1
    %20 = vsyncpa %s19, 0
    %21 = vsyncpa [#allocation6], 0
    %s22 = scalar_lea.sflag [#allocation6], 1
    %23 = vsyncpa %s22, 0
    %24 = vsyncpa [#allocation9], 0
    %25 = vsyncpa [#allocation12], 0
    %26 = vsyncpa [#allocation15], 0
    %27 = vsyncpa [#allocation18], 0
    %28 = vsyncpa [#allocation21], 0
    %29 = vsyncpa [#allocation4], 0
    %s30 = scalar_lea.sflag [#allocation4], 1
    %31 = vsyncpa %s30, 0
    loop: start=0, step=1, limit=4
    $region2: #{tpu_custom_call.1} parent=1 // loop_pre_header
      _
    $region3: #{tpu_custom_call.1} parent=1 // loop_header
      %s33 = sphi 0, %s37
      %p34 = scmp.ge.s32.totalorder %s33, 4
      %s43 = sphi 0, %s45
      %s46 = sphi 0, %s43
      %s47 = sphi 0, %s46
      %s63 = sphi 0, %s47
      %s69 = sphi 0, %s71
      %s72 = sphi 0, %s69
      %s73 = sphi 0, %s72
      %s89 = sphi 0, %s73
      %s93 = sphi 0, %s93
      %s95 = sphi 0, %s93
      %s96 = sphi 0, %s95
      %s110 = sphi 0, %s96
      %s114 = sphi 0, %s114
      %s116 = sphi 0, %s114
      %s117 = sphi 0, %s116
      %s131 = sphi 0, %s117
      %s135 = sphi 0, %s135
      %s137 = sphi 0, %s135
      %s138 = sphi 0, %s137
      %s152 = sphi 0, %s138
      %s156 = sphi 0, %s156
      %s158 = sphi 0, %s156
      %s159 = sphi 0, %s158
      %s173 = sphi 0, %s159
      %s177 = sphi 0, %s177
      %s179 = sphi 0, %s177
      %s180 = sphi 0, %s179
      %s194 = sphi 0, %s180
      %s198 = sphi 0, %s198
      %s200 = sphi 0, %s198
      %s201 = sphi 0, %s200
      %s215 = sphi 0, %s201
      %s219 = sphi 0, %s219
      %s221 = sphi 0, %s219
      %s222 = sphi 0, %s221
      %s236 = sphi 0, %s222
      %s240 = sphi 0, %s240
      %s242 = sphi 0, %s240
      %s243 = sphi 0, %s242
      %s257 = sphi 0, %s243
      %s261 = sphi 0, %s261
      %s263 = sphi 0, %s261
      %s264 = sphi 0, %s263
      %s278 = sphi 0, %s264
      %s282 = sphi 0, %s282
      %s284 = sphi 0, %s282
      %s285 = sphi 0, %s284
      %s299 = sphi 0, %s285
      %s303 = sphi 0, %s303
      %s305 = sphi 0, %s303
      %s306 = sphi 0, %s305
      %s320 = sphi 0, %s306
      %s326 = sphi 0, %s328
      %s329 = sphi 0, %s326
      %s330 = sphi 0, %s329
      %s346 = sphi 0, %s330
    $region4: #{tpu_custom_call.1} parent=1 // loop_header_branch
      %36 = sbr.rel (%p34) target = $region8
    $region5: #{tpu_custom_call.1} parent=1 // loop_body
      %s38 = ssub.s32 %s33, 1
      %s39 = ssub.s32 %s33, 2
      %s40 = sadd.s32 %s33, 1
      %s41 = ssub.s32 %s33, %s40
      %p42 = scmp.eq.s32.totalorder %s41, 0
      %s44 = sadd.s32 %s43, 1
      %s45 = scalar_select %p42, %s43, %s44
      %p48 = pneg %p42
      %p49 = scmp.eq.s32.totalorder %s33, 1
      %p50 = por %p48, %p49
      %p51 = scmp.ne.s32.totalorder %s43, %s46
      %p52 = scmp.eq.s32.totalorder %s33, 0
      %p53 = por %p51, %p52
      %p54 = scmp.ne.s32.totalorder %s43, %s46
      %p55 = scmp.eq.s32.totalorder %s38, 1
      %p56 = por %p54, %p55
      %p57 = scmp.ne.s32.totalorder %s46, %s47
      %p58 = scmp.eq.s32.totalorder %s38, 0
      %p59 = por %p57, %p58
      %p60 = scmp.ne.s32.totalorder %s46, %s47
      %p61 = scmp.eq.s32.totalorder %s39, 1
      %p62 = por %p60, %p61
      %p64 = scmp.ne.s32.totalorder %s47, %s63
      %p65 = scmp.eq.s32.totalorder %s39, 0
      %p66 = por %p64, %p65
      %s67 = ssub.s32 %s33, %s40
      %p68 = scmp.eq.s32.totalorder %s67, 0
      %s70 = sadd.s32 %s69, 1
      %s71 = scalar_select %p68, %s69, %s70
      %p74 = pneg %p68
      %p75 = scmp.eq.s32.totalorder %s33, 1
      %p76 = por %p74, %p75
      %p77 = scmp.ne.s32.totalorder %s69, %s72
      %p78 = scmp.eq.s32.totalorder %s33, 0
      %p79 = por %p77, %p78
      %p80 = scmp.ne.s32.totalorder %s69, %s72
      %p81 = scmp.eq.s32.totalorder %s38, 1
      %p82 = por %p80, %p81
      %p83 = scmp.ne.s32.totalorder %s72, %s73
      %p84 = scmp.eq.s32.totalorder %s38, 0
      %p85 = por %p83, %p84
      %p86 = scmp.ne.s32.totalorder %s72, %s73
      %p87 = scmp.eq.s32.totalorder %s39, 1
      %p88 = por %p86, %p87
      %p90 = scmp.ne.s32.totalorder %s73, %s89
      %p91 = scmp.eq.s32.totalorder %s39, 0
      %p92 = por %p90, %p91
      %s94 = sadd.s32 %s93, 1
      %p97 = scmp.eq.s32.totalorder %s33, 1
      %p98 = scmp.ne.s32.totalorder %s93, %s95
      %p99 = scmp.eq.s32.totalorder %s33, 0
      %p100 = por %p98, %p99
      %p101 = scmp.ne.s32.totalorder %s93, %s95
      %p102 = scmp.eq.s32.totalorder %s38, 1
      %p103 = por %p101, %p102
      %p104 = scmp.ne.s32.totalorder %s95, %s96
      %p105 = scmp.eq.s32.totalorder %s38, 0
      %p106 = por %p104, %p105
      %p107 = scmp.ne.s32.totalorder %s95, %s96
      %p108 = scmp.eq.s32.totalorder %s39, 1
      %p109 = por %p107, %p108
      %p111 = scmp.ne.s32.totalorder %s96, %s110
      %p112 = scmp.eq.s32.totalorder %s39, 0
      %p113 = por %p111, %p112
      %s115 = sadd.s32 %s114, 1
      %p118 = scmp.eq.s32.totalorder %s33, 1
      %p119 = scmp.ne.s32.totalorder %s114, %s116
      %p120 = scmp.eq.s32.totalorder %s33, 0
      %p121 = por %p119, %p120
      %p122 = scmp.ne.s32.totalorder %s114, %s116
      %p123 = scmp.eq.s32.totalorder %s38, 1
      %p124 = por %p122, %p123
      %p125 = scmp.ne.s32.totalorder %s116, %s117
      %p126 = scmp.eq.s32.totalorder %s38, 0
      %p127 = por %p125, %p126
      %p128 = scmp.ne.s32.totalorder %s116, %s117
      %p129 = scmp.eq.s32.totalorder %s39, 1
      %p130 = por %p128, %p129
      %p132 = scmp.ne.s32.totalorder %s117, %s131
      %p133 = scmp.eq.s32.totalorder %s39, 0
      %p134 = por %p132, %p133
      %s136 = sadd.s32 %s135, 1
      %p139 = scmp.eq.s32.totalorder %s33, 1
      %p140 = scmp.ne.s32.totalorder %s135, %s137
      %p141 = scmp.eq.s32.totalorder %s33, 0
      %p142 = por %p140, %p141
      %p143 = scmp.ne.s32.totalorder %s135, %s137
      %p144 = scmp.eq.s32.totalorder %s38, 1
      %p145 = por %p143, %p144
      %p146 = scmp.ne.s32.totalorder %s137, %s138
      %p147 = scmp.eq.s32.totalorder %s38, 0
      %p148 = por %p146, %p147
      %p149 = scmp.ne.s32.totalorder %s137, %s138
      %p150 = scmp.eq.s32.totalorder %s39, 1
      %p151 = por %p149, %p150
      %p153 = scmp.ne.s32.totalorder %s138, %s152
      %p154 = scmp.eq.s32.totalorder %s39, 0
      %p155 = por %p153, %p154
      %s157 = sadd.s32 %s156, 1
      %p160 = scmp.eq.s32.totalorder %s33, 1
      %p161 = scmp.ne.s32.totalorder %s156, %s158
      %p162 = scmp.eq.s32.totalorder %s33, 0
      %p163 = por %p161, %p162
      %p164 = scmp.ne.s32.totalorder %s156, %s158
      %p165 = scmp.eq.s32.totalorder %s38, 1
      %p166 = por %p164, %p165
      %p167 = scmp.ne.s32.totalorder %s158, %s159
      %p168 = scmp.eq.s32.totalorder %s38, 0
      %p169 = por %p167, %p168
      %p170 = scmp.ne.s32.totalorder %s158, %s159
      %p171 = scmp.eq.s32.totalorder %s39, 1
      %p172 = por %p170, %p171
      %p174 = scmp.ne.s32.totalorder %s159, %s173
      %p175 = scmp.eq.s32.totalorder %s39, 0
      %p176 = por %p174, %p175
      %s178 = sadd.s32 %s177, 1
      %p181 = scmp.eq.s32.totalorder %s33, 1
      %p182 = scmp.ne.s32.totalorder %s177, %s179
      %p183 = scmp.eq.s32.totalorder %s33, 0
      %p184 = por %p182, %p183
      %p185 = scmp.ne.s32.totalorder %s177, %s179
      %p186 = scmp.eq.s32.totalorder %s38, 1
      %p187 = por %p185, %p186
      %p188 = scmp.ne.s32.totalorder %s179, %s180
      %p189 = scmp.eq.s32.totalorder %s38, 0
      %p190 = por %p188, %p189
      %p191 = scmp.ne.s32.totalorder %s179, %s180
      %p192 = scmp.eq.s32.totalorder %s39, 1
      %p193 = por %p191, %p192
      %p195 = scmp.ne.s32.totalorder %s180, %s194
      %p196 = scmp.eq.s32.totalorder %s39, 0
      %p197 = por %p195, %p196
      %s199 = sadd.s32 %s198, 1
      %p202 = scmp.eq.s32.totalorder %s33, 1
      %p203 = scmp.ne.s32.totalorder %s198, %s200
      %p204 = scmp.eq.s32.totalorder %s33, 0
      %p205 = por %p203, %p204
      %p206 = scmp.ne.s32.totalorder %s198, %s200
      %p207 = scmp.eq.s32.totalorder %s38, 1
      %p208 = por %p206, %p207
      %p209 = scmp.ne.s32.totalorder %s200, %s201
      %p210 = scmp.eq.s32.totalorder %s38, 0
      %p211 = por %p209, %p210
      %p212 = scmp.ne.s32.totalorder %s200, %s201
      %p213 = scmp.eq.s32.totalorder %s39, 1
      %p214 = por %p212, %p213
      %p216 = scmp.ne.s32.totalorder %s201, %s215
      %p217 = scmp.eq.s32.totalorder %s39, 0
      %p218 = por %p216, %p217
      %s220 = sadd.s32 %s219, 1
      %p223 = scmp.eq.s32.totalorder %s33, 1
      %p224 = scmp.ne.s32.totalorder %s219, %s221
      %p225 = scmp.eq.s32.totalorder %s33, 0
      %p226 = por %p224, %p225
      %p227 = scmp.ne.s32.totalorder %s219, %s221
      %p228 = scmp.eq.s32.totalorder %s38, 1
      %p229 = por %p227, %p228
      %p230 = scmp.ne.s32.totalorder %s221, %s222
      %p231 = scmp.eq.s32.totalorder %s38, 0
      %p232 = por %p230, %p231
      %p233 = scmp.ne.s32.totalorder %s221, %s222
      %p234 = scmp.eq.s32.totalorder %s39, 1
      %p235 = por %p233, %p234
      %p237 = scmp.ne.s32.totalorder %s222, %s236
      %p238 = scmp.eq.s32.totalorder %s39, 0
      %p239 = por %p237, %p238
      %s241 = sadd.s32 %s240, 1
      %p244 = scmp.eq.s32.totalorder %s33, 1
      %p245 = scmp.ne.s32.totalorder %s240, %s242
      %p246 = scmp.eq.s32.totalorder %s33, 0
      %p247 = por %p245, %p246
      %p248 = scmp.ne.s32.totalorder %s240, %s242
      %p249 = scmp.eq.s32.totalorder %s38, 1
      %p250 = por %p248, %p249
      %p251 = scmp.ne.s32.totalorder %s242, %s243
      %p252 = scmp.eq.s32.totalorder %s38, 0
      %p253 = por %p251, %p252
      %p254 = scmp.ne.s32.totalorder %s242, %s243
      %p255 = scmp.eq.s32.totalorder %s39, 1
      %p256 = por %p254, %p255
      %p258 = scmp.ne.s32.totalorder %s243, %s257
      %p259 = scmp.eq.s32.totalorder %s39, 0
      %p260 = por %p258, %p259
      %s262 = sadd.s32 %s261, 1
      %p265 = scmp.eq.s32.totalorder %s33, 1
      %p266 = scmp.ne.s32.totalorder %s261, %s263
      %p267 = scmp.eq.s32.totalorder %s33, 0
      %p268 = por %p266, %p267
      %p269 = scmp.ne.s32.totalorder %s261, %s263
      %p270 = scmp.eq.s32.totalorder %s38, 1
      %p271 = por %p269, %p270
      %p272 = scmp.ne.s32.totalorder %s263, %s264
      %p273 = scmp.eq.s32.totalorder %s38, 0
      %p274 = por %p272, %p273
      %p275 = scmp.ne.s32.totalorder %s263, %s264
      %p276 = scmp.eq.s32.totalorder %s39, 1
      %p277 = por %p275, %p276
      %p279 = scmp.ne.s32.totalorder %s264, %s278
      %p280 = scmp.eq.s32.totalorder %s39, 0
      %p281 = por %p279, %p280
      %s283 = sadd.s32 %s282, 1
      %p286 = scmp.eq.s32.totalorder %s33, 1
      %p287 = scmp.ne.s32.totalorder %s282, %s284
      %p288 = scmp.eq.s32.totalorder %s33, 0
      %p289 = por %p287, %p288
      %p290 = scmp.ne.s32.totalorder %s282, %s284
      %p291 = scmp.eq.s32.totalorder %s38, 1
      %p292 = por %p290, %p291
      %p293 = scmp.ne.s32.totalorder %s284, %s285
      %p294 = scmp.eq.s32.totalorder %s38, 0
      %p295 = por %p293, %p294
      %p296 = scmp.ne.s32.totalorder %s284, %s285
      %p297 = scmp.eq.s32.totalorder %s39, 1
      %p298 = por %p296, %p297
      %p300 = scmp.ne.s32.totalorder %s285, %s299
      %p301 = scmp.eq.s32.totalorder %s39, 0
      %p302 = por %p300, %p301
      %s304 = sadd.s32 %s303, 1
      %p307 = scmp.eq.s32.totalorder %s33, 1
      %p308 = scmp.ne.s32.totalorder %s303, %s305
      %p309 = scmp.eq.s32.totalorder %s33, 0
      %p310 = por %p308, %p309
      %p311 = scmp.ne.s32.totalorder %s303, %s305
      %p312 = scmp.eq.s32.totalorder %s38, 1
      %p313 = por %p311, %p312
      %p314 = scmp.ne.s32.totalorder %s305, %s306
      %p315 = scmp.eq.s32.totalorder %s38, 0
      %p316 = por %p314, %p315
      %p317 = scmp.ne.s32.totalorder %s305, %s306
      %p318 = scmp.eq.s32.totalorder %s39, 1
      %p319 = por %p317, %p318
      %p321 = scmp.ne.s32.totalorder %s306, %s320
      %p322 = scmp.eq.s32.totalorder %s39, 0
      %p323 = por %p321, %p322
      %s324 = ssub.s32 %s33, %s40
      %p325 = scmp.eq.s32.totalorder %s324, 0
      %s327 = sadd.s32 %s326, 1
      %s328 = scalar_select %p325, %s326, %s327
      %p331 = pneg %p325
      %p332 = scmp.eq.s32.totalorder %s33, 1
      %p333 = por %p331, %p332
      %p334 = scmp.ne.s32.totalorder %s326, %s329
      %p335 = scmp.eq.s32.totalorder %s33, 0
      %p336 = por %p334, %p335
      %p337 = scmp.ne.s32.totalorder %s326, %s329
      %p338 = scmp.eq.s32.totalorder %s38, 1
      %p339 = por %p337, %p338
      %p340 = scmp.ne.s32.totalorder %s329, %s330
      %p341 = scmp.eq.s32.totalorder %s38, 0
      %p342 = por %p340, %p341
      %p343 = scmp.ne.s32.totalorder %s329, %s330
      %p344 = scmp.eq.s32.totalorder %s39, 1
      %p345 = por %p343, %p344
      %p347 = scmp.ne.s32.totalorder %s330, %s346
      %p348 = scmp.eq.s32.totalorder %s39, 0
      %p349 = por %p347, %p348
      %p350 = scmp.le.s32.totalorder 1, %s33
      %p351 = scmp.lt.s32.totalorder %s33, 3
      %p352 = pnand %p350, %p351
      %p353 = pneg %p352
      // Predicated region
      $region9: #{tpu_custom_call.1} parent=5 // pred_check
        _
      $region10: #{tpu_custom_call.1} parent=5 // pred_check_branch
        %355 = sbr.rel (%p352) target = $region12
      $region11: #{tpu_custom_call.1} parent=5 // pred_region
        %s356 = ssub.s32 %s33, 1
        // Predicated region
        $region13: #{tpu_custom_call.1} parent=11 // pred_check
          %p357 = pneg %p106
        $region14: #{tpu_custom_call.1} parent=11 // pred_check_branch
          %359 = sbr.rel (%p357) target = $region16
        $region15: #{tpu_custom_call.1} parent=11 // pred_region
          %s361 = ssub.s32 128, 128
          %362 = vsyncadd [#allocation6], %s361
          %s364 = sshll.u32 [#allocation7], 4
          %s365 = int_to_ptr.vmem [resolvable:$true] %s364
          %367 = dma.hbm_to_vmem [thread:$0]  %s2, 128, %s365, [#allocation6]
        $region16: #{tpu_custom_call.1} parent=11 // pred_fallthru
          _
        // Predicated region
        $region17: #{tpu_custom_call.1} parent=11 // pred_check
          %p368 = pneg %p127
        $region18: #{tpu_custom_call.1} parent=11 // pred_check_branch
          %370 = sbr.rel (%p368) target = $region20
        $region19: #{tpu_custom_call.1} parent=11 // pred_region
          %s372 = ssub.s32 48, 48
          %373 = vsyncadd [#allocation9], %s372
          %s374 = sshll.u32 [#allocation8], 4
          %s375 = int_to_ptr.vmem [resolvable:$true] %s374
          %380 = dma.hbm_to_vmem [thread:$0]  %s3, 48, %s375, [#allocation9], 16, 16, 1
        $region20: #{tpu_custom_call.1} parent=11 // pred_fallthru
          _
        // Predicated region
        $region21: #{tpu_custom_call.1} parent=11 // pred_check
          %p381 = pneg %p148
        $region22: #{tpu_custom_call.1} parent=11 // pred_check_branch
          %383 = sbr.rel (%p381) target = $region24
        $region23: #{tpu_custom_call.1} parent=11 // pred_region
          %s385 = ssub.s32 256, 256
          %386 = vsyncadd [#allocation9], %s385
          %s387 = sshll.u32 [#allocation10], 4
          %s388 = int_to_ptr.vmem [resolvable:$true] %s387
          %393 = dma.hbm_to_vmem [thread:$0]  %s4, 256, %s388, [#allocation9], 64, 64, 4
        $region24: #{tpu_custom_call.1} parent=11 // pred_fallthru
          _
        // Predicated region
        $region25: #{tpu_custom_call.1} parent=11 // pred_check
          %p394 = pneg %p169
        $region26: #{tpu_custom_call.1} parent=11 // pred_check_branch
          %396 = sbr.rel (%p394) target = $region28
        $region27: #{tpu_custom_call.1} parent=11 // pred_region
          %s398 = ssub.s32 256, 256
          %399 = vsyncadd [#allocation12], %s398
          %s400 = sshll.u32 [#allocation11], 4
          %s401 = int_to_ptr.vmem [resolvable:$true] %s400
          %406 = dma.hbm_to_vmem [thread:$0]  %s5, 256, %s401, [#allocation12], 64, 64, 4
        $region28: #{tpu_custom_call.1} parent=11 // pred_fallthru
          _
        // Predicated region
        $region29: #{tpu_custom_call.1} parent=11 // pred_check
          %p407 = pneg %p190
        $region30: #{tpu_custom_call.1} parent=11 // pred_check_branch
          %409 = sbr.rel (%p407) target = $region32
        $region31: #{tpu_custom_call.1} parent=11 // pred_region
          %s411 = ssub.s32 32, 32
          %412 = vsyncadd [#allocation12], %s411
          %s414 = sshll.u32 [#allocation13], 4
          %s415 = int_to_ptr.vmem [resolvable:$true] %s414
          %417 = dma.hbm_to_vmem [thread:$0]  %s6, 32, %s415, [#allocation12]
        $region32: #{tpu_custom_call.1} parent=11 // pred_fallthru
          _
        // Predicated region
        $region33: #{tpu_custom_call.1} parent=11 // pred_check
          %p418 = pneg %p211
        $region34: #{tpu_custom_call.1} parent=11 // pred_check_branch
          %420 = sbr.rel (%p418) target = $region36
        $region35: #{tpu_custom_call.1} parent=11 // pred_region
          %s422 = ssub.s32 32, 32
          %423 = vsyncadd [#allocation15], %s422
          %s425 = sshll.u32 [#allocation14], 4
          %s426 = int_to_ptr.vmem [resolvable:$true] %s425
          %428 = dma.hbm_to_vmem [thread:$0]  %s7, 32, %s426, [#allocation15]
        $region36: #{tpu_custom_call.1} parent=11 // pred_fallthru
          _
        // Predicated region
        $region37: #{tpu_custom_call.1} parent=11 // pred_check
          %p429 = pneg %p232
        $region38: #{tpu_custom_call.1} parent=11 // pred_check_branch
          %431 = sbr.rel (%p429) target = $region40
        $region39: #{tpu_custom_call.1} parent=11 // pred_region
          %s433 = ssub.s32 256, 256
          %434 = vsyncadd [#allocation15], %s433
          %s435 = sshll.u32 [#allocation16], 4
          %s436 = int_to_ptr.vmem [resolvable:$true] %s435
          %441 = dma.hbm_to_vmem [thread:$0]  %s8, 256, %s436, [#allocation15], 64, 64, 4
        $region40: #{tpu_custom_call.1} parent=11 // pred_fallthru
          _
        // Predicated region
        $region41: #{tpu_custom_call.1} parent=11 // pred_check
          %p442 = pneg %p253
        $region42: #{tpu_custom_call.1} parent=11 // pred_check_branch
          %444 = sbr.rel (%p442) target = $region44
        $region43: #{tpu_custom_call.1} parent=11 // pred_region
          %s446 = ssub.s32 16, 16
          %447 = vsyncadd [#allocation18], %s446
          %s449 = sshll.u32 [#allocation17], 4
          %s450 = int_to_ptr.vmem [resolvable:$true] %s449
          %452 = dma.hbm_to_vmem [thread:$0]  %s9, 16, %s450, [#allocation18]
        $region44: #{tpu_custom_call.1} parent=11 // pred_fallthru
          _
        // Predicated region
        $region45: #{tpu_custom_call.1} parent=11 // pred_check
          %p453 = pneg %p274
        $region46: #{tpu_custom_call.1} parent=11 // pred_check_branch
          %455 = sbr.rel (%p453) target = $region48
        $region47: #{tpu_custom_call.1} parent=11 // pred_region
          %s457 = ssub.s32 512, 512
          %458 = vsyncadd [#allocation18], %s457
          %s459 = sshll.u32 [#allocation19], 4
          %s460 = int_to_ptr.vmem [resolvable:$true] %s459
          %465 = dma.hbm_to_vmem [thread:$0]  %s10, 512, %s460, [#allocation18], 64, 64, 4
        $region48: #{tpu_custom_call.1} parent=11 // pred_fallthru
          _
        // Predicated region
        $region49: #{tpu_custom_call.1} parent=11 // pred_check
          %p466 = pneg %p295
        $region50: #{tpu_custom_call.1} parent=11 // pred_check_branch
          %468 = sbr.rel (%p466) target = $region52
        $region51: #{tpu_custom_call.1} parent=11 // pred_region
          %s470 = ssub.s32 16, 16
          %471 = vsyncadd [#allocation21], %s470
          %s473 = sshll.u32 [#allocation20], 4
          %s474 = int_to_ptr.vmem [resolvable:$true] %s473
          %476 = dma.hbm_to_vmem [thread:$0]  %s11, 16, %s474, [#allocation21]
        $region52: #{tpu_custom_call.1} parent=11 // pred_fallthru
          _
        // Predicated region
        $region53: #{tpu_custom_call.1} parent=11 // pred_check
          %p477 = pneg %p316
        $region54: #{tpu_custom_call.1} parent=11 // pred_check_branch
          %479 = sbr.rel (%p477) target = $region56
        $region55: #{tpu_custom_call.1} parent=11 // pred_region
          %s481 = ssub.s32 32, 32
          %482 = vsyncadd [#allocation21], %s481
          %s484 = sshll.u32 [#allocation22], 4
          %s485 = int_to_ptr.vmem [resolvable:$true] %s484
          %487 = dma.hbm_to_vmem [thread:$0]  %s12, 32, %s485, [#allocation21]
        $region56: #{tpu_custom_call.1} parent=11 // pred_fallthru
          _
      $region12: #{tpu_custom_call.1} parent=5 // pred_fallthru
        _
      %p488 = scmp.lt.s32.totalorder %s33, 2
      // Predicated region
      $region57: #{tpu_custom_call.1} parent=5 // pred_check
        %p489 = pneg %p488
      $region58: #{tpu_custom_call.1} parent=5 // pred_check_branch
        %491 = sbr.rel (%p489) target = $region60
      $region59: #{tpu_custom_call.1} parent=5 // pred_region
        // Predicated region
        $region61: #{tpu_custom_call.1} parent=59 // pred_check
          %p492 = pneg %p53
        $region62: #{tpu_custom_call.1} parent=59 // pred_check_branch
          %494 = sbr.rel (%p492) target = $region64
        $region63: #{tpu_custom_call.1} parent=59 // pred_region
          %s495 = sand.u32 %s43, 1
          %s496 = scalar_lea.sflag [#allocation3], %s495
          %s497 = sand.u32 %s43, 1
          %s498 = smul.addr %s497, 4
          %s499 = scalar_lea.vmem [#allocation2], %s498
          %s501 = ssub.s32 64, 64
          %502 = vsyncadd %s496, %s501
          %s503 = smul.addr %s33, 64
          %s504 = scalar_lea.hbm %s0, %s503
          %s506 = sshll.u32 %s499, 4
          %s507 = int_to_ptr.vmem [resolvable:$true] %s506
          %509 = dma.hbm_to_vmem [thread:$0]  %s504, 64, %s507, %s496
        $region64: #{tpu_custom_call.1} parent=59 // pred_fallthru
          _
        // Predicated region
        $region65: #{tpu_custom_call.1} parent=59 // pred_check
          %p510 = pneg %p79
        $region66: #{tpu_custom_call.1} parent=59 // pred_check_branch
          %512 = sbr.rel (%p510) target = $region68
        $region67: #{tpu_custom_call.1} parent=59 // pred_region
          %s513 = sand.u32 %s33, 1
          %s514 = scalar_lea.sflag [#allocation6], %s513
          %s515 = sand.u32 %s69, 1
          %s516 = scalar_lea.vmem [#allocation5], %s515
          %s518 = ssub.s32 16, 16
          %519 = vsyncadd %s514, %s518
          %s520 = smul.addr %s33, 16
          %s521 = scalar_lea.hbm %s1, %s520
          %s523 = sshll.u32 %s516, 4
          %s524 = int_to_ptr.vmem [resolvable:$true] %s523
          %526 = dma.hbm_to_vmem [thread:$0]  %s521, 16, %s524, %s514
        $region68: #{tpu_custom_call.1} parent=59 // pred_fallthru
          _
      $region60: #{tpu_custom_call.1} parent=5 // pred_fallthru
        _
      %p527 = scmp.le.s32.totalorder 1, %s33
      %p528 = scmp.lt.s32.totalorder %s33, 3
      %p529 = pnand %p527, %p528
      %p530 = pneg %p529
      // Predicated region
      $region69: #{tpu_custom_call.1} parent=5 // pred_check
        _
      $region70: #{tpu_custom_call.1} parent=5 // pred_check_branch
        %532 = sbr.rel (%p529) target = $region72
      $region71: #{tpu_custom_call.1} parent=5 // pred_region
        %s533 = ssub.s32 %s33, 1
        %s534 = sand.u32 %s46, 1
        %s535 = scalar_lea.sflag [#allocation3], %s534
        %s536 = sand.u32 %s46, 1
        %s537 = smul.addr %s536, 4
        %s538 = scalar_lea.vmem [#allocation2], %s537
        // Predicated region
        $region73: #{tpu_custom_call.1} parent=71 // pred_check
          %p539 = pneg %p59
        $region74: #{tpu_custom_call.1} parent=71 // pred_check_branch
          %541 = sbr.rel (%p539) target = $region76
        $region75: #{tpu_custom_call.1} parent=71 // pred_region
          %542 = dma.done %s535, 64
        $region76: #{tpu_custom_call.1} parent=71 // pred_fallthru
          _
        %s543 = sand.u32 %s38, 1
        %s544 = scalar_lea.sflag [#allocation6], %s543
        %s545 = sand.u32 %s72, 1
        %s546 = scalar_lea.vmem [#allocation5], %s545
        // Predicated region
        $region77: #{tpu_custom_call.1} parent=71 // pred_check
          %p547 = pneg %p85
        $region78: #{tpu_custom_call.1} parent=71 // pred_check_branch
          %549 = sbr.rel (%p547) target = $region80
        $region79: #{tpu_custom_call.1} parent=71 // pred_region
          %550 = dma.done %s544, 16
        $region80: #{tpu_custom_call.1} parent=71 // pred_fallthru
          _
        // Predicated region
        $region81: #{tpu_custom_call.1} parent=71 // pred_check
          %p551 = pneg %p106
        $region82: #{tpu_custom_call.1} parent=71 // pred_check_branch
          %553 = sbr.rel (%p551) target = $region84
        $region83: #{tpu_custom_call.1} parent=71 // pred_region
          %554 = dma.done [#allocation6], 128
        $region84: #{tpu_custom_call.1} parent=71 // pred_fallthru
          _
        // Predicated region
        $region85: #{tpu_custom_call.1} parent=71 // pred_check
          %p555 = pneg %p127
        $region86: #{tpu_custom_call.1} parent=71 // pred_check_branch
          %557 = sbr.rel (%p555) target = $region88
        $region87: #{tpu_custom_call.1} parent=71 // pred_region
          %558 = dma.done [#allocation9], 48
        $region88: #{tpu_custom_call.1} parent=71 // pred_fallthru
          _
        // Predicated region
        $region89: #{tpu_custom_call.1} parent=71 // pred_check
          %p559 = pneg %p148
        $region90: #{tpu_custom_call.1} parent=71 // pred_check_branch
          %561 = sbr.rel (%p559) target = $region92
        $region91: #{tpu_custom_call.1} parent=71 // pred_region
          %562 = dma.done [#allocation9], 256
        $region92: #{tpu_custom_call.1} parent=71 // pred_fallthru
          _
        // Predicated region
        $region93: #{tpu_custom_call.1} parent=71 // pred_check
          %p563 = pneg %p169
        $region94: #{tpu_custom_call.1} parent=71 // pred_check_branch
          %565 = sbr.rel (%p563) target = $region96
        $region95: #{tpu_custom_call.1} parent=71 // pred_region
          %566 = dma.done [#allocation12], 256
        $region96: #{tpu_custom_call.1} parent=71 // pred_fallthru
          _
        // Predicated region
        $region97: #{tpu_custom_call.1} parent=71 // pred_check
          %p567 = pneg %p190
        $region98: #{tpu_custom_call.1} parent=71 // pred_check_branch
          %569 = sbr.rel (%p567) target = $region100
        $region99: #{tpu_custom_call.1} parent=71 // pred_region
          %570 = dma.done [#allocation12], 32
        $region100: #{tpu_custom_call.1} parent=71 // pred_fallthru
          _
        // Predicated region
        $region101: #{tpu_custom_call.1} parent=71 // pred_check
          %p571 = pneg %p211
        $region102: #{tpu_custom_call.1} parent=71 // pred_check_branch
          %573 = sbr.rel (%p571) target = $region104
        $region103: #{tpu_custom_call.1} parent=71 // pred_region
          %574 = dma.done [#allocation15], 32
        $region104: #{tpu_custom_call.1} parent=71 // pred_fallthru
          _
        // Predicated region
        $region105: #{tpu_custom_call.1} parent=71 // pred_check
          %p575 = pneg %p232
        $region106: #{tpu_custom_call.1} parent=71 // pred_check_branch
          %577 = sbr.rel (%p575) target = $region108
        $region107: #{tpu_custom_call.1} parent=71 // pred_region
          %578 = dma.done [#allocation15], 256
        $region108: #{tpu_custom_call.1} parent=71 // pred_fallthru
          _
        // Predicated region
        $region109: #{tpu_custom_call.1} parent=71 // pred_check
          %p579 = pneg %p253
        $region110: #{tpu_custom_call.1} parent=71 // pred_check_branch
          %581 = sbr.rel (%p579) target = $region112
        $region111: #{tpu_custom_call.1} parent=71 // pred_region
          %582 = dma.done [#allocation18], 16
        $region112: #{tpu_custom_call.1} parent=71 // pred_fallthru
          _
        // Predicated region
        $region113: #{tpu_custom_call.1} parent=71 // pred_check
          %p583 = pneg %p274
        $region114: #{tpu_custom_call.1} parent=71 // pred_check_branch
          %585 = sbr.rel (%p583) target = $region116
        $region115: #{tpu_custom_call.1} parent=71 // pred_region
          %586 = dma.done [#allocation18], 512
        $region116: #{tpu_custom_call.1} parent=71 // pred_fallthru
          _
        // Predicated region
        $region117: #{tpu_custom_call.1} parent=71 // pred_check
          %p587 = pneg %p295
        $region118: #{tpu_custom_call.1} parent=71 // pred_check_branch
          %589 = sbr.rel (%p587) target = $region120
        $region119: #{tpu_custom_call.1} parent=71 // pred_region
          %590 = dma.done [#allocation21], 16
        $region120: #{tpu_custom_call.1} parent=71 // pred_fallthru
          _
        // Predicated region
        $region121: #{tpu_custom_call.1} parent=71 // pred_check
          %p591 = pneg %p316
        $region122: #{tpu_custom_call.1} parent=71 // pred_check_branch
          %593 = sbr.rel (%p591) target = $region124
        $region123: #{tpu_custom_call.1} parent=71 // pred_region
          %594 = dma.done [#allocation21], 32
        $region124: #{tpu_custom_call.1} parent=71 // pred_fallthru
          _
        %s595 = sand.u32 %s46, 1
        %s596 = scalar_lea.sflag [#allocation3], %s595
        %s597 = sand.u32 %s46, 1
        %s598 = smul.addr %s597, 4
        %s599 = scalar_lea.vmem [#allocation2], %s598
        %p600 = pneg %p59
        %p601 = pneg %p56
        %s602 = sand.u32 %s38, 1
        %s603 = scalar_lea.sflag [#allocation6], %s602
        %s604 = sand.u32 %s72, 1
        %s605 = scalar_lea.vmem [#allocation5], %s604
        %p606 = pneg %p85
        %p607 = pneg %p82
        %p608 = pneg %p106
        %p609 = pneg %p103
        %p610 = pneg %p127
        %p611 = pneg %p124
        %p612 = pneg %p148
        %p613 = pneg %p145
        %p614 = pneg %p169
        %p615 = pneg %p166
        %p616 = pneg %p190
        %p617 = pneg %p187
        %p618 = pneg %p211
        %p619 = pneg %p208
        %p620 = pneg %p232
        %p621 = pneg %p229
        %p622 = pneg %p253
        %p623 = pneg %p250
        %p624 = pneg %p274
        %p625 = pneg %p271
        %p626 = pneg %p295
        %p627 = pneg %p292
        %p628 = pneg %p316
        %p629 = pneg %p313
        %p630 = pneg %p342
        %p631 = pneg %p339
        %s632 = sand.u32 %s329, 1
        %s633 = scalar_lea.sflag [#allocation4], %s632
        %s634 = sand.u32 %s329, 1
        %s635 = smul.addr %s634, 8
        %s636 = scalar_lea.vmem [#allocation23], %s635
        %v638 = vld [vmem:[%s538] sm:$0xf]
        %v639 = vunpack.c.l.bf16 %v638
        %v640 = vmul.f32 %v639, 5.656854
        %v641 = vld [vmem:[#allocation7] sm:$0xff]
        %v642 = vld [vmem:[%s546] sm:$0x1]
        %v643 = vld [vmem:[#allocation13] sm:$0x1]
        %v644 = vld [vmem:[#allocation13 + $0x1] sm:$0x1]
        %v645 = vld [vmem:[#allocation14] sm:$0x1]
        %v646 = vld [vmem:[#allocation14 + $0x1] sm:$0x1]
        %v647 = vld [vmem:[#allocation20] sm:$0x1]
        loop: start=0, step=1, limit=3
        $region125: #{tpu_custom_call.1} parent=71 // loop_pre_header
          _
        $region126: #{tpu_custom_call.1} parent=71 // loop_header
          %s649 = sphi 0, %s653
          %p650 = scmp.ge.s32.totalorder %s649, 3
          %v654 = vphi %v640, %v1489
        $region127: #{tpu_custom_call.1} parent=71 // loop_header_branch
          %652 = sbr.rel (%p650) target = $region131
        $region128: #{tpu_custom_call.1} parent=71 // loop_body
          %v655 = vadd.f32 %v654, %v641
          %s656 = scalar_lea.vmem [#allocation8], %s649
          %v657 = vld [vmem:[%s656] sm:$0x1]
          %v659 = vlaneseq
          %v660 = vshrl.u32 %v659, 7
          %v661 = vsub.s32 0, %v660
          %v662 = vrot.slane %v657, %v661
          %v664 = vadd.f32 %v655, %v662
          %vm665 = vcmask 261120
          %v666 = vsel %vm665, %v664, 0.0
          %667 = vadd.xlane.f32.xlu0 %v666
          %v668 = vpop.xlane.xlu0 %667
          %v669 = vrcp.pop 32.0
          %v670 = vmul.f32 %v668, %v669
          %v671 = vsub.f32 %v664, %v670
          %v672 = vmul.f32 %v671, %v671
          %v673 = vsel %vm665, %v672, 0.0
          %674 = vadd.xlane.f32.xlu0 %v673
          %v675 = vpop.xlane.xlu0 %674
          %v676 = vmul.f32 %v675, %v669
          %v677 = vadd.f32 %v676, 1e-05
          %v678 = vrsqrt.pop %v677
          %v679 = vmul.f32 %v671, %v678
          %v680 = vlaneseq
          %v681 = vshrl.u32 %v680, 7
          %v682 = vsub.s32 0, %v681
          %v683 = vrot.slane %v643, %v682
          %v684 = vmul.f32 %v679, %v683
          %v685 = vlaneseq
          %v686 = vshrl.u32 %v685, 7
          %v687 = vsub.s32 0, %v686
          %v688 = vrot.slane %v644, %v687
          %v689 = vadd.f32 %v684, %v688
          %v690 = vpack.c.bf16 %v689, %v689
          %v691 = vld [vmem:[#allocation10] sm:$0xf]
          %v692 = vld [vmem:[#allocation10 + $0x4] sm:$0xf]
          %v693 = vld [vmem:[#allocation10 + $0x8] sm:$0xf]
          %v694 = vld [vmem:[#allocation10 + $0xc] sm:$0xf]
          %v699 = vunpack.c.l.b16 %v691
          %v700 = vunpack.c.l.b16 %v692
          %v701 = vunpack.c.l.b16 %v693
          %v702 = vunpack.c.l.b16 %v694
          %v703 = vpack.c.b16 %v700, %v699
          %v704 = vpack.c.b16 %v702, %v701
          %v708 = vsel %vm665, %v690, 0
          %710 = vmatprep.subr.bf16.mxu0 0
          %711 = vmatpush1.bf16.msra.mxu0 %v703
          %712 = vmatprep.subr.bf16.mxu0 0
          %713 = vmatpush1.bf16.msra.mxu0 %v704
          %714 = vmatprep.subr.bf16.mxu0 0
          %715 = vmatpush1.bf16.msra.mxu0 0
          %716 = vmatprep.subr.bf16.mxu0 0
          %717 = vmatpush1.bf16.msra.mxu0 0
          %718 = vmatprep.subr.bf16.mxu0 0
          %719 = vmatpush1.bf16.msra.mxu0 0
          %720 = vmatprep.subr.bf16.mxu0 0
          %721 = vmatpush1.bf16.msra.mxu0 0
          %722 = vmatprep.subr.bf16.mxu0 0
          %723 = vmatpush1.bf16.msra.mxu0 0
          %724 = vmatprep.subr.bf16.mxu0 0
          %725 = vmatpush1.bf16.msra.mxu0 0
          %726 = vmatprep.subr.bf16.mxu0 0
          %727 = vmatpush1.bf16.msra.mxu0 0
          %728 = vmatprep.subr.bf16.mxu0 0
          %729 = vmatpush1.bf16.msra.mxu0 0
          %730 = vmatprep.subr.bf16.mxu0 0
          %731 = vmatpush1.bf16.msra.mxu0 0
          %732 = vmatprep.subr.bf16.mxu0 0
          %733 = vmatpush1.bf16.msra.mxu0 0
          %734 = vmatprep.subr.bf16.mxu0 0
          %735 = vmatpush1.bf16.msra.mxu0 0
          %736 = vmatprep.subr.bf16.mxu0 0
          %737 = vmatpush1.bf16.msra.mxu0 0
          %738 = vmatprep.subr.bf16.mxu0 0
          %739 = vmatpush1.bf16.msra.mxu0 0
          %740 = vmatprep.subr.bf16.mxu0 0
          %741 = vmatpush1.bf16.msra.mxu0 0
          %742 = vmatprep.mubr.bf16.mxu0 0
          %743 = vmatmul.mubr.bf16.gmra.mrb[0].mxu0 %v708
          %v744 = vpop.f32.mrb[0].mxu0
          %v745 = vadd.f32 0.0, %v744
          %v746 = vpop.f32.mrb[0].mxu0
          %v747 = vpop.f32.mrb[0].mxu0
          %v748 = vpop.f32.mrb[0].mxu0
          %749 = vdwg.mxu0
          %751 = vrot.lane.b32.xlu0 %v745, 120
          %v752 = vpop.permute.xlu0 %751
          %754 = vrot.lane.b32.xlu0 %v745, 112
          %v755 = vpop.permute.xlu0 %754
          %757 = vrot.lane.b32.xlu0 %v745, 104
          %v758 = vpop.permute.xlu0 %757
          %v760 = vpack.c.bf16 %v745, %v745
          %v761 = vpack.c.bf16 %v752, %v752
          %v762 = vpack.c.bf16 %v755, %v755
          %v763 = vpack.c.bf16 %v758, %v758
          %v765 = vlaneseq
          %v766 = vshrl.u32 %v765, 7
          %v767 = vsub.s32 0, %v766
          %v768 = vrot.slane %v642, %v767
          %771 = vrot.lane.b32.xlu0 %v760, 96
          %v772 = vpop.permute.xlu0 %771
          %vm773 = vcmask 64512
          %v775 = vsel %vm773, %v760, 0
          %v778 = vsel %vm773, %v772, 0
          %780 = vmatprep.subr.bf16.mxu0 0
          %781 = vmatpush1.bf16.xpose.msra.mxu0 %v778
          %782 = vmatprep.subr.bf16.mxu0 0
          %783 = vmatpush1.bf16.xpose.msra.mxu0 0
          %784 = vmatprep.subr.bf16.mxu0 0
          %785 = vmatpush1.bf16.xpose.msra.mxu0 0
          %786 = vmatprep.subr.bf16.mxu0 0
          %787 = vmatpush1.bf16.xpose.msra.mxu0 0
          %788 = vmatprep.subr.bf16.mxu0 0
          %789 = vmatpush1.bf16.xpose.msra.mxu0 0
          %790 = vmatprep.subr.bf16.mxu0 0
          %791 = vmatpush1.bf16.xpose.msra.mxu0 0
          %792 = vmatprep.subr.bf16.mxu0 0
          %793 = vmatpush1.bf16.xpose.msra.mxu0 0
          %794 = vmatprep.subr.bf16.mxu0 0
          %795 = vmatpush1.bf16.xpose.msra.mxu0 0
          %796 = vmatprep.subr.bf16.mxu0 0
          %797 = vmatpush1.bf16.xpose.msra.mxu0 0
          %798 = vmatprep.subr.bf16.mxu0 0
          %799 = vmatpush1.bf16.xpose.msra.mxu0 0
          %800 = vmatprep.subr.bf16.mxu0 0
          %801 = vmatpush1.bf16.xpose.msra.mxu0 0
          %802 = vmatprep.subr.bf16.mxu0 0
          %803 = vmatpush1.bf16.xpose.msra.mxu0 0
          %804 = vmatprep.subr.bf16.mxu0 0
          %805 = vmatpush1.bf16.xpose.msra.mxu0 0
          %806 = vmatprep.subr.bf16.mxu0 0
          %807 = vmatpush1.bf16.xpose.msra.mxu0 0
          %808 = vmatprep.subr.bf16.mxu0 0
          %809 = vmatpush1.bf16.xpose.msra.mxu0 0
          %810 = vmatprep.subr.bf16.mxu0 0
          %811 = vmatpush1.bf16.xpose.msra.mxu0 0
          %812 = vmatprep.mubr.bf16.mxu0 0
          %813 = vmatmul.mubr.bf16.gmra.mrb[0].mxu0 %v775
          %v814 = vpop.f32.mrb[0].mxu0
          %v815 = vadd.f32 %v768, %v814
          %v816 = vpop.f32.mrb[0].mxu0
          %v817 = vpop.f32.mrb[0].mxu0
          %v818 = vpop.f32.mrb[0].mxu0
          %819 = vdwg.mxu0
          %821 = vrot.lane.b32.xlu0 %v761, 96
          %v822 = vpop.permute.xlu0 %821
          %v824 = vsel %vm773, %v761, 0
          %v827 = vsel %vm773, %v822, 0
          %829 = vmatprep.subr.bf16.mxu0 0
          %830 = vmatpush1.bf16.xpose.msra.mxu0 %v827
          %831 = vmatprep.subr.bf16.mxu0 0
          %832 = vmatpush1.bf16.xpose.msra.mxu0 0
          %833 = vmatprep.subr.bf16.mxu0 0
          %834 = vmatpush1.bf16.xpose.msra.mxu0 0
          %835 = vmatprep.subr.bf16.mxu0 0
          %836 = vmatpush1.bf16.xpose.msra.mxu0 0
          %837 = vmatprep.subr.bf16.mxu0 0
          %838 = vmatpush1.bf16.xpose.msra.mxu0 0
          %839 = vmatprep.subr.bf16.mxu0 0
          %840 = vmatpush1.bf16.xpose.msra.mxu0 0
          %841 = vmatprep.subr.bf16.mxu0 0
          %842 = vmatpush1.bf16.xpose.msra.mxu0 0
          %843 = vmatprep.subr.bf16.mxu0 0
          %844 = vmatpush1.bf16.xpose.msra.mxu0 0
          %845 = vmatprep.subr.bf16.mxu0 0
          %846 = vmatpush1.bf16.xpose.msra.mxu0 0
          %847 = vmatprep.subr.bf16.mxu0 0
          %848 = vmatpush1.bf16.xpose.msra.mxu0 0
          %849 = vmatprep.subr.bf16.mxu0 0
          %850 = vmatpush1.bf16.xpose.msra.mxu0 0
          %851 = vmatprep.subr.bf16.mxu0 0
          %852 = vmatpush1.bf16.xpose.msra.mxu0 0
          %853 = vmatprep.subr.bf16.mxu0 0
          %854 = vmatpush1.bf16.xpose.msra.mxu0 0
          %855 = vmatprep.subr.bf16.mxu0 0
          %856 = vmatpush1.bf16.xpose.msra.mxu0 0
          %857 = vmatprep.subr.bf16.mxu0 0
          %858 = vmatpush1.bf16.xpose.msra.mxu0 0
          %859 = vmatprep.subr.bf16.mxu0 0
          %860 = vmatpush1.bf16.xpose.msra.mxu0 0
          %861 = vmatprep.mubr.bf16.mxu0 0
          %862 = vmatmul.mubr.bf16.gmra.mrb[0].mxu0 %v824
          %v863 = vpop.f32.mrb[0].mxu0
          %v864 = vadd.f32 %v768, %v863
          %v865 = vpop.f32.mrb[0].mxu0
          %v866 = vpop.f32.mrb[0].mxu0
          %v867 = vpop.f32.mrb[0].mxu0
          %868 = vdwg.mxu0
          %870 = vrot.lane.b32.xlu0 %v762, 96
          %v871 = vpop.permute.xlu0 %870
          %v873 = vsel %vm773, %v762, 0
          %v876 = vsel %vm773, %v871, 0
          %878 = vmatprep.subr.bf16.mxu0 0
          %879 = vmatpush1.bf16.xpose.msra.mxu0 %v876
          %880 = vmatprep.subr.bf16.mxu0 0
          %881 = vmatpush1.bf16.xpose.msra.mxu0 0
          %882 = vmatprep.subr.bf16.mxu0 0
          %883 = vmatpush1.bf16.xpose.msra.mxu0 0
          %884 = vmatprep.subr.bf16.mxu0 0
          %885 = vmatpush1.bf16.xpose.msra.mxu0 0
          %886 = vmatprep.subr.bf16.mxu0 0
          %887 = vmatpush1.bf16.xpose.msra.mxu0 0
          %888 = vmatprep.subr.bf16.mxu0 0
          %889 = vmatpush1.bf16.xpose.msra.mxu0 0
          %890 = vmatprep.subr.bf16.mxu0 0
          %891 = vmatpush1.bf16.xpose.msra.mxu0 0
          %892 = vmatprep.subr.bf16.mxu0 0
          %893 = vmatpush1.bf16.xpose.msra.mxu0 0
          %894 = vmatprep.subr.bf16.mxu0 0
          %895 = vmatpush1.bf16.xpose.msra.mxu0 0
          %896 = vmatprep.subr.bf16.mxu0 0
          %897 = vmatpush1.bf16.xpose.msra.mxu0 0
          %898 = vmatprep.subr.bf16.mxu0 0
          %899 = vmatpush1.bf16.xpose.msra.mxu0 0
          %900 = vmatprep.subr.bf16.mxu0 0
          %901 = vmatpush1.bf16.xpose.msra.mxu0 0
          %902 = vmatprep.subr.bf16.mxu0 0
          %903 = vmatpush1.bf16.xpose.msra.mxu0 0
          %904 = vmatprep.subr.bf16.mxu0 0
          %905 = vmatpush1.bf16.xpose.msra.mxu0 0
          %906 = vmatprep.subr.bf16.mxu0 0
          %907 = vmatpush1.bf16.xpose.msra.mxu0 0
          %908 = vmatprep.subr.bf16.mxu0 0
          %909 = vmatpush1.bf16.xpose.msra.mxu0 0
          %910 = vmatprep.mubr.bf16.mxu0 0
          %911 = vmatmul.mubr.bf16.gmra.mrb[0].mxu0 %v873
          %v912 = vpop.f32.mrb[0].mxu0
          %v913 = vadd.f32 %v768, %v912
          %v914 = vpop.f32.mrb[0].mxu0
          %v915 = vpop.f32.mrb[0].mxu0
          %v916 = vpop.f32.mrb[0].mxu0
          %917 = vdwg.mxu0
          %919 = vrot.lane.b32.xlu0 %v763, 96
          %v920 = vpop.permute.xlu0 %919
          %v922 = vsel %vm773, %v763, 0
          %v925 = vsel %vm773, %v920, 0
          %927 = vmatprep.subr.bf16.mxu0 0
          %928 = vmatpush1.bf16.xpose.msra.mxu0 %v925
          %929 = vmatprep.subr.bf16.mxu0 0
          %930 = vmatpush1.bf16.xpose.msra.mxu0 0
          %931 = vmatprep.subr.bf16.mxu0 0
          %932 = vmatpush1.bf16.xpose.msra.mxu0 0
          %933 = vmatprep.subr.bf16.mxu0 0
          %934 = vmatpush1.bf16.xpose.msra.mxu0 0
          %935 = vmatprep.subr.bf16.mxu0 0
          %936 = vmatpush1.bf16.xpose.msra.mxu0 0
          %937 = vmatprep.subr.bf16.mxu0 0
          %938 = vmatpush1.bf16.xpose.msra.mxu0 0
          %939 = vmatprep.subr.bf16.mxu0 0
          %940 = vmatpush1.bf16.xpose.msra.mxu0 0
          %941 = vmatprep.subr.bf16.mxu0 0
          %942 = vmatpush1.bf16.xpose.msra.mxu0 0
          %943 = vmatprep.subr.bf16.mxu0 0
          %944 = vmatpush1.bf16.xpose.msra.mxu0 0
          %945 = vmatprep.subr.bf16.mxu0 0
          %946 = vmatpush1.bf16.xpose.msra.mxu0 0
          %947 = vmatprep.subr.bf16.mxu0 0
          %948 = vmatpush1.bf16.xpose.msra.mxu0 0
          %949 = vmatprep.subr.bf16.mxu0 0
          %950 = vmatpush1.bf16.xpose.msra.mxu0 0
          %951 = vmatprep.subr.bf16.mxu0 0
          %952 = vmatpush1.bf16.xpose.msra.mxu0 0
          %953 = vmatprep.subr.bf16.mxu0 0
          %954 = vmatpush1.bf16.xpose.msra.mxu0 0
          %955 = vmatprep.subr.bf16.mxu0 0
          %956 = vmatpush1.bf16.xpose.msra.mxu0 0
          %957 = vmatprep.subr.bf16.mxu0 0
          %958 = vmatpush1.bf16.xpose.msra.mxu0 0
          %959 = vmatprep.mubr.bf16.mxu0 0
          %960 = vmatmul.mubr.bf16.gmra.mrb[0].mxu0 %v922
          %v961 = vpop.f32.mrb[0].mxu0
          %v962 = vadd.f32 %v768, %v961
          %v963 = vpop.f32.mrb[0].mxu0
          %v964 = vpop.f32.mrb[0].mxu0
          %v965 = vpop.f32.mrb[0].mxu0
          %966 = vdwg.mxu0
          %v967 = vsel %vm773, %v815, -inf
          %968 = vmax.xlane.f32.xlu0 %v967
          %v969 = vpop.xlane.xlu0 %968
          %v970 = vsel %vm773, %v864, -inf
          %971 = vmax.xlane.f32.xlu0 %v970
          %v972 = vpop.xlane.xlu0 %971
          %v973 = vsel %vm773, %v913, -inf
          %974 = vmax.xlane.f32.xlu0 %v973
          %v975 = vpop.xlane.xlu0 %974
          %v976 = vsel %vm773, %v962, -inf
          %977 = vmax.xlane.f32.xlu0 %v976
          %v978 = vpop.xlane.xlu0 %977
          %v979 = vmax.f32 %v969, -1e+30
          %v980 = vmax.f32 %v972, -1e+30
          %v981 = vmax.f32 %v975, -1e+30
          %v982 = vmax.f32 %v978, -1e+30
          %v983 = vsub.f32 -1e+30, %v979
          %v984 = vsub.f32 -1e+30, %v980
          %v985 = vsub.f32 -1e+30, %v981
          %v986 = vsub.f32 -1e+30, %v982
          %v987 = vmul.f32 %v983, 1.442695
          %v988 = vpow.pop %v987
          %v989 = vmul.f32 %v984, 1.442695
          %v990 = vpow.pop %v989
          %v991 = vmul.f32 %v985, 1.442695
          %v992 = vpow.pop %v991
          %v993 = vmul.f32 %v986, 1.442695
          %v994 = vpow.pop %v993
          %v995 = vsub.f32 %v815, %v979
          %v996 = vsub.f32 %v864, %v980
          %v997 = vsub.f32 %v913, %v981
          %v998 = vsub.f32 %v962, %v982
          %v999 = vmul.f32 %v995, 1.442695
          %v1000 = vpow.pop %v999
          %v1001 = vmul.f32 %v996, 1.442695
          %v1002 = vpow.pop %v1001
          %v1003 = vmul.f32 %v997, 1.442695
          %v1004 = vpow.pop %v1003
          %v1005 = vmul.f32 %v998, 1.442695
          %v1006 = vpow.pop %v1005
          %v1007 = vmul.f32 %v988, 0.0
          %v1008 = vmul.f32 %v990, 0.0
          %v1009 = vmul.f32 %v992, 0.0
          %v1010 = vmul.f32 %v994, 0.0
          %v1011 = vsel %vm773, %v1000, 0.0
          %1012 = vadd.xlane.f32.xlu0 %v1011
          %v1013 = vpop.xlane.xlu0 %1012
          %v1014 = vsel %vm773, %v1002, 0.0
          %1015 = vadd.xlane.f32.xlu0 %v1014
          %v1016 = vpop.xlane.xlu0 %1015
          %v1017 = vsel %vm773, %v1004, 0.0
          %1018 = vadd.xlane.f32.xlu0 %v1017
          %v1019 = vpop.xlane.xlu0 %1018
          %v1020 = vsel %vm773, %v1006, 0.0
          %1021 = vadd.xlane.f32.xlu0 %v1020
          %v1022 = vpop.xlane.xlu0 %1021
          %v1023 = vadd.f32 %v1007, %v1013
          %v1024 = vadd.f32 %v1008, %v1016
          %v1025 = vadd.f32 %v1009, %v1019
          %v1026 = vadd.f32 %v1010, %v1022
          %v1027 = vpack.c.bf16 %v1000, %v1000
          %v1028 = vpack.c.bf16 %v1002, %v1002
          %v1029 = vpack.c.bf16 %v1004, %v1004
          %v1030 = vpack.c.bf16 %v1006, %v1006
          %1031 = vrot.lane.b32.xlu0 %v760, 64
          %v1032 = vpop.permute.xlu0 %1031
          %v1034 = vsel %vm773, %v1027, 0
          %vm1036 = vcmask 1043456
          %v1038 = vsel %vm1036, %v1032, 0
          %1040 = vmatprep.subr.bf16.mxu0 0
          %1041 = vmatpush1.bf16.msra.mxu0 %v1038
          %1042 = vmatprep.subr.bf16.mxu0 0
          %1043 = vmatpush1.bf16.msra.mxu0 0
          %1044 = vmatprep.subr.bf16.mxu0 0
          %1045 = vmatpush1.bf16.msra.mxu0 0
          %1046 = vmatprep.subr.bf16.mxu0 0
          %1047 = vmatpush1.bf16.msra.mxu0 0
          %1048 = vmatprep.subr.bf16.mxu0 0
          %1049 = vmatpush1.bf16.msra.mxu0 0
          %1050 = vmatprep.subr.bf16.mxu0 0
          %1051 = vmatpush1.bf16.msra.mxu0 0
          %1052 = vmatprep.subr.bf16.mxu0 0
          %1053 = vmatpush1.bf16.msra.mxu0 0
          %1054 = vmatprep.subr.bf16.mxu0 0
          %1055 = vmatpush1.bf16.msra.mxu0 0
          %1056 = vmatprep.subr.bf16.mxu0 0
          %1057 = vmatpush1.bf16.msra.mxu0 0
          %1058 = vmatprep.subr.bf16.mxu0 0
          %1059 = vmatpush1.bf16.msra.mxu0 0
          %1060 = vmatprep.subr.bf16.mxu0 0
          %1061 = vmatpush1.bf16.msra.mxu0 0
          %1062 = vmatprep.subr.bf16.mxu0 0
          %1063 = vmatpush1.bf16.msra.mxu0 0
          %1064 = vmatprep.subr.bf16.mxu0 0
          %1065 = vmatpush1.bf16.msra.mxu0 0
          %1066 = vmatprep.subr.bf16.mxu0 0
          %1067 = vmatpush1.bf16.msra.mxu0 0
          %1068 = vmatprep.subr.bf16.mxu0 0
          %1069 = vmatpush1.bf16.msra.mxu0 0
          %1070 = vmatprep.subr.bf16.mxu0 0
          %1071 = vmatpush1.bf16.msra.mxu0 0
          %1072 = vmatprep.mubr.bf16.mxu0 0
          %1073 = vmatmul.mubr.bf16.gmra.mrb[0].mxu0 %v1034
          %v1074 = vpop.f32.mrb[0].mxu0
          %v1075 = vadd.f32 0.0, %v1074
          %v1076 = vpop.f32.mrb[0].mxu0
          %v1077 = vpop.f32.mrb[0].mxu0
          %v1078 = vpop.f32.mrb[0].mxu0
          %1079 = vdwg.mxu0
          %1080 = vrot.lane.b32.xlu0 %v761, 64
          %v1081 = vpop.permute.xlu0 %1080
          %v1083 = vsel %vm773, %v1028, 0
          %v1086 = vsel %vm1036, %v1081, 0
          %1088 = vmatprep.subr.bf16.mxu0 0
          %1089 = vmatpush1.bf16.msra.mxu0 %v1086
          %1090 = vmatprep.subr.bf16.mxu0 0
          %1091 = vmatpush1.bf16.msra.mxu0 0
          %1092 = vmatprep.subr.bf16.mxu0 0
          %1093 = vmatpush1.bf16.msra.mxu0 0
          %1094 = vmatprep.subr.bf16.mxu0 0
          %1095 = vmatpush1.bf16.msra.mxu0 0
          %1096 = vmatprep.subr.bf16.mxu0 0
          %1097 = vmatpush1.bf16.msra.mxu0 0
          %1098 = vmatprep.subr.bf16.mxu0 0
          %1099 = vmatpush1.bf16.msra.mxu0 0
          %1100 = vmatprep.subr.bf16.mxu0 0
          %1101 = vmatpush1.bf16.msra.mxu0 0
          %1102 = vmatprep.subr.bf16.mxu0 0
          %1103 = vmatpush1.bf16.msra.mxu0 0
          %1104 = vmatprep.subr.bf16.mxu0 0
          %1105 = vmatpush1.bf16.msra.mxu0 0
          %1106 = vmatprep.subr.bf16.mxu0 0
          %1107 = vmatpush1.bf16.msra.mxu0 0
          %1108 = vmatprep.subr.bf16.mxu0 0
          %1109 = vmatpush1.bf16.msra.mxu0 0
          %1110 = vmatprep.subr.bf16.mxu0 0
          %1111 = vmatpush1.bf16.msra.mxu0 0
          %1112 = vmatprep.subr.bf16.mxu0 0
          %1113 = vmatpush1.bf16.msra.mxu0 0
          %1114 = vmatprep.subr.bf16.mxu0 0
          %1115 = vmatpush1.bf16.msra.mxu0 0
          %1116 = vmatprep.subr.bf16.mxu0 0
          %1117 = vmatpush1.bf16.msra.mxu0 0
          %1118 = vmatprep.subr.bf16.mxu0 0
          %1119 = vmatpush1.bf16.msra.mxu0 0
          %1120 = vmatprep.mubr.bf16.mxu0 0
          %1121 = vmatmul.mubr.bf16.gmra.mrb[0].mxu0 %v1083
          %v1122 = vpop.f32.mrb[0].mxu0
          %v1123 = vadd.f32 0.0, %v1122
          %v1124 = vpop.f32.mrb[0].mxu0
          %v1125 = vpop.f32.mrb[0].mxu0
          %v1126 = vpop.f32.mrb[0].mxu0
          %1127 = vdwg.mxu0
          %1128 = vrot.lane.b32.xlu0 %v762, 64
          %v1129 = vpop.permute.xlu0 %1128
          %v1131 = vsel %vm773, %v1029, 0
          %v1134 = vsel %vm1036, %v1129, 0
          %1136 = vmatprep.subr.bf16.mxu0 0
          %1137 = vmatpush1.bf16.msra.mxu0 %v1134
          %1138 = vmatprep.subr.bf16.mxu0 0
          %1139 = vmatpush1.bf16.msra.mxu0 0
          %1140 = vmatprep.subr.bf16.mxu0 0
          %1141 = vmatpush1.bf16.msra.mxu0 0
          %1142 = vmatprep.subr.bf16.mxu0 0
          %1143 = vmatpush1.bf16.msra.mxu0 0
          %1144 = vmatprep.subr.bf16.mxu0 0
          %1145 = vmatpush1.bf16.msra.mxu0 0
          %1146 = vmatprep.subr.bf16.mxu0 0
          %1147 = vmatpush1.bf16.msra.mxu0 0
          %1148 = vmatprep.subr.bf16.mxu0 0
          %1149 = vmatpush1.bf16.msra.mxu0 0
          %1150 = vmatprep.subr.bf16.mxu0 0
          %1151 = vmatpush1.bf16.msra.mxu0 0
          %1152 = vmatprep.subr.bf16.mxu0 0
          %1153 = vmatpush1.bf16.msra.mxu0 0
          %1154 = vmatprep.subr.bf16.mxu0 0
          %1155 = vmatpush1.bf16.msra.mxu0 0
          %1156 = vmatprep.subr.bf16.mxu0 0
          %1157 = vmatpush1.bf16.msra.mxu0 0
          %1158 = vmatprep.subr.bf16.mxu0 0
          %1159 = vmatpush1.bf16.msra.mxu0 0
          %1160 = vmatprep.subr.bf16.mxu0 0
          %1161 = vmatpush1.bf16.msra.mxu0 0
          %1162 = vmatprep.subr.bf16.mxu0 0
          %1163 = vmatpush1.bf16.msra.mxu0 0
          %1164 = vmatprep.subr.bf16.mxu0 0
          %1165 = vmatpush1.bf16.msra.mxu0 0
          %1166 = vmatprep.subr.bf16.mxu0 0
          %1167 = vmatpush1.bf16.msra.mxu0 0
          %1168 = vmatprep.mubr.bf16.mxu0 0
          %1169 = vmatmul.mubr.bf16.gmra.mrb[0].mxu0 %v1131
          %v1170 = vpop.f32.mrb[0].mxu0
          %v1171 = vadd.f32 0.0, %v1170
          %v1172 = vpop.f32.mrb[0].mxu0
          %v1173 = vpop.f32.mrb[0].mxu0
          %v1174 = vpop.f32.mrb[0].mxu0
          %1175 = vdwg.mxu0
          %1176 = vrot.lane.b32.xlu0 %v763, 64
          %v1177 = vpop.permute.xlu0 %1176
          %v1179 = vsel %vm773, %v1030, 0
          %v1182 = vsel %vm1036, %v1177, 0
          %1184 = vmatprep.subr.bf16.mxu0 0
          %1185 = vmatpush1.bf16.msra.mxu0 %v1182
          %1186 = vmatprep.subr.bf16.mxu0 0
          %1187 = vmatpush1.bf16.msra.mxu0 0
          %1188 = vmatprep.subr.bf16.mxu0 0
          %1189 = vmatpush1.bf16.msra.mxu0 0
          %1190 = vmatprep.subr.bf16.mxu0 0
          %1191 = vmatpush1.bf16.msra.mxu0 0
          %1192 = vmatprep.subr.bf16.mxu0 0
          %1193 = vmatpush1.bf16.msra.mxu0 0
          %1194 = vmatprep.subr.bf16.mxu0 0
          %1195 = vmatpush1.bf16.msra.mxu0 0
          %1196 = vmatprep.subr.bf16.mxu0 0
          %1197 = vmatpush1.bf16.msra.mxu0 0
          %1198 = vmatprep.subr.bf16.mxu0 0
          %1199 = vmatpush1.bf16.msra.mxu0 0
          %1200 = vmatprep.subr.bf16.mxu0 0
          %1201 = vmatpush1.bf16.msra.mxu0 0
          %1202 = vmatprep.subr.bf16.mxu0 0
          %1203 = vmatpush1.bf16.msra.mxu0 0
          %1204 = vmatprep.subr.bf16.mxu0 0
          %1205 = vmatpush1.bf16.msra.mxu0 0
          %1206 = vmatprep.subr.bf16.mxu0 0
          %1207 = vmatpush1.bf16.msra.mxu0 0
          %1208 = vmatprep.subr.bf16.mxu0 0
          %1209 = vmatpush1.bf16.msra.mxu0 0
          %1210 = vmatprep.subr.bf16.mxu0 0
          %1211 = vmatpush1.bf16.msra.mxu0 0
          %1212 = vmatprep.subr.bf16.mxu0 0
          %1213 = vmatpush1.bf16.msra.mxu0 0
          %1214 = vmatprep.subr.bf16.mxu0 0
          %1215 = vmatpush1.bf16.msra.mxu0 0
          %1216 = vmatprep.mubr.bf16.mxu0 0
          %1217 = vmatmul.mubr.bf16.gmra.mrb[0].mxu0 %v1179
          %v1218 = vpop.f32.mrb[0].mxu0
          %v1219 = vadd.f32 0.0, %v1218
          %v1220 = vpop.f32.mrb[0].mxu0
          %v1221 = vpop.f32.mrb[0].mxu0
          %v1222 = vpop.f32.mrb[0].mxu0
          %1223 = vdwg.mxu0
          %v1224 = vadd.f32 %v1007, %v1075
          %v1225 = vadd.f32 %v1008, %v1123
          %v1226 = vadd.f32 %v1009, %v1171
          %v1227 = vadd.f32 %v1010, %v1219
          %v1228 = vrcp.pop %v1023
          %v1229 = vrcp.pop %v1024
          %v1230 = vrcp.pop %v1025
          %v1231 = vrcp.pop %v1026
          %v1232 = vmul.f32 %v1224, %v1228
          %v1233 = vmul.f32 %v1225, %v1229
          %v1234 = vmul.f32 %v1226, %v1230
          %v1235 = vmul.f32 %v1227, %v1231
          %1237 = vrot.lane.b32.xlu0 %v1233, 8
          %v1238 = vpop.permute.xlu0 %1237
          %1241 = vrot.lane.b32.xlu0 %v1234, 16
          %v1242 = vpop.permute.xlu0 %1241
          %1245 = vrot.lane.b32.xlu0 %v1235, 24
          %v1246 = vpop.permute.xlu0 %1245
          %v1248 = vsel %vm773, %v1232, %v1238
          %vm1249 = vcmask 130048
          %v1250 = vsel %vm1249, %v1248, %v1242
          %vm1251 = vcmask 195584
          %v1252 = vsel %vm1251, %v1250, %v1246
          %v1253 = vpack.c.bf16 %v1252, %v1252
          %v1254 = vld [vmem:[#allocation11] sm:$0xf]
          %v1255 = vld [vmem:[#allocation11 + $0x4] sm:$0xf]
          %v1256 = vld [vmem:[#allocation11 + $0x8] sm:$0xf]
          %v1257 = vld [vmem:[#allocation11 + $0xc] sm:$0xf]
          %v1262 = vunpack.c.l.b16 %v1254
          %v1263 = vunpack.c.l.b16 %v1255
          %v1264 = vunpack.c.l.b16 %v1256
          %v1265 = vunpack.c.l.b16 %v1257
          %v1266 = vpack.c.b16 %v1263, %v1262
          %v1267 = vpack.c.b16 %v1265, %v1264
          %v1271 = vsel %vm665, %v1253, 0
          %1273 = vmatprep.subr.bf16.mxu0 0
          %1274 = vmatpush1.bf16.msra.mxu0 %v1266
          %1275 = vmatprep.subr.bf16.mxu0 0
          %1276 = vmatpush1.bf16.msra.mxu0 %v1267
          %1277 = vmatprep.subr.bf16.mxu0 0
          %1278 = vmatpush1.bf16.msra.mxu0 0
          %1279 = vmatprep.subr.bf16.mxu0 0
          %1280 = vmatpush1.bf16.msra.mxu0 0
          %1281 = vmatprep.subr.bf16.mxu0 0
          %1282 = vmatpush1.bf16.msra.mxu0 0
          %1283 = vmatprep.subr.bf16.mxu0 0
          %1284 = vmatpush1.bf16.msra.mxu0 0
          %1285 = vmatprep.subr.bf16.mxu0 0
          %1286 = vmatpush1.bf16.msra.mxu0 0
          %1287 = vmatprep.subr.bf16.mxu0 0
          %1288 = vmatpush1.bf16.msra.mxu0 0
          %1289 = vmatprep.subr.bf16.mxu0 0
          %1290 = vmatpush1.bf16.msra.mxu0 0
          %1291 = vmatprep.subr.bf16.mxu0 0
          %1292 = vmatpush1.bf16.msra.mxu0 0
          %1293 = vmatprep.subr.bf16.mxu0 0
          %1294 = vmatpush1.bf16.msra.mxu0 0
          %1295 = vmatprep.subr.bf16.mxu0 0
          %1296 = vmatpush1.bf16.msra.mxu0 0
          %1297 = vmatprep.subr.bf16.mxu0 0
          %1298 = vmatpush1.bf16.msra.mxu0 0
          %1299 = vmatprep.subr.bf16.mxu0 0
          %1300 = vmatpush1.bf16.msra.mxu0 0
          %1301 = vmatprep.subr.bf16.mxu0 0
          %1302 = vmatpush1.bf16.msra.mxu0 0
          %1303 = vmatprep.subr.bf16.mxu0 0
          %1304 = vmatpush1.bf16.msra.mxu0 0
          %1305 = vmatprep.mubr.bf16.mxu0 0
          %1306 = vmatmul.mubr.bf16.gmra.mrb[0].mxu0 %v1271
          %v1307 = vpop.f32.mrb[0].mxu0
          %v1308 = vadd.f32 0.0, %v1307
          %v1309 = vpop.f32.mrb[0].mxu0
          %v1310 = vpop.f32.mrb[0].mxu0
          %v1311 = vpop.f32.mrb[0].mxu0
          %1312 = vdwg.mxu0
          %v1313 = vadd.f32 %v664, %v1308
          %v1314 = vsel %vm665, %v1313, 0.0
          %1315 = vadd.xlane.f32.xlu0 %v1314
          %v1316 = vpop.xlane.xlu0 %1315
          %v1317 = vmul.f32 %v1316, %v669
          %v1318 = vsub.f32 %v1313, %v1317
          %v1319 = vmul.f32 %v1318, %v1318
          %v1320 = vsel %vm665, %v1319, 0.0
          %1321 = vadd.xlane.f32.xlu0 %v1320
          %v1322 = vpop.xlane.xlu0 %1321
          %v1323 = vmul.f32 %v1322, %v669
          %v1324 = vadd.f32 %v1323, 1e-05
          %v1325 = vrsqrt.pop %v1324
          %v1326 = vmul.f32 %v1318, %v1325
          %v1327 = vlaneseq
          %v1328 = vshrl.u32 %v1327, 7
          %v1329 = vsub.s32 0, %v1328
          %v1330 = vrot.slane %v645, %v1329
          %v1331 = vmul.f32 %v1326, %v1330
          %v1332 = vlaneseq
          %v1333 = vshrl.u32 %v1332, 7
          %v1334 = vsub.s32 0, %v1333
          %v1335 = vrot.slane %v646, %v1334
          %v1336 = vadd.f32 %v1331, %v1335
          %v1337 = vpack.c.bf16 %v1336, %v1336
          %v1338 = vld [vmem:[#allocation16] sm:$0xf]
          %v1339 = vld [vmem:[#allocation16 + $0x4] sm:$0xf]
          %v1340 = vld [vmem:[#allocation16 + $0x8] sm:$0xf]
          %v1341 = vld [vmem:[#allocation16 + $0xc] sm:$0xf]
          %v1342 = vld [vmem:[#allocation17] sm:$0x1]
          %v1344 = vlaneseq
          %v1345 = vshrl.u32 %v1344, 7
          %v1346 = vsub.s32 0, %v1345
          %v1347 = vrot.slane %v1342, %v1346
          %v1353 = vunpack.c.l.b16 %v1338
          %v1354 = vunpack.c.l.b16 %v1339
          %v1355 = vunpack.c.l.b16 %v1340
          %v1356 = vunpack.c.l.b16 %v1341
          %v1357 = vpack.c.b16 %v1354, %v1353
          %v1358 = vpack.c.b16 %v1356, %v1355
          %v1362 = vsel %vm665, %v1337, 0
          %1364 = vmatprep.subr.bf16.mxu0 0
          %1365 = vmatpush1.bf16.msra.mxu0 %v1357
          %1366 = vmatprep.subr.bf16.mxu0 0
          %1367 = vmatpush1.bf16.msra.mxu0 %v1358
          %1368 = vmatprep.subr.bf16.mxu0 0
          %1369 = vmatpush1.bf16.msra.mxu0 0
          %1370 = vmatprep.subr.bf16.mxu0 0
          %1371 = vmatpush1.bf16.msra.mxu0 0
          %1372 = vmatprep.subr.bf16.mxu0 0
          %1373 = vmatpush1.bf16.msra.mxu0 0
          %1374 = vmatprep.subr.bf16.mxu0 0
          %1375 = vmatpush1.bf16.msra.mxu0 0
          %1376 = vmatprep.subr.bf16.mxu0 0
          %1377 = vmatpush1.bf16.msra.mxu0 0
          %1378 = vmatprep.subr.bf16.mxu0 0
          %1379 = vmatpush1.bf16.msra.mxu0 0
          %1380 = vmatprep.subr.bf16.mxu0 0
          %1381 = vmatpush1.bf16.msra.mxu0 0
          %1382 = vmatprep.subr.bf16.mxu0 0
          %1383 = vmatpush1.bf16.msra.mxu0 0
          %1384 = vmatprep.subr.bf16.mxu0 0
          %1385 = vmatpush1.bf16.msra.mxu0 0
          %1386 = vmatprep.subr.bf16.mxu0 0
          %1387 = vmatpush1.bf16.msra.mxu0 0
          %1388 = vmatprep.subr.bf16.mxu0 0
          %1389 = vmatpush1.bf16.msra.mxu0 0
          %1390 = vmatprep.subr.bf16.mxu0 0
          %1391 = vmatpush1.bf16.msra.mxu0 0
          %1392 = vmatprep.subr.bf16.mxu0 0
          %1393 = vmatpush1.bf16.msra.mxu0 0
          %1394 = vmatprep.subr.bf16.mxu0 0
          %1395 = vmatpush1.bf16.msra.mxu0 0
          %1396 = vmatprep.mubr.bf16.mxu0 0
          %1397 = vmatmul.mubr.bf16.gmra.mrb[0].mxu0 %v1362
          %v1398 = vpop.f32.mrb[0].mxu0
          %v1399 = vadd.f32 %v1347, %v1398
          %v1400 = vpop.f32.mrb[0].mxu0
          %v1401 = vpop.f32.mrb[0].mxu0
          %v1402 = vpop.f32.mrb[0].mxu0
          %1403 = vdwg.mxu0
          %v1404 = vmax.f32 %v1399, 0.0
          %v1405 = vpack.c.bf16 %v1404, %v1404
          %v1406 = vld [vmem:[#allocation19] sm:$0xf]
          %v1407 = vld [vmem:[#allocation19 + $0x4] sm:$0xf]
          %v1408 = vld [vmem:[#allocation19 + $0x8] sm:$0xf]
          %v1409 = vld [vmem:[#allocation19 + $0xc] sm:$0xf]
          %v1410 = vld [vmem:[#allocation19 + $0x10] sm:$0xf]
          %v1411 = vld [vmem:[#allocation19 + $0x14] sm:$0xf]
          %v1412 = vld [vmem:[#allocation19 + $0x18] sm:$0xf]
          %v1413 = vld [vmem:[#allocation19 + $0x1c] sm:$0xf]
          %v1422 = vunpack.c.l.b16 %v1406
          %v1423 = vunpack.c.l.b16 %v1407
          %v1424 = vunpack.c.l.b16 %v1408
          %v1425 = vunpack.c.l.b16 %v1409
          %v1426 = vunpack.c.l.b16 %v1410
          %v1427 = vunpack.c.l.b16 %v1411
          %v1428 = vunpack.c.l.b16 %v1412
          %v1429 = vunpack.c.l.b16 %v1413
          %v1430 = vpack.c.b16 %v1423, %v1422
          %v1431 = vpack.c.b16 %v1425, %v1424
          %v1432 = vpack.c.b16 %v1427, %v1426
          %v1433 = vpack.c.b16 %v1429, %v1428
          %vm1438 = vcmask 523264
          %v1440 = vsel %vm1438, %v1405, 0
          %1442 = vmatprep.subr.bf16.mxu0 0
          %1443 = vmatpush1.bf16.msra.mxu0 %v1430
          %1444 = vmatprep.subr.bf16.mxu0 0
          %1445 = vmatpush1.bf16.msra.mxu0 %v1431
          %1446 = vmatprep.subr.bf16.mxu0 0
          %1447 = vmatpush1.bf16.msra.mxu0 %v1432
          %1448 = vmatprep.subr.bf16.mxu0 0
          %1449 = vmatpush1.bf16.msra.mxu0 %v1433
          %1450 = vmatprep.subr.bf16.mxu0 0
          %1451 = vmatpush1.bf16.msra.mxu0 0
          %1452 = vmatprep.subr.bf16.mxu0 0
          %1453 = vmatpush1.bf16.msra.mxu0 0
          %1454 = vmatprep.subr.bf16.mxu0 0
          %1455 = vmatpush1.bf16.msra.mxu0 0
          %1456 = vmatprep.subr.bf16.mxu0 0
          %1457 = vmatpush1.bf16.msra.mxu0 0
          %1458 = vmatprep.subr.bf16.mxu0 0
          %1459 = vmatpush1.bf16.msra.mxu0 0
          %1460 = vmatprep.subr.bf16.mxu0 0
          %1461 = vmatpush1.bf16.msra.mxu0 0
          %1462 = vmatprep.subr.bf16.mxu0 0
          %1463 = vmatpush1.bf16.msra.mxu0 0
          %1464 = vmatprep.subr.bf16.mxu0 0
          %1465 = vmatpush1.bf16.msra.mxu0 0
          %1466 = vmatprep.subr.bf16.mxu0 0
          %1467 = vmatpush1.bf16.msra.mxu0 0
          %1468 = vmatprep.subr.bf16.mxu0 0
          %1469 = vmatpush1.bf16.msra.mxu0 0
          %1470 = vmatprep.subr.bf16.mxu0 0
          %1471 = vmatpush1.bf16.msra.mxu0 0
          %1472 = vmatprep.subr.bf16.mxu0 0
          %1473 = vmatpush1.bf16.msra.mxu0 0
          %1474 = vmatprep.mubr.bf16.mxu0 0
          %1475 = vmatmul.mubr.bf16.gmra.mrb[0].mxu0 %v1440
          %v1476 = vpop.f32.mrb[0].mxu0
          %v1477 = vadd.f32 0.0, %v1476
          %v1478 = vpop.f32.mrb[0].mxu0
          %v1479 = vpop.f32.mrb[0].mxu0
          %v1480 = vpop.f32.mrb[0].mxu0
          %1481 = vdwg.mxu0
          %v1482 = vadd.f32 %v1313, %v1477
          %v1484 = vlaneseq
          %v1485 = vshrl.u32 %v1484, 7
          %v1486 = vsub.s32 0, %v1485
          %v1487 = vrot.slane %v647, %v1486
          %v1489 = vadd.f32 %v1482, %v1487
        $region129: #{tpu_custom_call.1} parent=71 // loop_footer
          %s653 = sadd.s32 1, %s649
        $region130: #{tpu_custom_call.1} parent=71 // loop_footer_branch
          %648 = sbr.rel target = $region126
        $region131: #{tpu_custom_call.1} parent=71 // loop_exit
          _
        %v1490 = vld [vmem:[#allocation22] sm:$0x1]
        %v1491 = vld [vmem:[#allocation22 + $0x1] sm:$0x1]
        %vm1492 = vcmask 261120
        %v1493 = vsel %vm1492, %v654, 0.0
        %1494 = vadd.xlane.f32.xlu0 %v1493
        %v1495 = vpop.xlane.xlu0 %1494
        %v1496 = vrcp.pop 32.0
        %v1497 = vmul.f32 %v1495, %v1496
        %v1498 = vsub.f32 %v654, %v1497
        %v1499 = vmul.f32 %v1498, %v1498
        %v1500 = vsel %vm1492, %v1499, 0.0
        %1501 = vadd.xlane.f32.xlu0 %v1500
        %v1502 = vpop.xlane.xlu0 %1501
        %v1503 = vmul.f32 %v1502, %v1496
        %v1504 = vadd.f32 %v1503, 1e-05
        %v1505 = vrsqrt.pop %v1504
        %v1506 = vmul.f32 %v1498, %v1505
        %v1507 = vlaneseq
        %v1508 = vshrl.u32 %v1507, 7
        %v1509 = vsub.s32 0, %v1508
        %v1510 = vrot.slane %v1490, %v1509
        %v1511 = vmul.f32 %v1506, %v1510
        %v1512 = vlaneseq
        %v1513 = vshrl.u32 %v1512, 7
        %v1514 = vsub.s32 0, %v1513
        %v1515 = vrot.slane %v1491, %v1514
        %v1516 = vadd.f32 %v1511, %v1515
        %1517 = vst.msk [vmem:[%s636] sm:$0xff] %vm1492, %v1516
        %s1518 = sand.u32 %s329, 1
        %s1519 = scalar_lea.sflag [#allocation4], %s1518
        %s1520 = sand.u32 %s329, 1
        %s1521 = smul.addr %s1520, 8
        %s1522 = scalar_lea.vmem [#allocation23], %s1521
        // Predicated region
        $region132: #{tpu_custom_call.1} parent=71 // pred_check
          %p1523 = pneg %p339
        $region133: #{tpu_custom_call.1} parent=71 // pred_check_branch
          %1525 = sbr.rel (%p1523) target = $region135
        $region134: #{tpu_custom_call.1} parent=71 // pred_region
          %s1527 = ssub.s32 128, 128
          %1528 = vsyncadd %s1519, %s1527
          %s1529 = smul.addr %s38, 128
          %s1530 = scalar_lea.hbm %s13, %s1529
          %s1532 = sshll.u32 %s1522, 4
          %s1533 = int_to_ptr.vmem [resolvable:$true] %s1532
          %1535 = dma.vmem_to_hbm [thread:$0]  %s1533, 128, %s1530, %s1519
        $region135: #{tpu_custom_call.1} parent=71 // pred_fallthru
          _
      $region72: #{tpu_custom_call.1} parent=5 // pred_fallthru
        _
      %p1536 = scmp.le.s32.totalorder 2, %s33
      // Predicated region
      $region136: #{tpu_custom_call.1} parent=5 // pred_check
        %p1537 = pneg %p1536
      $region137: #{tpu_custom_call.1} parent=5 // pred_check_branch
        %1539 = sbr.rel (%p1537) target = $region139
      $region138: #{tpu_custom_call.1} parent=5 // pred_region
        %s1540 = ssub.s32 %s33, 2
        // Predicated region
        $region140: #{tpu_custom_call.1} parent=138 // pred_check
          %p1541 = pneg %p345
        $region141: #{tpu_custom_call.1} parent=138 // pred_check_branch
          %1543 = sbr.rel (%p1541) target = $region143
        $region142: #{tpu_custom_call.1} parent=138 // pred_region
          %s1544 = sand.u32 %s330, 1
          %s1545 = scalar_lea.sflag [#allocation4], %s1544
          %s1546 = sand.u32 %s330, 1
          %s1547 = smul.addr %s1546, 8
          %s1548 = scalar_lea.vmem [#allocation23], %s1547
          %1549 = dma.done %s1545, 128
        $region143: #{tpu_custom_call.1} parent=138 // pred_fallthru
          _
      $region139: #{tpu_custom_call.1} parent=5 // pred_fallthru
        _
    $region6: #{tpu_custom_call.1} parent=1 // loop_footer
      %s37 = sadd.s32 1, %s33
    $region7: #{tpu_custom_call.1} parent=1 // loop_footer_branch
      %32 = sbr.rel target = $region3
    $region8: #{tpu_custom_call.1} parent=1 // loop_exit
      _
    %1550 = vsyncpa [#allocation3], 1
    %s1551 = scalar_lea.sflag [#allocation3], 1
    %1552 = vsyncpa %s1551, 1
    %1553 = vsyncpa [#allocation6], 1
    %s1554 = scalar_lea.sflag [#allocation6], 1
    %1555 = vsyncpa %s1554, 1
    %1556 = vsyncpa [#allocation9], 1
    %1557 = vsyncpa [#allocation12], 1
    %1558 = vsyncpa [#allocation15], 1
    %1559 = vsyncpa [#allocation18], 1
    %1560 = vsyncpa [#allocation21], 1
    %1561 = vsyncpa [#allocation4], 1
    %s1562 = scalar_lea.sflag [#allocation4], 1
    %1563 = vsyncpa %s1562, 1

// kernel: tpu_custom_call.1
$region0: #{tpu_custom_call.1}
  #allocation0 [shape = 'u32[]', space=smem, size = 0x4, offset = 0x4, fixed_abs, tag = 'smem constant byte address 0x4 - core index']
  #allocation1 [shape = 'u32[144,128]{1,0:T(1,128)}', space=vmem, size = 0x12000, scoped, tag = 'internal scratch']
  %s0 = inlined_call_operand.hbm [shape: bf16[2,8,32], index: 0, kind: input, shape index: {}]
  %s1 = inlined_call_operand.hbm [shape: f32[2,1,8], index: 1, kind: input, shape index: {}]
  %s2 = inlined_call_operand.hbm [shape: f32[8,32], index: 2, kind: input, shape index: {}]
  %s3 = inlined_call_operand.hbm [shape: f32[3,1,32], index: 3, kind: input, shape index: {}]
  %s4 = inlined_call_operand.hbm [shape: bf16[32,96], index: 4, kind: input, shape index: {}]
  %s5 = inlined_call_operand.hbm [shape: bf16[32,32], index: 5, kind: input, shape index: {}]
  %s6 = inlined_call_operand.hbm [shape: f32[2,32], index: 6, kind: input, shape index: {}]
  %s7 = inlined_call_operand.hbm [shape: f32[2,32], index: 7, kind: input, shape index: {}]
  %s8 = inlined_call_operand.hbm [shape: bf16[32,64], index: 8, kind: input, shape index: {}]
  %s9 = inlined_call_operand.hbm [shape: f32[1,64], index: 9, kind: input, shape index: {}]
  %s10 = inlined_call_operand.hbm [shape: bf16[64,32], index: 10, kind: input, shape index: {}]
  %s11 = inlined_call_operand.hbm [shape: f32[1,32], index: 11, kind: input, shape index: {}]
  %s12 = inlined_call_operand.hbm [shape: f32[2,32], index: 12, kind: input, shape index: {}]
  %s13 = inlined_call_operand.hbm [shape: f32[2,8,32], index: 13, kind: output, shape index: {}]
  %s14 = sld [smem:[#allocation0]]
  $region144: #{tpu_custom_call.1} parent=0
    _
  %s16 = ssub.s32 1, %s14
  %s17 = scalar_select 0, %s16, %s14
  $region1: #{tpu_custom_call.1} parent=0
    #allocation2 [shape = 'u8[4096]{0}', space=vmem, size = 0x1000, scoped, tag = 'input window, operand 0']
    #allocation3 [shape = 's32[2]{0}', space=sflag, size = 0x8, scoped, tag = 'scoped memory for tpu_custom_call.1']
    #allocation4 [shape = 's32[2]{0}', space=sflag, size = 0x8, scoped, tag = 'scoped memory for tpu_custom_call.1']
    #allocation5 [shape = 'u8[1024]{0}', space=vmem, size = 0x400, scoped, tag = 'input window, operand 1']
    #allocation6 [shape = 's32[2]{0}', space=sflag, size = 0x8, scoped, tag = 'scoped memory for tpu_custom_call.1']
    #allocation7 [shape = 'u8[4096]{0}', space=vmem, size = 0x1000, scoped, tag = 'input window, operand 2, single buffered']
    #allocation8 [shape = 'u8[1536]{0}', space=vmem, size = 0x800, scoped, tag = 'input window, operand 3, single buffered']
    #allocation9 [shape = 's32[1]{0}', space=sflag, size = 0x4, scoped, tag = 'scoped memory for tpu_custom_call.1']
    #allocation10 [shape = 'u8[8192]{0}', space=vmem, size = 0x2000, scoped, tag = 'input window, operand 4, single buffered']
    #allocation11 [shape = 'u8[8192]{0}', space=vmem, size = 0x2000, scoped, tag = 'input window, operand 5, single buffered']
    #allocation12 [shape = 's32[1]{0}', space=sflag, size = 0x4, scoped, tag = 'scoped memory for tpu_custom_call.1']
    #allocation13 [shape = 'u8[1024]{0}', space=vmem, size = 0x400, scoped, tag = 'input window, operand 6, single buffered']
    #allocation14 [shape = 'u8[1024]{0}', space=vmem, size = 0x400, scoped, tag = 'input window, operand 7, single buffered']
    #allocation15 [shape = 's32[1]{0}', space=sflag, size = 0x4, scoped, tag = 'scoped memory for tpu_custom_call.1']
    #allocation16 [shape = 'u8[8192]{0}', space=vmem, size = 0x2000, scoped, tag = 'input window, operand 8, single buffered']
    #allocation17 [shape = 'u8[512]{0}', space=vmem, size = 0x400, scoped, tag = 'input window, operand 9, single buffered']
    #allocation18 [shape = 's32[1]{0}', space=sflag, size = 0x4, scoped, tag = 'scoped memory for tpu_custom_call.1']
    #allocation19 [shape = 'u8[16384]{0}', space=vmem, size = 0x4000, scoped, tag = 'input window, operand 10, single buffered']
    #allocation20 [shape = 'u8[512]{0}', space=vmem, size = 0x400, scoped, tag = 'input window, operand 11, single buffered']
    #allocation21 [shape = 's32[1]{0}', space=sflag, size = 0x4, scoped, tag = 'scoped memory for tpu_custom_call.1']
    #allocation22 [shape = 'u8[1024]{0}', space=vmem, size = 0x400, scoped, tag = 'input window, operand 12, single buffered']
    #allocation23 [shape = 'u8[8192]{0}', space=vmem, size = 0x2000, scoped, tag = 'output window, operand 0']
    %18 = vsyncpa [#allocation3], 0
    %s19 = scalar_lea.sflag [#allocation3], 1
    %20 = vsyncpa %s19, 0
    %21 = vsyncpa [#allocation6], 0
    %s22 = scalar_lea.sflag [#allocation6], 1
    %23 = vsyncpa %s22, 0
    %24 = vsyncpa [#allocation9], 0
    %25 = vsyncpa [#allocation12], 0
    %26 = vsyncpa [#allocation15], 0
    %27 = vsyncpa [#allocation18], 0
    %28 = vsyncpa [#allocation21], 0
    %29 = vsyncpa [#allocation4], 0
    %s30 = scalar_lea.sflag [#allocation4], 1
    %31 = vsyncpa %s30, 0
    loop: start=0, step=1, limit=4
    $region2: #{tpu_custom_call.1} parent=1 // loop_pre_header
      _
    $region3: #{tpu_custom_call.1} parent=1 // loop_header
      %s33 = sphi 0, %s37
      %p34 = scmp.ge.s32.totalorder %s33, 4
      %s43 = sphi 0, %s45
      %s46 = sphi 0, %s43
      %s47 = sphi 0, %s46
      %s63 = sphi 0, %s47
      %s69 = sphi 0, %s71
      %s72 = sphi 0, %s69
      %s73 = sphi 0, %s72
      %s89 = sphi 0, %s73
      %s93 = sphi 0, %s93
      %s95 = sphi 0, %s93
      %s96 = sphi 0, %s95
      %s110 = sphi 0, %s96
      %s114 = sphi 0, %s114
      %s116 = sphi 0, %s114
      %s117 = sphi 0, %s116
      %s131 = sphi 0, %s117
      %s135 = sphi 0, %s135
      %s137 = sphi 0, %s135
      %s138 = sphi 0, %s137
      %s152 = sphi 0, %s138
      %s156 = sphi 0, %s156
      %s158 = sphi 0, %s156
      %s159 = sphi 0, %s158
      %s173 = sphi 0, %s159
      %s177 = sphi 0, %s177
      %s179 = sphi 0, %s177
      %s180 = sphi 0, %s179
      %s194 = sphi 0, %s180
      %s198 = sphi 0, %s198
      %s200 = sphi 0, %s198
      %s201 = sphi 0, %s200
      %s215 = sphi 0, %s201
      %s219 = sphi 0, %s219
      %s221 = sphi 0, %s219
      %s222 = sphi 0, %s221
      %s236 = sphi 0, %s222
      %s240 = sphi 0, %s240
      %s242 = sphi 0, %s240
      %s243 = sphi 0, %s242
      %s257 = sphi 0, %s243
      %s261 = sphi 0, %s261
      %s263 = sphi 0, %s261
      %s264 = sphi 0, %s263
      %s278 = sphi 0, %s264
      %s282 = sphi 0, %s282
      %s284 = sphi 0, %s282
      %s285 = sphi 0, %s284
      %s299 = sphi 0, %s285
      %s303 = sphi 0, %s303
      %s305 = sphi 0, %s303
      %s306 = sphi 0, %s305
      %s320 = sphi 0, %s306
      %s326 = sphi 0, %s328
      %s329 = sphi 0, %s326
      %s330 = sphi 0, %s329
      %s346 = sphi 0, %s330
    $region4: #{tpu_custom_call.1} parent=1 // loop_header_branch
      %36 = sbr.rel (%p34) target = $region8
    $region5: #{tpu_custom_call.1} parent=1 // loop_body
      %s38 = ssub.s32 %s33, 1
      %s39 = ssub.s32 %s33, 2
      %s40 = sadd.s32 %s33, 1
      %s41 = ssub.s32 %s33, %s40
      %p42 = scmp.eq.s32.totalorder %s41, 0
      %s44 = sadd.s32 %s43, 1
      %s45 = scalar_select %p42, %s43, %s44
      %p48 = pneg %p42
      %p49 = scmp.eq.s32.totalorder %s33, 1
      %p50 = por %p48, %p49
      %p51 = scmp.ne.s32.totalorder %s43, %s46
      %p52 = scmp.eq.s32.totalorder %s33, 0
      %p53 = por %p51, %p52
      %p54 = scmp.ne.s32.totalorder %s43, %s46
      %p55 = scmp.eq.s32.totalorder %s38, 1
      %p56 = por %p54, %p55
      %p57 = scmp.ne.s32.totalorder %s46, %s47
      %p58 = scmp.eq.s32.totalorder %s38, 0
      %p59 = por %p57, %p58
      %p60 = scmp.ne.s32.totalorder %s46, %s47
      %p61 = scmp.eq.s32.totalorder %s39, 1
      %p62 = por %p60, %p61
      %p64 = scmp.ne.s32.totalorder %s47, %s63
      %p65 = scmp.eq.s32.totalorder %s39, 0
      %p66 = por %p64, %p65
      %s67 = ssub.s32 %s33, %s40
      %p68 = scmp.eq.s32.totalorder %s67, 0
      %s70 = sadd.s32 %s69, 1
      %s71 = scalar_select %p68, %s69, %s70
      %p74 = pneg %p68
      %p75 = scmp.eq.s32.totalorder %s33, 1
      %p76 = por %p74, %p75
      %p77 = scmp.ne.s32.totalorder %s69, %s72
      %p78 = scmp.eq.s32.totalorder %s33, 0
      %p79 = por %p77, %p78
      %p80 = scmp.ne.s32.totalorder %s69, %s72
      %p81 = scmp.eq.s32.totalorder %s38, 1
      %p82 = por %p80, %p81
      %p83 = scmp.ne.s32.totalorder %s72, %s73
      %p84 = scmp.eq.s32.totalorder %s38, 0
      %p85 = por %p83, %p84
      %p86 = scmp.ne.s32.totalorder %s72, %s73
      %p87 = scmp.eq.s32.totalorder %s39, 1
      %p88 = por %p86, %p87
      %p90 = scmp.ne.s32.totalorder %s73, %s89
      %p91 = scmp.eq.s32.totalorder %s39, 0
      %p92 = por %p90, %p91
      %s94 = sadd.s32 %s93, 1
      %p97 = scmp.eq.s32.totalorder %s33, 1
      %p98 = scmp.ne.s32.totalorder %s93, %s95
      %p99 = scmp.eq.s32.totalorder %s33, 0
      %p100 = por %p98, %p99
      %p101 = scmp.ne.s32.totalorder %s93, %s95
      %p102 = scmp.eq.s32.totalorder %s38, 1
      %p103 = por %p101, %p102
      %p104 = scmp.ne.s32.totalorder %s95, %s96
      %p105 = scmp.eq.s32.totalorder %s38, 0
      %p106 = por %p104, %p105
      %p107 = scmp.ne.s32.totalorder %s95, %s96
      %p108 = scmp.eq.s32.totalorder %s39, 1
      %p109 = por %p107, %p108
      %p111 = scmp.ne.s32.totalorder %s96, %s110
      %p112 = scmp.eq.s32.totalorder %s39, 0
      %p113 = por %p111, %p112
      %s115 = sadd.s32 %s114, 1
      %p118 = scmp.eq.s32.totalorder %s33, 1
      %p119 = scmp.ne.s32.totalorder %s114, %s116
      %p120 = scmp.eq.s32.totalorder %s33, 0
      %p121 = por %p119, %p120
      %p122 = scmp.ne.s32.totalorder %s114, %s116
      %p123 = scmp.eq.s32.totalorder %s38, 1
      %p124 = por %p122, %p123
      %p125 = scmp.ne.s32.totalorder %s116, %s117
      %p126 = scmp.eq.s32.totalorder %s38, 0
      %p127 = por %p125, %p126
      %p128 = scmp.ne.s32.totalorder %s116, %s117
      %p129 = scmp.eq.s32.totalorder %s39, 1
      %p130 = por %p128, %p129
      %p132 = scmp.ne.s32.totalorder %s117, %s131
      %p133 = scmp.eq.s32.totalorder %s39, 0
      %p134 = por %p132, %p133
      %s136 = sadd.s32 %s135, 1
      %p139 = scmp.eq.s32.totalorder %s33, 1
      %p140 = scmp.ne.s32.totalorder %s135, %s137
      %p141 = scmp.eq.s32.totalorder %s33, 0
      %p142 = por %p140, %p141
      %p143 = scmp.ne.s32.totalorder %s135, %s137
      %p144 = scmp.eq.s32.totalorder %s38, 1
      %p145 = por %p143, %p144
      %p146 = scmp.ne.s32.totalorder %s137, %s138
      %p147 = scmp.eq.s32.totalorder %s38, 0
      %p148 = por %p146, %p147
      %p149 = scmp.ne.s32.totalorder %s137, %s138
      %p150 = scmp.eq.s32.totalorder %s39, 1
      %p151 = por %p149, %p150
      %p153 = scmp.ne.s32.totalorder %s138, %s152
      %p154 = scmp.eq.s32.totalorder %s39, 0
      %p155 = por %p153, %p154
      %s157 = sadd.s32 %s156, 1
      %p160 = scmp.eq.s32.totalorder %s33, 1
      %p161 = scmp.ne.s32.totalorder %s156, %s158
      %p162 = scmp.eq.s32.totalorder %s33, 0
      %p163 = por %p161, %p162
      %p164 = scmp.ne.s32.totalorder %s156, %s158
      %p165 = scmp.eq.s32.totalorder %s38, 1
      %p166 = por %p164, %p165
      %p167 = scmp.ne.s32.totalorder %s158, %s159
      %p168 = scmp.eq.s32.totalorder %s38, 0
      %p169 = por %p167, %p168
      %p170 = scmp.ne.s32.totalorder %s158, %s159
      %p171 = scmp.eq.s32.totalorder %s39, 1
      %p172 = por %p170, %p171
      %p174 = scmp.ne.s32.totalorder %s159, %s173
      %p175 = scmp.eq.s32.totalorder %s39, 0
      %p176 = por %p174, %p175
      %s178 = sadd.s32 %s177, 1
      %p181 = scmp.eq.s32.totalorder %s33, 1
      %p182 = scmp.ne.s32.totalorder %s177, %s179
      %p183 = scmp.eq.s32.totalorder %s33, 0
      %p184 = por %p182, %p183
      %p185 = scmp.ne.s32.totalorder %s177, %s179
      %p186 = scmp.eq.s32.totalorder %s38, 1
      %p187 = por %p185, %p186
      %p188 = scmp.ne.s32.totalorder %s179, %s180
      %p189 = scmp.eq.s32.totalorder %s38, 0
      %p190 = por %p188, %p189
      %p191 = scmp.ne.s32.totalorder %s179, %s180
      %p192 = scmp.eq.s32.totalorder %s39, 1
      %p193 = por %p191, %p192
      %p195 = scmp.ne.s32.totalorder %s180, %s194
      %p196 = scmp.eq.s32.totalorder %s39, 0
      %p197 = por %p195, %p196
      %s199 = sadd.s32 %s198, 1
      %p202 = scmp.eq.s32.totalorder %s33, 1
      %p203 = scmp.ne.s32.totalorder %s198, %s200
      %p204 = scmp.eq.s32.totalorder %s33, 0
      %p205 = por %p203, %p204
      %p206 = scmp.ne.s32.totalorder %s198, %s200
      %p207 = scmp.eq.s32.totalorder %s38, 1
      %p208 = por %p206, %p207
      %p209 = scmp.ne.s32.totalorder %s200, %s201
      %p210 = scmp.eq.s32.totalorder %s38, 0
      %p211 = por %p209, %p210
      %p212 = scmp.ne.s32.totalorder %s200, %s201
      %p213 = scmp.eq.s32.totalorder %s39, 1
      %p214 = por %p212, %p213
      %p216 = scmp.ne.s32.totalorder %s201, %s215
      %p217 = scmp.eq.s32.totalorder %s39, 0
      %p218 = por %p216, %p217
      %s220 = sadd.s32 %s219, 1
      %p223 = scmp.eq.s32.totalorder %s33, 1
      %p224 = scmp.ne.s32.totalorder %s219, %s221
      %p225 = scmp.eq.s32.totalorder %s33, 0
      %p226 = por %p224, %p225
      %p227 = scmp.ne.s32.totalorder %s219, %s221
      %p228 = scmp.eq.s32.totalorder %s38, 1
      %p229 = por %p227, %p228
      %p230 = scmp.ne.s32.totalorder %s221, %s222
      %p231 = scmp.eq.s32.totalorder %s38, 0
      %p232 = por %p230, %p231
      %p233 = scmp.ne.s32.totalorder %s221, %s222
      %p234 = scmp.eq.s32.totalorder %s39, 1
      %p235 = por %p233, %p234
      %p237 = scmp.ne.s32.totalorder %s222, %s236
      %p238 = scmp.eq.s32.totalorder %s39, 0
      %p239 = por %p237, %p238
      %s241 = sadd.s32 %s240, 1
      %p244 = scmp.eq.s32.totalorder %s33, 1
      %p245 = scmp.ne.s32.totalorder %s240, %s242
      %p246 = scmp.eq.s32.totalorder %s33, 0
      %p247 = por %p245, %p246
      %p248 = scmp.ne.s32.totalorder %s240, %s242
      %p249 = scmp.eq.s32.totalorder %s38, 1
      %p250 = por %p248, %p249
      %p251 = scmp.ne.s32.totalorder %s242, %s243
      %p252 = scmp.eq.s32.totalorder %s38, 0
      %p253 = por %p251, %p252
      %p254 = scmp.ne.s32.totalorder %s242, %s243
      %p255 = scmp.eq.s32.totalorder %s39, 1
      %p256 = por %p254, %p255
      %p258 = scmp.ne.s32.totalorder %s243, %s257
      %p259 = scmp.eq.s32.totalorder %s39, 0
      %p260 = por %p258, %p259
      %s262 = sadd.s32 %s261, 1
      %p265 = scmp.eq.s32.totalorder %s33, 1
      %p266 = scmp.ne.s32.totalorder %s261, %s263
      %p267 = scmp.eq.s32.totalorder %s33, 0
      %p268 = por %p266, %p267
      %p269 = scmp.ne.s32.totalorder %s261, %s263
      %p270 = scmp.eq.s32.totalorder %s38, 1
      %p271 = por %p269, %p270
      %p272 = scmp.ne.s32.totalorder %s263, %s264
      %p273 = scmp.eq.s32.totalorder %s38, 0
      %p274 = por %p272, %p273
      %p275 = scmp.ne.s32.totalorder %s263, %s264
      %p276 = scmp.eq.s32.totalorder %s39, 1
      %p277 = por %p275, %p276
      %p279 = scmp.ne.s32.totalorder %s264, %s278
      %p280 = scmp.eq.s32.totalorder %s39, 0
      %p281 = por %p279, %p280
      %s283 = sadd.s32 %s282, 1
      %p286 = scmp.eq.s32.totalorder %s33, 1
      %p287 = scmp.ne.s32.totalorder %s282, %s284
      %p288 = scmp.eq.s32.totalorder %s33, 0
      %p289 = por %p287, %p288
      %p290 = scmp.ne.s32.totalorder %s282, %s284
      %p291 = scmp.eq.s32.totalorder %s38, 1
      %p292 = por %p290, %p291
      %p293 = scmp.ne.s32.totalorder %s284, %s285
      %p294 = scmp.eq.s32.totalorder %s38, 0
      %p295 = por %p293, %p294
      %p296 = scmp.ne.s32.totalorder %s284, %s285
      %p297 = scmp.eq.s32.totalorder %s39, 1
      %p298 = por %p296, %p297
      %p300 = scmp.ne.s32.totalorder %s285, %s299
      %p301 = scmp.eq.s32.totalorder %s39, 0
      %p302 = por %p300, %p301
      %s304 = sadd.s32 %s303, 1
      %p307 = scmp.eq.s32.totalorder %s33, 1
      %p308 = scmp.ne.s32.totalorder %s303, %s305
      %p309 = scmp.eq.s32.totalorder %s33, 0
      %p310 = por %p308, %p309
      %p311 = scmp.ne.s32.totalorder %s303, %s305
      %p312 = scmp.eq.s32.totalorder %s38, 1
      %p313 = por %p311, %p312
      %p314 = scmp.ne.s32.totalorder %s305, %s306
      %p315 = scmp.eq.s32.totalorder %s38, 0
      %p316 = por %p314, %p315
      %p317 = scmp.ne.s32.totalorder %s305, %s306
      %p318 = scmp.eq.s32.totalorder %s39, 1
      %p319 = por %p317, %p318
      %p321 = scmp.ne.s32.totalorder %s306, %s320
      %p322 = scmp.eq.s32.totalorder %s39, 0
      %p323 = por %p321, %p322
      %s324 = ssub.s32 %s33, %s40
      %p325 = scmp.eq.s32.totalorder %s324, 0
      %s327 = sadd.s32 %s326, 1
      %s328 = scalar_select %p325, %s326, %s327
      %p331 = pneg %p325
      %p332 = scmp.eq.s32.totalorder %s33, 1
      %p333 = por %p331, %p332
      %p334 = scmp.ne.s32.totalorder %s326, %s329
      %p335 = scmp.eq.s32.totalorder %s33, 0
      %p336 = por %p334, %p335
      %p337 = scmp.ne.s32.totalorder %s326, %s329
      %p338 = scmp.eq.s32.totalorder %s38, 1
      %p339 = por %p337, %p338
      %p340 = scmp.ne.s32.totalorder %s329, %s330
      %p341 = scmp.eq.s32.totalorder %s38, 0
      %p342 = por %p340, %p341
      %p343 = scmp.ne.s32.totalorder %s329, %s330
      %p344 = scmp.eq.s32.totalorder %s39, 1
      %p345 = por %p343, %p344
      %p347 = scmp.ne.s32.totalorder %s330, %s346
      %p348 = scmp.eq.s32.totalorder %s39, 0
      %p349 = por %p347, %p348
      %p350 = scmp.le.s32.totalorder 1, %s33
      %p351 = scmp.lt.s32.totalorder %s33, 3
      %p352 = pnand %p350, %p351
      %p353 = pneg %p352
      // Predicated region
      $region9: #{tpu_custom_call.1} parent=5 // pred_check
        _
      $region10: #{tpu_custom_call.1} parent=5 // pred_check_branch
        %355 = sbr.rel (%p352) target = $region12
      $region11: #{tpu_custom_call.1} parent=5 // pred_region
        %s356 = ssub.s32 %s33, 1
        // Predicated region
        $region13: #{tpu_custom_call.1} parent=11 // pred_check
          %p357 = pneg %p106
        $region14: #{tpu_custom_call.1} parent=11 // pred_check_branch
          %359 = sbr.rel (%p357) target = $region16
        $region15: #{tpu_custom_call.1} parent=11 // pred_region
          %s361 = ssub.s32 128, 128
          %362 = vsyncadd [#allocation6], %s361
          %s364 = sshll.u32 [#allocation7], 4
          %s365 = int_to_ptr.vmem [resolvable:$true] %s364
          %367 = dma.hbm_to_vmem [thread:$0]  %s2, 128, %s365, [#allocation6]
        $region16: #{tpu_custom_call.1} parent=11 // pred_fallthru
          _
        // Predicated region
        $region17: #{tpu_custom_call.1} parent=11 // pred_check
          %p368 = pneg %p127
        $region18: #{tpu_custom_call.1} parent=11 // pred_check_branch
          %370 = sbr.rel (%p368) target = $region20
        $region19: #{tpu_custom_call.1} parent=11 // pred_region
          %s372 = ssub.s32 48, 48
          %373 = vsyncadd [#allocation9], %s372
          %s374 = sshll.u32 [#allocation8], 4
          %s375 = int_to_ptr.vmem [resolvable:$true] %s374
          %380 = dma.hbm_to_vmem [thread:$0]  %s3, 48, %s375, [#allocation9], 16, 16, 1
        $region20: #{tpu_custom_call.1} parent=11 // pred_fallthru
          _
        // Predicated region
        $region21: #{tpu_custom_call.1} parent=11 // pred_check
          %p381 = pneg %p148
        $region22: #{tpu_custom_call.1} parent=11 // pred_check_branch
          %383 = sbr.rel (%p381) target = $region24
        $region23: #{tpu_custom_call.1} parent=11 // pred_region
          %s385 = ssub.s32 256, 256
          %386 = vsyncadd [#allocation9], %s385
          %s387 = sshll.u32 [#allocation10], 4
          %s388 = int_to_ptr.vmem [resolvable:$true] %s387
          %393 = dma.hbm_to_vmem [thread:$0]  %s4, 256, %s388, [#allocation9], 64, 64, 4
        $region24: #{tpu_custom_call.1} parent=11 // pred_fallthru
          _
        // Predicated region
        $region25: #{tpu_custom_call.1} parent=11 // pred_check
          %p394 = pneg %p169
        $region26: #{tpu_custom_call.1} parent=11 // pred_check_branch
          %396 = sbr.rel (%p394) target = $region28
        $region27: #{tpu_custom_call.1} parent=11 // pred_region
          %s398 = ssub.s32 256, 256
          %399 = vsyncadd [#allocation12], %s398
          %s400 = sshll.u32 [#allocation11], 4
          %s401 = int_to_ptr.vmem [resolvable:$true] %s400
          %406 = dma.hbm_to_vmem [thread:$0]  %s5, 256, %s401, [#allocation12], 64, 64, 4
        $region28: #{tpu_custom_call.1} parent=11 // pred_fallthru
          _
        // Predicated region
        $region29: #{tpu_custom_call.1} parent=11 // pred_check
          %p407 = pneg %p190
        $region30: #{tpu_custom_call.1} parent=11 // pred_check_branch
          %409 = sbr.rel (%p407) target = $region32
        $region31: #{tpu_custom_call.1} parent=11 // pred_region
          %s411 = ssub.s32 32, 32
          %412 = vsyncadd [#allocation12], %s411
          %s414 = sshll.u32 [#allocation13], 4
          %s415 = int_to_ptr.vmem [resolvable:$true] %s414
          %417 = dma.hbm_to_vmem [thread:$0]  %s6, 32, %s415, [#allocation12]
        $region32: #{tpu_custom_call.1} parent=11 // pred_fallthru
          _
        // Predicated region
        $region33: #{tpu_custom_call.1} parent=11 // pred_check
          %p418 = pneg %p211
        $region34: #{tpu_custom_call.1} parent=11 // pred_check_branch
          %420 = sbr.rel (%p418) target = $region36
        $region35: #{tpu_custom_call.1} parent=11 // pred_region
          %s422 = ssub.s32 32, 32
          %423 = vsyncadd [#allocation15], %s422
          %s425 = sshll.u32 [#allocation14], 4
          %s426 = int_to_ptr.vmem [resolvable:$true] %s425
          %428 = dma.hbm_to_vmem [thread:$0]  %s7, 32, %s426, [#allocation15]
        $region36: #{tpu_custom_call.1} parent=11 // pred_fallthru
          _
        // Predicated region
        $region37: #{tpu_custom_call.1} parent=11 // pred_check
          %p429 = pneg %p232
        $region38: #{tpu_custom_call.1} parent=11 // pred_check_branch
          %431 = sbr.rel (%p429) target = $region40
        $region39: #{tpu_custom_call.1} parent=11 // pred_region
          %s433 = ssub.s32 256, 256
          %434 = vsyncadd [#allocation15], %s433
          %s435 = sshll.u32 [#allocation16], 4
          %s436 = int_to_ptr.vmem [resolvable:$true] %s435
          %441 = dma.hbm_to_vmem [thread:$0]  %s8, 256, %s436, [#allocation15], 64, 64, 4
        $region40: #{tpu_custom_call.1} parent=11 // pred_fallthru
          _
        // Predicated region
        $region41: #{tpu_custom_call.1} parent=11 // pred_check
          %p442 = pneg %p253
        $region42: #{tpu_custom_call.1} parent=11 // pred_check_branch
          %444 = sbr.rel (%p442) target = $region44
        $region43: #{tpu_custom_call.1} parent=11 // pred_region
          %s446 = ssub.s32 16, 16
          %447 = vsyncadd [#allocation18], %s446
          %s449 = sshll.u32 [#allocation17], 4
          %s450 = int_to_ptr.vmem [resolvable:$true] %s449
          %452 = dma.hbm_to_vmem [thread:$0]  %s9, 16, %s450, [#allocation18]
        $region44: #{tpu_custom_call.1} parent=11 // pred_fallthru
          _
        // Predicated region
        $region45: #{tpu_custom_call.1} parent=11 // pred_check
          %p453 = pneg %p274
        $region46: #{tpu_custom_call.1} parent=11 // pred_check_branch
          %455 = sbr.rel (%p453) target = $region48
        $region47: #{tpu_custom_call.1} parent=11 // pred_region
          %s457 = ssub.s32 512, 512
          %458 = vsyncadd [#allocation18], %s457
          %s459 = sshll.u32 [#allocation19], 4
          %s460 = int_to_ptr.vmem [resolvable:$true] %s459
          %465 = dma.hbm_to_vmem [thread:$0]  %s10, 512, %s460, [#allocation18], 64, 64, 4
        $region48: #{tpu_custom_call.1} parent=11 // pred_fallthru
          _
        // Predicated region
        $region49: #{tpu_custom_call.1} parent=11 // pred_check
          %p466 = pneg %p295
        $region50: #{tpu_custom_call.1} parent=11 // pred_check_branch
          %468 = sbr.rel (%p466) target = $region52
        $region51: #{tpu_custom_call.1} parent=11 // pred_region
          %s470 = ssub.s32 16, 16
          %471 = vsyncadd [#allocation21], %s470
          %s473 = sshll.u32 [#allocation20], 4
          %s474 = int_to_ptr.vmem [resolvable:$true] %s473
          %476 = dma.hbm_to_vmem [thread:$0]  %s11, 16, %s474, [#allocation21]
        $region52: #{tpu_custom_call.1} parent=11 // pred_fallthru
          _
        // Predicated region
        $region53: #{tpu_custom_call.1} parent=11 // pred_check
          %p477 = pneg %p316
        $region54: #{tpu_custom_call.1} parent=11 // pred_check_branch
          %479 = sbr.rel (%p477) target = $region56
        $region55: #{tpu_custom_call.1} parent=11 // pred_region
          %s481 = ssub.s32 32, 32
          %482 = vsyncadd [#allocation21], %s481
          %s484 = sshll.u32 [#allocation22], 4
          %s485 = int_to_ptr.vmem [resolvable:$true] %s484
          %487 = dma.hbm_to_vmem [thread:$0]  %s12, 32, %s485, [#allocation21]
        $region56: #{tpu_custom_call.1} parent=11 // pred_fallthru
          _
      $region12: #{tpu_custom_call.1} parent=5 // pred_fallthru
        _
      %p488 = scmp.lt.s32.totalorder %s33, 2
      // Predicated region
      $region57: #{tpu_custom_call.1} parent=5 // pred_check
        %p489 = pneg %p488
      $region58: #{tpu_custom_call.1} parent=5 // pred_check_branch
        %491 = sbr.rel (%p489) target = $region60
      $region59: #{tpu_custom_call.1} parent=5 // pred_region
        // Predicated region
        $region61: #{tpu_custom_call.1} parent=59 // pred_check
          %p492 = pneg %p53
        $region62: #{tpu_custom_call.1} parent=59 // pred_check_branch
          %494 = sbr.rel (%p492) target = $region64
        $region63: #{tpu_custom_call.1} parent=59 // pred_region
          %s495 = sand.u32 %s43, 1
          %s496 = scalar_lea.sflag [#allocation3], %s495
          %s497 = sand.u32 %s43, 1
          %s498 = smul.addr %s497, 4
          %s499 = scalar_lea.vmem [#allocation2], %s498
          %s501 = ssub.s32 64, 64
          %502 = vsyncadd %s496, %s501
          %s503 = smul.addr %s33, 64
          %s504 = scalar_lea.hbm %s0, %s503
          %s506 = sshll.u32 %s499, 4
          %s507 = int_to_ptr.vmem [resolvable:$true] %s506
          %509 = dma.hbm_to_vmem [thread:$0]  %s504, 64, %s507, %s496
        $region64: #{tpu_custom_call.1} parent=59 // pred_fallthru
          _
        // Predicated region
        $region65: #{tpu_custom_call.1} parent=59 // pred_check
          %p510 = pneg %p79
        $region66: #{tpu_custom_call.1} parent=59 // pred_check_branch
          %512 = sbr.rel (%p510) target = $region68
        $region67: #{tpu_custom_call.1} parent=59 // pred_region
          %s513 = sand.u32 %s33, 1
          %s514 = scalar_lea.sflag [#allocation6], %s513
          %s515 = sand.u32 %s69, 1
          %s516 = scalar_lea.vmem [#allocation5], %s515
          %s518 = ssub.s32 16, 16
          %519 = vsyncadd %s514, %s518
          %s520 = smul.addr %s33, 16
          %s521 = scalar_lea.hbm %s1, %s520
          %s523 = sshll.u32 %s516, 4
          %s524 = int_to_ptr.vmem [resolvable:$true] %s523
          %526 = dma.hbm_to_vmem [thread:$0]  %s521, 16, %s524, %s514
        $region68: #{tpu_custom_call.1} parent=59 // pred_fallthru
          _
      $region60: #{tpu_custom_call.1} parent=5 // pred_fallthru
        _
      %p527 = scmp.le.s32.totalorder 1, %s33
      %p528 = scmp.lt.s32.totalorder %s33, 3
      %p529 = pnand %p527, %p528
      %p530 = pneg %p529
      // Predicated region
      $region69: #{tpu_custom_call.1} parent=5 // pred_check
        _
      $region70: #{tpu_custom_call.1} parent=5 // pred_check_branch
        %532 = sbr.rel (%p529) target = $region72
      $region71: #{tpu_custom_call.1} parent=5 // pred_region
        %s533 = ssub.s32 %s33, 1
        %s534 = sand.u32 %s46, 1
        %s535 = scalar_lea.sflag [#allocation3], %s534
        %s536 = sand.u32 %s46, 1
        %s537 = smul.addr %s536, 4
        %s538 = scalar_lea.vmem [#allocation2], %s537
        // Predicated region
        $region73: #{tpu_custom_call.1} parent=71 // pred_check
          %p539 = pneg %p59
        $region74: #{tpu_custom_call.1} parent=71 // pred_check_branch
          %541 = sbr.rel (%p539) target = $region76
        $region75: #{tpu_custom_call.1} parent=71 // pred_region
          %542 = dma.done %s535, 64
        $region76: #{tpu_custom_call.1} parent=71 // pred_fallthru
          _
        %s543 = sand.u32 %s38, 1
        %s544 = scalar_lea.sflag [#allocation6], %s543
        %s545 = sand.u32 %s72, 1
        %s546 = scalar_lea.vmem [#allocation5], %s545
        // Predicated region
        $region77: #{tpu_custom_call.1} parent=71 // pred_check
          %p547 = pneg %p85
        $region78: #{tpu_custom_call.1} parent=71 // pred_check_branch
          %549 = sbr.rel (%p547) target = $region80
        $region79: #{tpu_custom_call.1} parent=71 // pred_region
          %550 = dma.done %s544, 16
        $region80: #{tpu_custom_call.1} parent=71 // pred_fallthru
          _
        // Predicated region
        $region81: #{tpu_custom_call.1} parent=71 // pred_check
          %p551 = pneg %p106
        $region82: #{tpu_custom_call.1} parent=71 // pred_check_branch
          %553 = sbr.rel (%p551) target = $region84
        $region83: #{tpu_custom_call.1} parent=71 // pred_region
          %554 = dma.done [#allocation6], 128
        $region84: #{tpu_custom_call.1} parent=71 // pred_fallthru
          _
        // Predicated region
        $region85: #{tpu_custom_call.1} parent=71 // pred_check
          %p555 = pneg %p127
        $region86: #{tpu_custom_call.1} parent=71 // pred_check_branch
          %557 = sbr.rel (%p555) target = $region88
        $region87: #{tpu_custom_call.1} parent=71 // pred_region
          %558 = dma.done [#allocation9], 48
        $region88: #{tpu_custom_call.1} parent=71 // pred_fallthru
          _
        // Predicated region
        $region89: #{tpu_custom_call.1} parent=71 // pred_check
          %p559 = pneg %p148
        $region90: #{tpu_custom_call.1} parent=71 // pred_check_branch
          %561 = sbr.rel (%p559) target = $region92
        $region91: #{tpu_custom_call.1} parent=71 // pred_region
          %562 = dma.done [#allocation9], 256
        $region92: #{tpu_custom_call.1} parent=71 // pred_fallthru
          _
        // Predicated region
        $region93: #{tpu_custom_call.1} parent=71 // pred_check
          %p563 = pneg %p169
        $region94: #{tpu_custom_call.1} parent=71 // pred_check_branch
          %565 = sbr.rel (%p563) target = $region96
        $region95: #{tpu_custom_call.1} parent=71 // pred_region
          %566 = dma.done [#allocation12], 256
        $region96: #{tpu_custom_call.1} parent=71 // pred_fallthru
          _
        // Predicated region
        $region97: #{tpu_custom_call.1} parent=71 // pred_check
          %p567 = pneg %p190
        $region98: #{tpu_custom_call.1} parent=71 // pred_check_branch
          %569 = sbr.rel (%p567) target = $region100
        $region99: #{tpu_custom_call.1} parent=71 // pred_region
          %570 = dma.done [#allocation12], 32
        $region100: #{tpu_custom_call.1} parent=71 // pred_fallthru
          _
        // Predicated region
        $region101: #{tpu_custom_call.1} parent=71 // pred_check
          %p571 = pneg %p211
        $region102: #{tpu_custom_call.1} parent=71 // pred_check_branch
          %573 = sbr.rel (%p571) target = $region104
        $region103: #{tpu_custom_call.1} parent=71 // pred_region
          %574 = dma.done [#allocation15], 32
        $region104: #{tpu_custom_call.1} parent=71 // pred_fallthru
          _
        // Predicated region
        $region105: #{tpu_custom_call.1} parent=71 // pred_check
          %p575 = pneg %p232
        $region106: #{tpu_custom_call.1} parent=71 // pred_check_branch
          %577 = sbr.rel (%p575) target = $region108
        $region107: #{tpu_custom_call.1} parent=71 // pred_region
          %578 = dma.done [#allocation15], 256
        $region108: #{tpu_custom_call.1} parent=71 // pred_fallthru
          _
        // Predicated region
        $region109: #{tpu_custom_call.1} parent=71 // pred_check
          %p579 = pneg %p253
        $region110: #{tpu_custom_call.1} parent=71 // pred_check_branch
          %581 = sbr.rel (%p579) target = $region112
        $region111: #{tpu_custom_call.1} parent=71 // pred_region
          %582 = dma.done [#allocation18], 16
        $region112: #{tpu_custom_call.1} parent=71 // pred_fallthru
          _
        // Predicated region
        $region113: #{tpu_custom_call.1} parent=71 // pred_check
          %p583 = pneg %p274
        $region114: #{tpu_custom_call.1} parent=71 // pred_check_branch
          %585 = sbr.rel (%p583) target = $region116
        $region115: #{tpu_custom_call.1} parent=71 // pred_region
          %586 = dma.done [#allocation18], 512
        $region116: #{tpu_custom_call.1} parent=71 // pred_fallthru
          _
        // Predicated region
        $region117: #{tpu_custom_call.1} parent=71 // pred_check
          %p587 = pneg %p295
        $region118: #{tpu_custom_call.1} parent=71 // pred_check_branch
          %589 = sbr.rel (%p587) target = $region120
        $region119: #{tpu_custom_call.1} parent=71 // pred_region
          %590 = dma.done [#allocation21], 16
        $region120: #{tpu_custom_call.1} parent=71 // pred_fallthru
          _
        // Predicated region
        $region121: #{tpu_custom_call.1} parent=71 // pred_check
          %p591 = pneg %p316
        $region122: #{tpu_custom_call.1} parent=71 // pred_check_branch
          %593 = sbr.rel (%p591) target = $region124
        $region123: #{tpu_custom_call.1} parent=71 // pred_region
          %594 = dma.done [#allocation21], 32
        $region124: #{tpu_custom_call.1} parent=71 // pred_fallthru
          _
        %s595 = sand.u32 %s46, 1
        %s596 = scalar_lea.sflag [#allocation3], %s595
        %s597 = sand.u32 %s46, 1
        %s598 = smul.addr %s597, 4
        %s599 = scalar_lea.vmem [#allocation2], %s598
        %p600 = pneg %p59
        %p601 = pneg %p56
        %s602 = sand.u32 %s38, 1
        %s603 = scalar_lea.sflag [#allocation6], %s602
        %s604 = sand.u32 %s72, 1
        %s605 = scalar_lea.vmem [#allocation5], %s604
        %p606 = pneg %p85
        %p607 = pneg %p82
        %p608 = pneg %p106
        %p609 = pneg %p103
        %p610 = pneg %p127
        %p611 = pneg %p124
        %p612 = pneg %p148
        %p613 = pneg %p145
        %p614 = pneg %p169
        %p615 = pneg %p166
        %p616 = pneg %p190
        %p617 = pneg %p187
        %p618 = pneg %p211
        %p619 = pneg %p208
        %p620 = pneg %p232
        %p621 = pneg %p229
        %p622 = pneg %p253
        %p623 = pneg %p250
        %p624 = pneg %p274
        %p625 = pneg %p271
        %p626 = pneg %p295
        %p627 = pneg %p292
        %p628 = pneg %p316
        %p629 = pneg %p313
        %p630 = pneg %p342
        %p631 = pneg %p339
        %s632 = sand.u32 %s329, 1
        %s633 = scalar_lea.sflag [#allocation4], %s632
        %s634 = sand.u32 %s329, 1
        %s635 = smul.addr %s634, 8
        %s636 = scalar_lea.vmem [#allocation23], %s635
        %v638 = vld [vmem:[%s538] sm:$0xf]
        %v639 = vunpack.c.l.bf16 %v638
        %v640 = vmul.f32 %v639, 5.656854
        %v641 = vld [vmem:[#allocation7] sm:$0xff]
        %v642 = vld [vmem:[%s546] sm:$0x1]
        %v643 = vld [vmem:[#allocation13] sm:$0x1]
        %v644 = vld [vmem:[#allocation13 + $0x1] sm:$0x1]
        %v645 = vld [vmem:[#allocation14] sm:$0x1]
        %v646 = vld [vmem:[#allocation14 + $0x1] sm:$0x1]
        %v647 = vld [vmem:[#allocation20] sm:$0x1]
        loop: start=0, step=1, limit=3
        $region125: #{tpu_custom_call.1} parent=71 // loop_pre_header
          _
        $region126: #{tpu_custom_call.1} parent=71 // loop_header
          %s649 = sphi 0, %s653
          %p650 = scmp.ge.s32.totalorder %s649, 3
          %v654 = vphi %v640, %v1489
        $region127: #{tpu_custom_call.1} parent=71 // loop_header_branch
          %652 = sbr.rel (%p650) target = $region131
        $region128: #{tpu_custom_call.1} parent=71 // loop_body
          %v655 = vadd.f32 %v654, %v641
          %s656 = scalar_lea.vmem [#allocation8], %s649
          %v657 = vld [vmem:[%s656] sm:$0x1]
          %v659 = vlaneseq
          %v660 = vshrl.u32 %v659, 7
          %v661 = vsub.s32 0, %v660
          %v662 = vrot.slane %v657, %v661
          %v664 = vadd.f32 %v655, %v662
          %vm665 = vcmask 261120
          %v666 = vsel %vm665, %v664, 0.0
          %667 = vadd.xlane.f32.xlu0 %v666
          %v668 = vpop.xlane.xlu0 %667
          %v669 = vrcp.pop 32.0
          %v670 = vmul.f32 %v668, %v669
          %v671 = vsub.f32 %v664, %v670
          %v672 = vmul.f32 %v671, %v671
          %v673 = vsel %vm665, %v672, 0.0
          %674 = vadd.xlane.f32.xlu0 %v673
          %v675 = vpop.xlane.xlu0 %674
          %v676 = vmul.f32 %v675, %v669
          %v677 = vadd.f32 %v676, 1e-05
          %v678 = vrsqrt.pop %v677
          %v679 = vmul.f32 %v671, %v678
          %v680 = vlaneseq
          %v681 = vshrl.u32 %v680, 7
          %v682 = vsub.s32 0, %v681
          %v683 = vrot.slane %v643, %v682
          %v684 = vmul.f32 %v679, %v683
          %v685 = vlaneseq
          %v686 = vshrl.u32 %v685, 7
          %v687 = vsub.s32 0, %v686
          %v688 = vrot.slane %v644, %v687
          %v689 = vadd.f32 %v684, %v688
          %v690 = vpack.c.bf16 %v689, %v689
          %v691 = vld [vmem:[#allocation10] sm:$0xf]
          %v692 = vld [vmem:[#allocation10 + $0x4] sm:$0xf]
          %v693 = vld [vmem:[#allocation10 + $0x8] sm:$0xf]
          %v694 = vld [vmem:[#allocation10 + $0xc] sm:$0xf]
          %v699 = vunpack.c.l.b16 %v691
          %v700 = vunpack.c.l.b16 %v692
          %v701 = vunpack.c.l.b16 %v693
          %v702 = vunpack.c.l.b16 %v694
          %v703 = vpack.c.b16 %v700, %v699
          %v704 = vpack.c.b16 %v702, %v701
          %v708 = vsel %vm665, %v690, 0
          %710 = vmatprep.subr.bf16.mxu0 0
          %711 = vmatpush1.bf16.msra.mxu0 %v703
          %712 = vmatprep.subr.bf16.mxu0 0
          %713 = vmatpush1.bf16.msra.mxu0 %v704
          %714 = vmatprep.subr.bf16.mxu0 0
          %715 = vmatpush1.bf16.msra.mxu0 0
          %716 = vmatprep.subr.bf16.mxu0 0
          %717 = vmatpush1.bf16.msra.mxu0 0
          %718 = vmatprep.subr.bf16.mxu0 0
          %719 = vmatpush1.bf16.msra.mxu0 0
          %720 = vmatprep.subr.bf16.mxu0 0
          %721 = vmatpush1.bf16.msra.mxu0 0
          %722 = vmatprep.subr.bf16.mxu0 0
          %723 = vmatpush1.bf16.msra.mxu0 0
          %724 = vmatprep.subr.bf16.mxu0 0
          %725 = vmatpush1.bf16.msra.mxu0 0
          %726 = vmatprep.subr.bf16.mxu0 0
          %727 = vmatpush1.bf16.msra.mxu0 0
          %728 = vmatprep.subr.bf16.mxu0 0
          %729 = vmatpush1.bf16.msra.mxu0 0
          %730 = vmatprep.subr.bf16.mxu0 0
          %731 = vmatpush1.bf16.msra.mxu0 0
          %732 = vmatprep.subr.bf16.mxu0 0
          %733 = vmatpush1.bf16.msra.mxu0 0
          %734 = vmatprep.subr.bf16.mxu0 0
          %735 = vmatpush1.bf16.msra.mxu0 0
          %736 = vmatprep.subr.bf16.mxu0 0
          %737 = vmatpush1.bf16.msra.mxu0 0
          %738 = vmatprep.subr.bf16.mxu0 0
          %739 = vmatpush1.bf16.msra.mxu0 0
          %740 = vmatprep.subr.bf16.mxu0 0
          %741 = vmatpush1.bf16.msra.mxu0 0
          %742 = vmatprep.mubr.bf16.mxu0 0
          %743 = vmatmul.mubr.bf16.gmra.mrb[0].mxu0 %v708
          %v744 = vpop.f32.mrb[0].mxu0
          %v745 = vadd.f32 0.0, %v744
          %v746 = vpop.f32.mrb[0].mxu0
          %v747 = vpop.f32.mrb[0].mxu0
          %v748 = vpop.f32.mrb[0].mxu0
          %749 = vdwg.mxu0
          %751 = vrot.lane.b32.xlu0 %v745, 120
          %v752 = vpop.permute.xlu0 %751
          %754 = vrot.lane.b32.xlu0 %v745, 112
          %v755 = vpop.permute.xlu0 %754
          %757 = vrot.lane.b32.xlu0 %v745, 104
          %v758 = vpop.permute.xlu0 %757
          %v760 = vpack.c.bf16 %v745, %v745
          %v761 = vpack.c.bf16 %v752, %v752
          %v762 = vpack.c.bf16 %v755, %v755
          %v763 = vpack.c.bf16 %v758, %v758
          %v765 = vlaneseq
          %v766 = vshrl.u32 %v765, 7
          %v767 = vsub.s32 0, %v766
          %v768 = vrot.slane %v642, %v767
          %771 = vrot.lane.b32.xlu0 %v760, 96
          %v772 = vpop.permute.xlu0 %771
          %vm773 = vcmask 64512
          %v775 = vsel %vm773, %v760, 0
          %v778 = vsel %vm773, %v772, 0
          %780 = vmatprep.subr.bf16.mxu0 0
          %781 = vmatpush1.bf16.xpose.msra.mxu0 %v778
          %782 = vmatprep.subr.bf16.mxu0 0
          %783 = vmatpush1.bf16.xpose.msra.mxu0 0
          %784 = vmatprep.subr.bf16.mxu0 0
          %785 = vmatpush1.bf16.xpose.msra.mxu0 0
          %786 = vmatprep.subr.bf16.mxu0 0
          %787 = vmatpush1.bf16.xpose.msra.mxu0 0
          %788 = vmatprep.subr.bf16.mxu0 0
          %789 = vmatpush1.bf16.xpose.msra.mxu0 0
          %790 = vmatprep.subr.bf16.mxu0 0
          %791 = vmatpush1.bf16.xpose.msra.mxu0 0
          %792 = vmatprep.subr.bf16.mxu0 0
          %793 = vmatpush1.bf16.xpose.msra.mxu0 0
          %794 = vmatprep.subr.bf16.mxu0 0
          %795 = vmatpush1.bf16.xpose.msra.mxu0 0
          %796 = vmatprep.subr.bf16.mxu0 0
          %797 = vmatpush1.bf16.xpose.msra.mxu0 0
          %798 = vmatprep.subr.bf16.mxu0 0
          %799 = vmatpush1.bf16.xpose.msra.mxu0 0
          %800 = vmatprep.subr.bf16.mxu0 0
          %801 = vmatpush1.bf16.xpose.msra.mxu0 0
          %802 = vmatprep.subr.bf16.mxu0 0
          %803 = vmatpush1.bf16.xpose.msra.mxu0 0
          %804 = vmatprep.subr.bf16.mxu0 0
          %805 = vmatpush1.bf16.xpose.msra.mxu0 0
          %806 = vmatprep.subr.bf16.mxu0 0
          %807 = vmatpush1.bf16.xpose.msra.mxu0 0
          %808 = vmatprep.subr.bf16.mxu0 0
          %809 = vmatpush1.bf16.xpose.msra.mxu0 0
          %810 = vmatprep.subr.bf16.mxu0 0
          %811 = vmatpush1.bf16.xpose.msra.mxu0 0
          %812 = vmatprep.mubr.bf16.mxu0 0
          %813 = vmatmul.mubr.bf16.gmra.mrb[0].mxu0 %v775
          %v814 = vpop.f32.mrb[0].mxu0
          %v815 = vadd.f32 %v768, %v814
          %v816 = vpop.f32.mrb[0].mxu0
          %v817 = vpop.f32.mrb[0].mxu0
          %v818 = vpop.f32.mrb[0].mxu0
          %819 = vdwg.mxu0
          %821 = vrot.lane.b32.xlu0 %v761, 96
          %v822 = vpop.permute.xlu0 %821
          %v824 = vsel %vm773, %v761, 0
          %v827 = vsel %vm773, %v822, 0
          %829 = vmatprep.subr.bf16.mxu0 0
          %830 = vmatpush1.bf16.xpose.msra.mxu0 %v827
          %831 = vmatprep.subr.bf16.mxu0 0
          %832 = vmatpush1.bf16.xpose.msra.mxu0 0
          %833 = vmatprep.subr.bf16.mxu0 0
          %834 = vmatpush1.bf16.xpose.msra.mxu0 0
          %835 = vmatprep.subr.bf16.mxu0 0
          %836 = vmatpush1.bf16.xpose.msra.mxu0 0
          %837 = vmatprep.subr.bf16.mxu0 0
          %838 = vmatpush1.bf16.xpose.msra.mxu0 0
          %839 = vmatprep.subr.bf16.mxu0 0
          %840 = vmatpush1.bf16.xpose.msra.mxu0 0
          %841 = vmatprep.subr.bf16.mxu0 0
          %842 = vmatpush1.bf16.xpose.msra.mxu0 0
          %843 = vmatprep.subr.bf16.mxu0 0
          %844 = vmatpush1.bf16.xpose.msra.mxu0 0
          %845 = vmatprep.subr.bf16.mxu0 0
          %846 = vmatpush1.bf16.xpose.msra.mxu0 0
          %847 = vmatprep.subr.bf16.mxu0 0
          %848 = vmatpush1.bf16.xpose.msra.mxu0 0
          %849 = vmatprep.subr.bf16.mxu0 0
          %850 = vmatpush1.bf16.xpose.msra.mxu0 0
          %851 = vmatprep.subr.bf16.mxu0 0
          %852 = vmatpush1.bf16.xpose.msra.mxu0 0
          %853 = vmatprep.subr.bf16.mxu0 0
          %854 = vmatpush1.bf16.xpose.msra.mxu0 0
          %855 = vmatprep.subr.bf16.mxu0 0
          %856 = vmatpush1.bf16.xpose.msra.mxu0 0
          %857 = vmatprep.subr.bf16.mxu0 0
          %858 = vmatpush1.bf16.xpose.msra.mxu0 0
          %859 = vmatprep.subr.bf16.mxu0 0
          %860 = vmatpush1.bf16.xpose.msra.mxu0 0
          %861 = vmatprep.mubr.bf16.mxu0 0
          %862 = vmatmul.mubr.bf16.gmra.mrb[0].mxu0 %v824
          %v863 = vpop.f32.mrb[0].mxu0
          %v864 = vadd.f32 %v768, %v863
          %v865 = vpop.f32.mrb[0].mxu0
          %v866 = vpop.f32.mrb[0].mxu0
          %v867 = vpop.f32.mrb[0].mxu0
          %868 = vdwg.mxu0
          %870 = vrot.lane.b32.xlu0 %v762, 96
          %v871 = vpop.permute.xlu0 %870
          %v873 = vsel %vm773, %v762, 0
          %v876 = vsel %vm773, %v871, 0
          %878 = vmatprep.subr.bf16.mxu0 0
          %879 = vmatpush1.bf16.xpose.msra.mxu0 %v876
          %880 = vmatprep.subr.bf16.mxu0 0
          %881 = vmatpush1.bf16.xpose.msra.mxu0 0
          %882 = vmatprep.subr.bf16.mxu0 0
          %883 = vmatpush1.bf16.xpose.msra.mxu0 0
          %884 = vmatprep.subr.bf16.mxu0 0
          %885 = vmatpush1.bf16.xpose.msra.mxu0 0
          %886 = vmatprep.subr.bf16.mxu0 0
          %887 = vmatpush1.bf16.xpose.msra.mxu0 0
          %888 = vmatprep.subr.bf16.mxu0 0
          %889 = vmatpush1.bf16.xpose.msra.mxu0 0
          %890 = vmatprep.subr.bf16.mxu0 0
          %891 = vmatpush1.bf16.xpose.msra.mxu0 0
          %892 = vmatprep.subr.bf16.mxu0 0
          %893 = vmatpush1.bf16.xpose.msra.mxu0 0
          %894 = vmatprep.subr.bf16.mxu0 0
          %895 = vmatpush1.bf16.xpose.msra.mxu0 0
          %896 = vmatprep.subr.bf16.mxu0 0
          %897 = vmatpush1.bf16.xpose.msra.mxu0 0
          %898 = vmatprep.subr.bf16.mxu0 0
          %899 = vmatpush1.bf16.xpose.msra.mxu0 0
          %900 = vmatprep.subr.bf16.mxu0 0
          %901 = vmatpush1.bf16.xpose.msra.mxu0 0
          %902 = vmatprep.subr.bf16.mxu0 0
          %903 = vmatpush1.bf16.xpose.msra.mxu0 0
          %904 = vmatprep.subr.bf16.mxu0 0
          %905 = vmatpush1.bf16.xpose.msra.mxu0 0
          %906 = vmatprep.subr.bf16.mxu0 0
          %907 = vmatpush1.bf16.xpose.msra.mxu0 0
          %908 = vmatprep.subr.bf16.mxu0 0
          %909 = vmatpush1.bf16.xpose.msra.mxu0 0
          %910 = vmatprep.mubr.bf16.mxu0 0
          %911 = vmatmul.mubr.bf16.gmra.mrb[0].mxu0 %v873
          %v912 = vpop.f32.mrb[0].mxu0
          %v913 = vadd.f32 %v768, %v912
          %v914 = vpop.f32.mrb[0].mxu0
          %v915 = vpop.f32.mrb[0].mxu0
          %v916 = vpop.f32.mrb[0].mxu0
          %917 = vdwg.mxu0
          %919 = vrot.lane.b32.xlu0 %v763, 96
          %v920 = vpop.permute.xlu0 %919
          %v922 = vsel %vm773, %v763, 0
          %v925 = vsel %vm773, %v920, 0
          %927 = vmatprep.subr.bf16.mxu0 0
          %928 = vmatpush1.bf16.xpose.msra.mxu0 %v925
          %929 = vmatprep.subr.bf16.mxu0 0
          %930 = vmatpush1.bf16.xpose.msra.mxu0 0
          %931 = vmatprep.subr.bf16.mxu0 0
          %932 = vmatpush1.bf16.xpose.msra.mxu0 0
          %933 = vmatprep.subr.bf16.mxu0 0
          %934 = vmatpush1.bf16.xpose.msra.mxu0 0
          %935 = vmatprep.subr.bf16.mxu0 0
          %936 = vmatpush1.bf16.xpose.msra.mxu0 0
          %937 = vmatprep.subr.bf16.mxu0 0
          %938 = vmatpush1.bf16.xpose.msra.mxu0 0
          %939 = vmatprep.subr.bf16.mxu0 0
          %940 = vmatpush1.bf16.xpose.msra.mxu0 0
          %941 = vmatprep.subr.bf16.mxu0 0
          %942 = vmatpush1.bf16.xpose.msra.mxu0 0
          %943 = vmatprep.subr.bf16.mxu0 0
          %944 = vmatpush1.bf16.xpose.msra.mxu0 0
          %945 = vmatprep.subr.bf16.mxu0 0
          %946 = vmatpush1.bf16.xpose.msra.mxu0 0
          %947 = vmatprep.subr.bf16.mxu0 0
          %948 = vmatpush1.bf16.xpose.msra.mxu0 0
          %949 = vmatprep.subr.bf16.mxu0 0
          %950 = vmatpush1.bf16.xpose.msra.mxu0 0
          %951 = vmatprep.subr.bf16.mxu0 0
          %952 = vmatpush1.bf16.xpose.msra.mxu0 0
          %953 = vmatprep.subr.bf16.mxu0 0
          %954 = vmatpush1.bf16.xpose.msra.mxu0 0
          %955 = vmatprep.subr.bf16.mxu0 0
          %956 = vmatpush1.bf16.xpose.msra.mxu0 0
          %957 = vmatprep.subr.bf16.mxu0 0
          %958 = vmatpush1.bf16.xpose.msra.mxu0 0
          %959 = vmatprep.mubr.bf16.mxu0 0
          %960 = vmatmul.mubr.bf16.gmra.mrb[0].mxu0 %v922
          %v961 = vpop.f32.mrb[0].mxu0
          %v962 = vadd.f32 %v768, %v961
          %v963 = vpop.f32.mrb[0].mxu0
          %v964 = vpop.f32.mrb[0].mxu0
          %v965 = vpop.f32.mrb[0].mxu0
          %966 = vdwg.mxu0
          %v967 = vsel %vm773, %v815, -inf
          %968 = vmax.xlane.f32.xlu0 %v967
          %v969 = vpop.xlane.xlu0 %968
          %v970 = vsel %vm773, %v864, -inf
          %971 = vmax.xlane.f32.xlu0 %v970
          %v972 = vpop.xlane.xlu0 %971
          %v973 = vsel %vm773, %v913, -inf
          %974 = vmax.xlane.f32.xlu0 %v973
          %v975 = vpop.xlane.xlu0 %974
          %v976 = vsel %vm773, %v962, -inf
          %977 = vmax.xlane.f32.xlu0 %v976
          %v978 = vpop.xlane.xlu0 %977
          %v979 = vmax.f32 %v969, -1e+30
          %v980 = vmax.f32 %v972, -1e+30
          %v981 = vmax.f32 %v975, -1e+30
          %v982 = vmax.f32 %v978, -1e+30
          %v983 = vsub.f32 -1e+30, %v979
          %v984 = vsub.f32 -1e+30, %v980
          %v985 = vsub.f32 -1e+30, %v981
          %v986 = vsub.f32 -1e+30, %v982
          %v987 = vmul.f32 %v983, 1.442695
          %v988 = vpow.pop %v987
          %v989 = vmul.f32 %v984, 1.442695
          %v990 = vpow.pop %v989
          %v991 = vmul.f32 %v985, 1.442695
          %v992 = vpow.pop %v991
          %v993 = vmul.f32 %v986, 1.442695
          %v994 = vpow.pop %v993
          %v995 = vsub.f32 %v815, %v979
          %v996 = vsub.f32 %v864, %v980
          %v997 = vsub.f32 %v913, %v981
          %v998 = vsub.f32 %v962, %v982
          %v999 = vmul.f32 %v995, 1.442695
          %v1000 = vpow.pop %v999
          %v1001 = vmul.f32 %v996, 1.442695
          %v1002 = vpow.pop %v1001
          %v1003 = vmul.f32 %v997, 1.442695
          %v1004 = vpow.pop %v1003
          %v1005 = vmul.f32 %v998, 1.442695
          %v1006 = vpow.pop %v1005
          %v1007 = vmul.f32 %v988, 0.0
          %v1008 = vmul.f32 %v990, 0.0
          %v1009 = vmul.f32 %v992, 0.0
          %v1010 = vmul.f32 %v994, 0.0
          %v1011 = vsel %vm773, %v1000, 0.0
          %1012 = vadd.xlane.f32.xlu0 %v1011
          %v1013 = vpop.xlane.xlu0 %1012
          %v1014 = vsel %vm773, %v1002, 0.0
          %1015 = vadd.xlane.f32.xlu0 %v1014
          %v1016 = vpop.xlane.xlu0 %1015
          %v1017 = vsel %vm773, %v1004, 0.0
          %1018 = vadd.xlane.f32.xlu0 %v1017
          %v1019 = vpop.xlane.xlu0 %1018
          %v1020 = vsel %vm773, %v1006, 0.0
          %1021 = vadd.xlane.f32.xlu0 %v1020
          %v1022 = vpop.xlane.xlu0 %1021
          %v1023 = vadd.f32 %v1007, %v1013
          %v1024 = vadd.f32 %v1008, %v1016
          %v1025 = vadd.f32 %v1009, %v1019
          %v1026 = vadd.f32 %v1010, %v1022
          %v1027 = vpack.c.bf16 %v1000, %v1000
          %v1028 = vpack.c.bf16 %v1002, %v1002
          %v1029 = vpack.c.bf16 %v1004, %v1004
          %v1030 = vpack.c.bf16 %v1006, %v1006
          %1031 = vrot.lane.b32.xlu0 %v760, 64
          %v1032 = vpop.permute.xlu0 %1031
          %v1034 = vsel %vm773, %v1027, 0
          %vm1036 = vcmask 1043456
          %v1038 = vsel %vm1036, %v1032, 0
          %1040 = vmatprep.subr.bf16.mxu0 0
          %1041 = vmatpush1.bf16.msra.mxu0 %v1038
          %1042 = vmatprep.subr.bf16.mxu0 0
          %1043 = vmatpush1.bf16.msra.mxu0 0
          %1044 = vmatprep.subr.bf16.mxu0 0
          %1045 = vmatpush1.bf16.msra.mxu0 0
          %1046 = vmatprep.subr.bf16.mxu0 0
          %1047 = vmatpush1.bf16.msra.mxu0 0
          %1048 = vmatprep.subr.bf16.mxu0 0
          %1049 = vmatpush1.bf16.msra.mxu0 0
          %1050 = vmatprep.subr.bf16.mxu0 0
          %1051 = vmatpush1.bf16.msra.mxu0 0
          %1052 = vmatprep.subr.bf16.mxu0 0
          %1053 = vmatpush1.bf16.msra.mxu0 0
          %1054 = vmatprep.subr.bf16.mxu0 0
          %1055 = vmatpush1.bf16.msra.mxu0 0
          %1056 = vmatprep.subr.bf16.mxu0 0
          %1057 = vmatpush1.bf16.msra.mxu0 0
          %1058 = vmatprep.subr.bf16.mxu0 0
          %1059 = vmatpush1.bf16.msra.mxu0 0
          %1060 = vmatprep.subr.bf16.mxu0 0
          %1061 = vmatpush1.bf16.msra.mxu0 0
          %1062 = vmatprep.subr.bf16.mxu0 0
          %1063 = vmatpush1.bf16.msra.mxu0 0
          %1064 = vmatprep.subr.bf16.mxu0 0
          %1065 = vmatpush1.bf16.msra.mxu0 0
          %1066 = vmatprep.subr.bf16.mxu0 0
          %1067 = vmatpush1.bf16.msra.mxu0 0
          %1068 = vmatprep.subr.bf16.mxu0 0
          %1069 = vmatpush1.bf16.msra.mxu0 0
          %1070 = vmatprep.subr.bf16.mxu0 0
          %1071 = vmatpush1.bf16.msra.mxu0 0
          %1072 = vmatprep.mubr.bf16.mxu0 0
          %1073 = vmatmul.mubr.bf16.gmra.mrb[0].mxu0 %v1034
          %v1074 = vpop.f32.mrb[0].mxu0
          %v1075 = vadd.f32 0.0, %v1074
          %v1076 = vpop.f32.mrb[0].mxu0
          %v1077 = vpop.f32.mrb[0].mxu0
          %v1078 = vpop.f32.mrb[0].mxu0
          %1079 = vdwg.mxu0
          %1080 = vrot.lane.b32.xlu0 %v761, 64
          %v1081 = vpop.permute.xlu0 %1080
          %v1083 = vsel %vm773, %v1028, 0
          %v1086 = vsel %vm1036, %v1081, 0
          %1088 = vmatprep.subr.bf16.mxu0 0
          %1089 = vmatpush1.bf16.msra.mxu0 %v1086
          %1090 = vmatprep.subr.bf16.mxu0 0
          %1091 = vmatpush1.bf16.msra.mxu0 0
          %1092 = vmatprep.subr.bf16.mxu0 0
          %1093 = vmatpush1.bf16.msra.mxu0 0
          %1094 = vmatprep.subr.bf16.mxu0 0
          %1095 = vmatpush1.bf16.msra.mxu0 0
          %1096 = vmatprep.subr.bf16.mxu0 0
          %1097 = vmatpush1.bf16.msra.mxu0 0
          %1098 = vmatprep.subr.bf16.mxu0 0
          %1099 = vmatpush1.bf16.msra.mxu0 0
          %1100 = vmatprep.subr.bf16.mxu0 0
          %1101 = vmatpush1.bf16.msra.mxu0 0
          %1102 = vmatprep.subr.bf16.mxu0 0
          %1103 = vmatpush1.bf16.msra.mxu0 0
          %1104 = vmatprep.subr.bf16.mxu0 0
          %1105 = vmatpush1.bf16.msra.mxu0 0
          %1106 = vmatprep.subr.bf16.mxu0 0
          %1107 = vmatpush1.bf16.msra.mxu0 0
          %1108 = vmatprep.subr.bf16.mxu0 0
          %1109 = vmatpush1.bf16.msra.mxu0 0
          %1110 = vmatprep.subr.bf16.mxu0 0
          %1111 = vmatpush1.bf16.msra.mxu0 0
          %1112 = vmatprep.subr.bf16.mxu0 0
          %1113 = vmatpush1.bf16.msra.mxu0 0
          %1114 = vmatprep.subr.bf16.mxu0 0
          %1115 = vmatpush1.bf16.msra.mxu0 0
          %1116 = vmatprep.subr.bf16.mxu0 0
          %1117 = vmatpush1.bf16.msra.mxu0 0
          %1118 = vmatprep.subr.bf16.mxu0 0
          %1119 = vmatpush1.bf16.msra.mxu0 0
          %1120 = vmatprep.mubr.bf16.mxu0 0
          %1121 = vmatmul.mubr.bf16.gmra.mrb[0].mxu0 %v1083
          %v1122 = vpop.f32.mrb[0].mxu0
          %v1123 = vadd.f32 0.0, %v1122
          %v1124 = vpop.f32.mrb[0].mxu0
          %v1125 = vpop.f32.mrb[0].mxu0
          %v1126 = vpop.f32.mrb[0].mxu0
          %1127 = vdwg.mxu0
          %1128 = vrot.lane.b32.xlu0 %v762, 64
          %v1129 = vpop.permute.xlu0 %1128
          %v1131 = vsel %vm773, %v1029, 0
          %v1134 = vsel %vm1036, %v1129, 0
          %1136 = vmatprep.subr.bf16.mxu0 0
          %1137 = vmatpush1.bf16.msra.mxu0 %v1134
          %1138 = vmatprep.subr.bf16.mxu0 0
          %1139 = vmatpush1.bf16.msra.mxu0 0
          %1140 = vmatprep.subr.bf16.mxu0 0
          %1141 = vmatpush1.bf16.msra.mxu0 0
          %1142 = vmatprep.subr.bf16.mxu0 0
          %1143 = vmatpush1.bf16.msra.mxu0 0
          %1144 = vmatprep.subr.bf16.mxu0 0
          %1145 = vmatpush1.bf16.msra.mxu0 0
          %1146 = vmatprep.subr.bf16.mxu0 0
          %1147 = vmatpush1.bf16.msra.mxu0 0
          %1148 = vmatprep.subr.bf16.mxu0 0
          %1149 = vmatpush1.bf16.msra.mxu0 0
          %1150 = vmatprep.subr.bf16.mxu0 0
          %1151 = vmatpush1.bf16.msra.mxu0 0
          %1152 = vmatprep.subr.bf16.mxu0 0
          %1153 = vmatpush1.bf16.msra.mxu0 0
          %1154 = vmatprep.subr.bf16.mxu0 0
          %1155 = vmatpush1.bf16.msra.mxu0 0
          %1156 = vmatprep.subr.bf16.mxu0 0
          %1157 = vmatpush1.bf16.msra.mxu0 0
          %1158 = vmatprep.subr.bf16.mxu0 0
          %1159 = vmatpush1.bf16.msra.mxu0 0
          %1160 = vmatprep.subr.bf16.mxu0 0
          %1161 = vmatpush1.bf16.msra.mxu0 0
          %1162 = vmatprep.subr.bf16.mxu0 0
          %1163 = vmatpush1.bf16.msra.mxu0 0
          %1164 = vmatprep.subr.bf16.mxu0 0
          %1165 = vmatpush1.bf16.msra.mxu0 0
          %1166 = vmatprep.subr.bf16.mxu0 0
          %1167 = vmatpush1.bf16.msra.mxu0 0
          %1168 = vmatprep.mubr.bf16.mxu0 0
          %1169 = vmatmul.mubr.bf16.gmra.mrb[0].mxu0 %v1131
          %v1170 = vpop.f32.mrb[0].mxu0
          %v1171 = vadd.f32 0.0, %v1170
          %v1172 = vpop.f32.mrb[0].mxu0
          %v1173 = vpop.f32.mrb[0].mxu0
          %v1174 = vpop.f32.mrb[0].mxu0
          %1175 = vdwg.mxu0
          %1176 = vrot.lane.b32.xlu0 %v763, 64
          %v1177 = vpop.permute.xlu0 %1176
          %v1179 = vsel %vm773, %v1030, 0
          %v1182 = vsel %vm1036, %v1177, 0
          %1184 = vmatprep.subr.bf16.mxu0 0
          %1185 = vmatpush1.bf16.msra.mxu0 %v1182
          %1186 = vmatprep.subr.bf16.mxu0 0
          %1187 = vmatpush1.bf16.msra.mxu0 0
          %1188 = vmatprep.subr.bf16.mxu0 0
          %1189 = vmatpush1.bf16.msra.mxu0 0
          %1190 = vmatprep.subr.bf16.mxu0 0
          %1191 = vmatpush1.bf16.msra.mxu0 0
          %1192 = vmatprep.subr.bf16.mxu0 0
          %1193 = vmatpush1.bf16.msra.mxu0 0
          %1194 = vmatprep.subr.bf16.mxu0 0
          %1195 = vmatpush1.bf16.msra.mxu0 0
          %1196 = vmatprep.subr.bf16.mxu0 0
          %1197 = vmatpush1.bf16.msra.mxu0 0
          %1198 = vmatprep.subr.bf16.mxu0 0
          %1199 = vmatpush1.bf16.msra.mxu0 0
          %1200 = vmatprep.subr.bf16.mxu0 0
          %1201 = vmatpush1.bf16.msra.mxu0 0
          %1202 = vmatprep.subr.bf16.mxu0 0
          %1203 = vmatpush1.bf16.msra.mxu0 0
          %1204 = vmatprep.subr.bf16.mxu0 0
          %1205 = vmatpush1.bf16.msra.mxu0 0
          %1206 = vmatprep.subr.bf16.mxu0 0
          %1207 = vmatpush1.bf16.msra.mxu0 0
          %1208 = vmatprep.subr.bf16.mxu0 0
          %1209 = vmatpush1.bf16.msra.mxu0 0
          %1210 = vmatprep.subr.bf16.mxu0 0
          %1211 = vmatpush1.bf16.msra.mxu0 0
          %1212 = vmatprep.subr.bf16.mxu0 0
          %1213 = vmatpush1.bf16.msra.mxu0 0
          %1214 = vmatprep.subr.bf16.mxu0 0
          %1215 = vmatpush1.bf16.msra.mxu0 0
          %1216 = vmatprep.mubr.bf16.mxu0 0
          %1217 = vmatmul.mubr.bf16.gmra.mrb[0].mxu0 %v1179
          %v1218 = vpop.f32.mrb[0].mxu0
          %v1219 = vadd.f32 0.0, %v1218
          %v1220 = vpop.f32.mrb[0].mxu0
          %v1221 = vpop.f32.mrb[0].mxu0
          %v1222 = vpop.f32.mrb[0].mxu0
          %1223 = vdwg.mxu0
          %v1224 = vadd.f32 %v1007, %v1075
          %v1225 = vadd.f32 %v1008, %v1123
          %v1226 = vadd.f32 %v1009, %v1171
          %v1227 = vadd.f32 %v1010, %v1219
          %v1228 = vrcp.pop %v1023
          %v1229 = vrcp.pop %v1024
          %v1230 = vrcp.pop %v1025
          %v1231 = vrcp.pop %v1026
          %v1232 = vmul.f32 %v1224, %v1228
          %v1233 = vmul.f32 %v1225, %v1229
          %v1234 = vmul.f32 %v1226, %v1230
          %v1235 = vmul.f32 %v1227, %v1231
          %1237 = vrot.lane.b32.xlu0 %v1233, 8
          %v1238 = vpop.permute.xlu0 %1237
          %1241 = vrot.lane.b32.xlu0 %v1234, 16
          %v1242 = vpop.permute.xlu0 %1241
          %1245 = vrot.lane.b32.xlu0 %v1235, 24
          %v1246 = vpop.permute.xlu0 %1245
          %v1248 = vsel %vm773, %v1232, %v1238
          %vm1249 = vcmask 130048
          %v1250 = vsel %vm1249, %v1248, %v1242
          %vm1251 = vcmask 195584
          %v1252 = vsel %vm1251, %v1250, %v1246
          %v1253 = vpack.c.bf16 %v1252, %v1252
          %v1254 = vld [vmem:[#allocation11] sm:$0xf]
          %v1255 = vld [vmem:[#allocation11 + $0x4] sm:$0xf]
          %v1256 = vld [vmem:[#allocation11 + $0x8] sm:$0xf]
          %v1257 = vld [vmem:[#allocation11 + $0xc] sm:$0xf]
          %v1262 = vunpack.c.l.b16 %v1254
          %v1263 = vunpack.c.l.b16 %v1255
          %v1264 = vunpack.c.l.b16 %v1256
          %v1265 = vunpack.c.l.b16 %v1257
          %v1266 = vpack.c.b16 %v1263, %v1262
          %v1267 = vpack.c.b16 %v1265, %v1264
          %v1271 = vsel %vm665, %v1253, 0
          %1273 = vmatprep.subr.bf16.mxu0 0
          %1274 = vmatpush1.bf16.msra.mxu0 %v1266
          %1275 = vmatprep.subr.bf16.mxu0 0
          %1276 = vmatpush1.bf16.msra.mxu0 %v1267
          %1277 = vmatprep.subr.bf16.mxu0 0
          %1278 = vmatpush1.bf16.msra.mxu0 0
          %1279 = vmatprep.subr.bf16.mxu0 0
          %1280 = vmatpush1.bf16.msra.mxu0 0
          %1281 = vmatprep.subr.bf16.mxu0 0
          %1282 = vmatpush1.bf16.msra.mxu0 0
          %1283 = vmatprep.subr.bf16.mxu0 0
          %1284 = vmatpush1.bf16.msra.mxu0 0
          %1285 = vmatprep.subr.bf16.mxu0 0
          %1286 = vmatpush1.bf16.msra.mxu0 0
          %1287 = vmatprep.subr.bf16.mxu0 0
          %1288 = vmatpush1.bf16.msra.mxu0 0
          %1289 = vmatprep.subr.bf16.mxu0 0
          %1290 = vmatpush1.bf16.msra.mxu0 0
          %1291 = vmatprep.subr.bf16.mxu0 0
          %1292 = vmatpush1.bf16.msra.mxu0 0
          %1293 = vmatprep.subr.bf16.mxu0 0
          %1294 = vmatpush1.bf16.msra.mxu0 0
          %1295 = vmatprep.subr.bf16.mxu0 0
          %1296 = vmatpush1.bf16.msra.mxu0 0
          %1297 = vmatprep.subr.bf16.mxu0 0
          %1298 = vmatpush1.bf16.msra.mxu0 0
          %1299 = vmatprep.subr.bf16.mxu0 0
          %1300 = vmatpush1.bf16.msra.mxu0 0
          %1301 = vmatprep.subr.bf16.mxu0 0
          %1302 = vmatpush1.bf16.msra.mxu0 0
          %1303 = vmatprep.subr.bf16.mxu0 0
          %1304 = vmatpush1.bf16.msra.mxu0 0
          %1305 = vmatprep.mubr.bf16.mxu0 0
          %1306 = vmatmul.mubr.bf16.gmra.mrb[0].mxu0 %v1271
          %v1307 = vpop.f32.mrb[0].mxu0
          %v1308 = vadd.f32 0.0, %v1307
          %v1309 = vpop.f32.mrb[0].mxu0
          %v1310 = vpop.f32.mrb[0].mxu0
          %v1311 = vpop.f32.mrb[0].mxu0
          %1312 = vdwg.mxu0
          %v1313 = vadd.f32 %v664, %v1308
          %v1314 = vsel %vm665, %v1313, 0.0
          %1315 = vadd.xlane.f32.xlu0 %v1314
          %v1316 = vpop.xlane.xlu0 %1315
          %v1317 = vmul.f32 %v1316, %v669
          %v1318 = vsub.f32 %v1313, %v1317
          %v1319 = vmul.f32 %v1318, %v1318
          %v1320 = vsel %vm665, %v1319, 0.0
          %1321 = vadd.xlane.f32.xlu0 %v1320
          %v1322 = vpop.xlane.xlu0 %1321
          %v1323 = vmul.f32 %v1322, %v669
          %v1324 = vadd.f32 %v1323, 1e-05
          %v1325 = vrsqrt.pop %v1324
          %v1326 = vmul.f32 %v1318, %v1325
          %v1327 = vlaneseq
          %v1328 = vshrl.u32 %v1327, 7
          %v1329 = vsub.s32 0, %v1328
          %v1330 = vrot.slane %v645, %v1329
          %v1331 = vmul.f32 %v1326, %v1330
          %v1332 = vlaneseq
          %v1333 = vshrl.u32 %v1332, 7
          %v1334 = vsub.s32 0, %v1333
          %v1335 = vrot.slane %v646, %v1334
          %v1336 = vadd.f32 %v1331, %v1335
          %v1337 = vpack.c.bf16 %v1336, %v1336
          %v1338 = vld [vmem:[#allocation16] sm:$0xf]
          %v1339 = vld [vmem:[#allocation16 + $0x4] sm:$0xf]
          %v1340 = vld [vmem:[#allocation16 + $0x8] sm:$0xf]
          %v1341 = vld [vmem:[#allocation16 + $0xc] sm:$0xf]
          %v1342 = vld [vmem:[#allocation17] sm:$0x1]
          %v1344 = vlaneseq
          %v1345 = vshrl.u32 %v1344, 7
          %v1346 = vsub.s32 0, %v1345
          %v1347 = vrot.slane %v1342, %v1346
          %v1353 = vunpack.c.l.b16 %v1338
          %v1354 = vunpack.c.l.b16 %v1339
          %v1355 = vunpack.c.l.b16 %v1340
          %v1356 = vunpack.c.l.b16 %v1341
          %v1357 = vpack.c.b16 %v1354, %v1353
          %v1358 = vpack.c.b16 %v1356, %v1355
          %v1362 = vsel %vm665, %v1337, 0
          %1364 = vmatprep.subr.bf16.mxu0 0
          %1365 = vmatpush1.bf16.msra.mxu0 %v1357
          %1366 = vmatprep.subr.bf16.mxu0 0
          %1367 = vmatpush1.bf16.msra.mxu0 %v1358
          %1368 = vmatprep.subr.bf16.mxu0 0
          %1369 = vmatpush1.bf16.msra.mxu0 0
          %1370 = vmatprep.subr.bf16.mxu0 0
          %1371 = vmatpush1.bf16.msra.mxu0 0
          %1372 = vmatprep.subr.bf16.mxu0 0
          %1373 = vmatpush1.bf16.msra.mxu0 0
          %1374 = vmatprep.subr.bf16.mxu0 0
          %1375 = vmatpush1.bf16.msra.mxu0 0
          %1376 = vmatprep.subr.bf16.mxu0 0
          %1377 = vmatpush1.bf16.msra.mxu0 0
          %1378 = vmatprep.subr.bf16.mxu0 0
          %1379 = vmatpush1.bf16.msra.mxu0 0
          %1380 = vmatprep.subr.bf16.mxu0 0
          %1381 = vmatpush1.bf16.msra.mxu0 0
          %1382 = vmatprep.subr.bf16.mxu0 0
          %1383 = vmatpush1.bf16.msra.mxu0 0
          %1384 = vmatprep.subr.bf16.mxu0 0
          %1385 = vmatpush1.bf16.msra.mxu0 0
          %1386 = vmatprep.subr.bf16.mxu0 0
          %1387 = vmatpush1.bf16.msra.mxu0 0
          %1388 = vmatprep.subr.bf16.mxu0 0
          %1389 = vmatpush1.bf16.msra.mxu0 0
          %1390 = vmatprep.subr.bf16.mxu0 0
          %1391 = vmatpush1.bf16.msra.mxu0 0
          %1392 = vmatprep.subr.bf16.mxu0 0
          %1393 = vmatpush1.bf16.msra.mxu0 0
          %1394 = vmatprep.subr.bf16.mxu0 0
          %1395 = vmatpush1.bf16.msra.mxu0 0
          %1396 = vmatprep.mubr.bf16.mxu0 0
          %1397 = vmatmul.mubr.bf16.gmra.mrb[0].mxu0 %v1362
          %v1398 = vpop.f32.mrb[0].mxu0
          %v1399 = vadd.f32 %v1347, %v1398
          %v1400 = vpop.f32.mrb[0].mxu0
          %v1401 = vpop.f32.mrb[0].mxu0
          %v1402 = vpop.f32.mrb[0].mxu0
          %1403 = vdwg.mxu0
          %v1404 = vmax.f32 %v1399, 0.0
          %v1405 = vpack.c.bf16 %v1404, %v1404
          %v1406 = vld [vmem:[#allocation19] sm:$0xf]
          %v1407 = vld [vmem:[#allocation19 + $0x4] sm:$0xf]
          %v1408 = vld [vmem:[#allocation19 + $0x8] sm:$0xf]
          %v1409 = vld [vmem:[#allocation19 + $0xc] sm:$0xf]
          %v1410 = vld [vmem:[#allocation19 + $0x10] sm:$0xf]
          %v1411 = vld [vmem:[#allocation19 + $0x14] sm:$0xf]
          %v1412 = vld [vmem:[#allocation19 + $0x18] sm:$0xf]
          %v1413 = vld [vmem:[#allocation19 + $0x1c] sm:$0xf]
          %v1422 = vunpack.c.l.b16 %v1406
          %v1423 = vunpack.c.l.b16 %v1407
          %v1424 = vunpack.c.l.b16 %v1408
          %v1425 = vunpack.c.l.b16 %v1409
          %v1426 = vunpack.c.l.b16 %v1410
          %v1427 = vunpack.c.l.b16 %v1411
          %v1428 = vunpack.c.l.b16 %v1412
          %v1429 = vunpack.c.l.b16 %v1413
          %v1430 = vpack.c.b16 %v1423, %v1422
          %v1431 = vpack.c.b16 %v1425, %v1424
          %v1432 = vpack.c.b16 %v1427, %v1426
          %v1433 = vpack.c.b16 %v1429, %v1428
          %vm1438 = vcmask 523264
          %v1440 = vsel %vm1438, %v1405, 0
          %1442 = vmatprep.subr.bf16.mxu0 0
          %1443 = vmatpush1.bf16.msra.mxu0 %v1430
          %1444 = vmatprep.subr.bf16.mxu0 0
          %1445 = vmatpush1.bf16.msra.mxu0 %v1431
          %1446 = vmatprep.subr.bf16.mxu0 0
          %1447 = vmatpush1.bf16.msra.mxu0 %v1432
          %1448 = vmatprep.subr.bf16.mxu0 0
          %1449 = vmatpush1.bf16.msra.mxu0 %v1433
          %1450 = vmatprep.subr.bf16.mxu0 0
          %1451 = vmatpush1.bf16.msra.mxu0 0
          %1452 = vmatprep.subr.bf16.mxu0 0
          %1453 = vmatpush1.bf16.msra.mxu0 0
          %1454 = vmatprep.subr.bf16.mxu0 0
          %1455 = vmatpush1.bf16.msra.mxu0 0
          %1456 = vmatprep.subr.bf16.mxu0 0
          %1457 = vmatpush1.bf16.msra.mxu0 0
          %1458 = vmatprep.subr.bf16.mxu0 0
          %1459 = vmatpush1.bf16.msra.mxu0 0
          %1460 = vmatprep.subr.bf16.mxu0 0
          %1461 = vmatpush1.bf16.msra.mxu0 0
          %1462 = vmatprep.subr.bf16.mxu0 0
          %1463 = vmatpush1.bf16.msra.mxu0 0
          %1464 = vmatprep.subr.bf16.mxu0 0
          %1465 = vmatpush1.bf16.msra.mxu0 0
          %1466 = vmatprep.subr.bf16.mxu0 0
          %1467 = vmatpush1.bf16.msra.mxu0 0
          %1468 = vmatprep.subr.bf16.mxu0 0
          %1469 = vmatpush1.bf16.msra.mxu0 0
          %1470 = vmatprep.subr.bf16.mxu0 0
          %1471 = vmatpush1.bf16.msra.mxu0 0
          %1472 = vmatprep.subr.bf16.mxu0 0
          %1473 = vmatpush1.bf16.msra.mxu0 0
          %1474 = vmatprep.mubr.bf16.mxu0 0
          %1475 = vmatmul.mubr.bf16.gmra.mrb[0].mxu0 %v1440
          %v1476 = vpop.f32.mrb[0].mxu0
          %v1477 = vadd.f32 0.0, %v1476
          %v1478 = vpop.f32.mrb[0].mxu0
          %v1479 = vpop.f32.mrb[0].mxu0
          %v1480 = vpop.f32.mrb[0].mxu0
          %1481 = vdwg.mxu0
          %v1482 = vadd.f32 %v1313, %v1477
          %v1484 = vlaneseq
          %v1485 = vshrl.u32 %v1484, 7
          %v1486 = vsub.s32 0, %v1485
          %v1487 = vrot.slane %v647, %v1486
          %v1489 = vadd.f32 %v1482, %v1487
        $region129: #{tpu_custom_call.1} parent=71 // loop_footer
          %s653 = sadd.s32 1, %s649
        $region130: #{tpu_custom_call.1} parent=71 // loop_footer_branch
          %648 = sbr.rel target = $region126
        $region131: #{tpu_custom_call.1} parent=71 // loop_exit
          _
        %v1490 = vld [vmem:[#allocation22] sm:$0x1]
        %v1491 = vld [vmem:[#allocation22 + $0x1] sm:$0x1]
        %vm1492 = vcmask 261120
        %v1493 = vsel %vm1492, %v654, 0.0
        %1494 = vadd.xlane.f32.xlu0 %v1493
        %v1495 = vpop.xlane.xlu0 %1494
        %v1496 = vrcp.pop 32.0
        %v1497 = vmul.f32 %v1495, %v1496
        %v1498 = vsub.f32 %v654, %v1497
        %v1499 = vmul.f32 %v1498, %v1498
        %v1500 = vsel %vm1492, %v1499, 0.0
        %1501 = vadd.xlane.f32.xlu0 %v1500
        %v1502 = vpop.xlane.xlu0 %1501
        %v1503 = vmul.f32 %v1502, %v1496
        %v1504 = vadd.f32 %v1503, 1e-05
        %v1505 = vrsqrt.pop %v1504
        %v1506 = vmul.f32 %v1498, %v1505
        %v1507 = vlaneseq
        %v1508 = vshrl.u32 %v1507, 7
        %v1509 = vsub.s32 0, %v1508
        %v1510 = vrot.slane %v1490, %v1509
        %v1511 = vmul.f32 %v1506, %v1510
        %v1512 = vlaneseq
        %v1513 = vshrl.u32 %v1512, 7
        %v1514 = vsub.s32 0, %v1513
        %v1515 = vrot.slane %v1491, %v1514
        %v1516 = vadd.f32 %v1511, %v1515
        %1517 = vst.msk [vmem:[%s636] sm:$0xff] %vm1492, %v1516
        %s1518 = sand.u32 %s329, 1
        %s1519 = scalar_lea.sflag [#allocation4], %s1518
        %s1520 = sand.u32 %s329, 1
        %s1521 = smul.addr %s1520, 8
        %s1522 = scalar_lea.vmem [#allocation23], %s1521
        // Predicated region
        $region132: #{tpu_custom_call.1} parent=71 // pred_check
          %p1523 = pneg %p339
        $region133: #{tpu_custom_call.1} parent=71 // pred_check_branch
          %1525 = sbr.rel (%p1523) target = $region135
        $region134: #{tpu_custom_call.1} parent=71 // pred_region
          %s1527 = ssub.s32 128, 128
          %1528 = vsyncadd %s1519, %s1527
          %s1529 = smul.addr %s38, 128
          %s1530 = scalar_lea.hbm %s13, %s1529
          %s1532 = sshll.u32 %s1522, 4
          %s1533 = int_to_ptr.vmem [resolvable:$true] %s1532
          %1535 = dma.vmem_to_hbm [thread:$0]  %s1533, 128, %s1530, %s1519
        $region135: #{tpu_custom_call.1} parent=71 // pred_fallthru
          _
      $region72: #{tpu_custom_call.1} parent=5 // pred_fallthru
        _
      %p1536 = scmp.le.s32.totalorder 2, %s33
      // Predicated region
      $region136: #{tpu_custom_call.1} parent=5 // pred_check
        %p1537 = pneg %p1536
      $region137: #{tpu_custom_call.1} parent=5 // pred_check_branch
        %1539 = sbr.rel (%p1537) target = $region139
      $region138: #{tpu_custom_call.1} parent=5 // pred_region
        %s1540 = ssub.s32 %s33, 2
        // Predicated region
        $region140: #{tpu_custom_call.1} parent=138 // pred_check
          %p1541 = pneg %p345
        $region141: #{tpu_custom_call.1} parent=138 // pred_check_branch
          %1543 = sbr.rel (%p1541) target = $region143
        $region142: #{tpu_custom_call.1} parent=138 // pred_region
          %s1544 = sand.u32 %s330, 1
          %s1545 = scalar_lea.sflag [#allocation4], %s1544
          %s1546 = sand.u32 %s330, 1
          %s1547 = smul.addr %s1546, 8
          %s1548 = scalar_lea.vmem [#allocation23], %s1547
          %1549 = dma.done %s1545, 128
        $region143: #{tpu_custom_call.1} parent=138 // pred_fallthru
          _
      $region139: #{tpu_custom_call.1} parent=5 // pred_fallthru
        _
    $region6: #{tpu_custom_call.1} parent=1 // loop_footer
      %s37 = sadd.s32 1, %s33
    $region7: #{tpu_custom_call.1} parent=1 // loop_footer_branch
      %32 = sbr.rel target = $region3
    $region8: #{tpu_custom_call.1} parent=1 // loop_exit
      _
    %1550 = vsyncpa [#allocation3], 1
    %s1551 = scalar_lea.sflag [#allocation3], 1
    %1552 = vsyncpa %s1551, 1
    %1553 = vsyncpa [#allocation6], 1
    %s1554 = scalar_lea.sflag [#allocation6], 1
    %1555 = vsyncpa %s1554, 1
    %1556 = vsyncpa [#allocation9], 1
    %1557 = vsyncpa [#allocation12], 1
    %1558 = vsyncpa [#allocation15], 1
    %1559 = vsyncpa [#allocation18], 1
    %1560 = vsyncpa [#allocation21], 1
    %1561 = vsyncpa [#allocation4], 1
    %s1562 = scalar_lea.sflag [#allocation4], 1
    %1563 = vsyncpa %s1562, 1

</llo_original>
